<compile_context>
chip_gen: v7x
topology: tpu7x:2x2x1
jax: 0.10.0
libtpu: 0.0.40
codegen_flags: <defaults>
</compile_context>

<pallas_src>
import jax
import jax.numpy as jnp
from jax import lax
from jax.experimental import pallas as pl
from jax.experimental.pallas import tpu as pltpu


# Column-space widths (32x32 input, 5x5 kernels, 2x2/2 pools); each stage consumes the
# maximum column shift of the next taps, so no wrap-around ever goes out of bounds:
#   conv1 taps reach 32*4+4 = 132, pool1 taps reach 33, conv2 taps reach 64*4+2*4 = 264,
#   pool2 taps reach 66.  1024 - 132 - 33 - 264 - 66 = 529 >= last needed column 528.
_W1 = 1024 - 132        # 892 : conv1 output columns   (n = 32*y + x)
_H1 = _W1 - 33          # 859 : pooled1 columns        (m = 64*py + 2*px)
_W2 = _H1 - 264         # 595 : conv2 output columns   (r = 64*qy' + 2*qx')
_H2 = _W2 - 66          # 529 : pooled2 columns        (s = 128*qy + 4*qx, qy,qx < 5)

_BT = 8                 # images per grid step (sub-batch)
_KC = 200               # stacked im2col depth: 25 taps x (channels padded to 8)


def lenet_kernel(x_ref, w1s_ref, cb1_ref, w2s_ref, cb2_ref, e_ref,
                 w1f_ref, b1f_ref, w2f_ref, b2f_ref, w3f_ref, b3f_ref,
                 o_ref, s1_ref, s2_ref, zin_ref):
    f32 = jnp.float32
    bf16 = jnp.bfloat16

    # The stacked-activation scratches have 5 (conv1) / 2 (conv2) zero pad rows per tap
    # (channel dim padded to 8 so each tap store is sublane-aligned).  Scratch memory is
    # uninitialized and core-local, so clear it every step; the tap stores below never
    # touch the pad rows, which therefore stay zero for the whole step.
    s1_ref[...] = jnp.zeros_like(s1_ref)
    s2_ref[...] = jnp.zeros_like(s2_ref)

    def image_body(b, carry):
        x0 = x_ref[b]                                            # [3, 1024]

        # ---- conv1: im2col along sublanes (25 lane-shifted copies), ONE matmul ----
        for i in range(5):
            for j in range(5):
                k = 5 * i + j
                off = 32 * i + j
                s1_ref[8 * k:8 * k + 3, :] = x0[:, off:off + _W1]
        y1 = jnp.dot(w1s_ref[...], s1_ref[...],
                     preferred_element_type=f32)                 # [6, 892]

        # 2x2/2 maxpool + bias + relu (bias/relu hoisted after the max: exact).
        p1 = jnp.maximum(jnp.maximum(y1[:, 0:_H1], y1[:, 1:1 + _H1]),
                         jnp.maximum(y1[:, 32:32 + _H1], y1[:, 33:33 + _H1]))
        h1 = jnp.maximum(p1 + cb1_ref[...], 0.0)                 # [6, 859]

        # ---- conv2 on the strided pooled grid (dx=2, dy=64), again ONE matmul -----
        for i in range(5):
            for j in range(5):
                k = 5 * i + j
                off = 64 * i + 2 * j
                s2_ref[8 * k:8 * k + 6, :] = h1[:, off:off + _W2]
        y2 = jnp.dot(w2s_ref[...], s2_ref[...],
                     preferred_element_type=f32)                 # [16, 595]

        p2 = jnp.maximum(jnp.maximum(y2[:, 0:_H2], y2[:, 2:2 + _H2]),
                         jnp.maximum(y2[:, 64:64 + _H2], y2[:, 66:66 + _H2]))
        h2 = jnp.maximum(p2 + cb2_ref[...], 0.0)                 # [16, 529]

        # Compact the 25 valid pooled positions (zeroing the garbage columns) with a
        # small 529->32 selection matmul, then lay (c, q) densely on lanes.
        g = jnp.dot(h2, e_ref[...], preferred_element_type=f32)  # [16, 32]
        row = jnp.concatenate([g[c:c + 1, :] for c in range(16)], axis=1)  # [1, 512]
        zin_ref[b] = row
        return carry

    lax.fori_loop(0, x_ref.shape[0], image_body, 0)

    # ---------------- batched MLP: M = _BT images at once ----------------
    zin = jnp.concatenate([zin_ref[b] for b in range(_BT)], axis=0)        # [8, 512]
    z = jnp.dot(zin.astype(bf16), w1f_ref[...],
                preferred_element_type=f32) + b1f_ref[...]
    z = jnp.maximum(z, 0.0)                                                # [8, 120]
    z = jnp.dot(z.astype(bf16), w2f_ref[...],
                preferred_element_type=f32) + b2f_ref[...]
    z = jnp.maximum(z, 0.0)                                                # [8, 84]
    z = jnp.dot(z.astype(bf16), w3f_ref[...],
                preferred_element_type=f32) + b3f_ref[...]                 # [8, 10]
    o_ref[...] = z


def prepare_params(p):
    """One-time parameter layout work (kept out of the per-forward hot path)."""
    f32, bf16 = jnp.float32, jnp.bfloat16

    # Conv weights OIHW -> [O, 25 taps, Cin] -> pad Cin to 8 -> [O, 200], matching the
    # sublane-stacked im2col scratch (tap k occupies rows 8k .. 8k+Cin-1, pad rows = 0).
    w1s = jnp.transpose(p["conv1_w"].astype(f32), (0, 2, 3, 1)).reshape(6, 25, 3)
    w1s = jnp.pad(w1s, ((0, 0), (0, 0), (0, 5))).reshape(6, _KC)
    w2s = jnp.transpose(p["conv2_w"].astype(f32), (0, 2, 3, 1)).reshape(16, 25, 6)
    w2s = jnp.pad(w2s, ((0, 0), (0, 0), (0, 2))).reshape(16, _KC)
    cb1 = p["conv1_b"].reshape(6, 1).astype(f32)
    cb2 = p["conv2_b"].reshape(16, 1).astype(f32)

    # Selection matrix: pooled2 column 128*qy + 4*qx -> dense column q = 5*qy + qx
    # (25 valid columns padded to 32 lanes; all other columns map to zero).
    qy, qx = jnp.meshgrid(jnp.arange(5), jnp.arange(5), indexing="ij")
    rows = (128 * qy + 4 * qx).reshape(-1)
    cols = (5 * qy + qx).reshape(-1)
    e = jnp.zeros((_H2, 32), f32).at[rows, cols].set(1.0)

    # fc1 with the torch (C, 5, 5) flatten and the 25 -> 32 lane pad absorbed.
    w1f = jnp.pad(p["fc1_w"].astype(f32).reshape(120, 16, 25),
                  ((0, 0), (0, 0), (0, 7)))
    w1f = jnp.transpose(w1f.reshape(120, 512), (1, 0)).astype(bf16)        # [512, 120]

    return dict(
        w1s=w1s, cb1=cb1, w2s=w2s, cb2=cb2, e=e,
        w1f=w1f, b1f=p["fc1_b"].reshape(1, 120).astype(f32),
        w2f=p["fc2_w"].T.astype(bf16), b2f=p["fc2_b"].reshape(1, 84).astype(f32),
        w3f=p["fc3_w"].T.astype(bf16), b3f=p["fc3_b"].reshape(1, 10).astype(f32),
    )


def _const_spec(shape):
    return pl.BlockSpec(shape, lambda g: tuple(0 for _ in shape))


@jax.jit
def net_forward(x_nchw, prep):
    B = x_nchw.shape[0]
    Bp = ((B + _BT - 1) // _BT) * _BT
    x0 = x_nchw.reshape(B, 3, 1024).astype(jnp.float32)   # NCHW -> [B, C, H*W]
    if Bp != B:
        x0 = jnp.pad(x0, ((0, Bp - B), (0, 0), (0, 0)))

    out = pl.pallas_call(
        lenet_kernel,
        out_shape=jax.ShapeDtypeStruct((Bp, 10), jnp.float32),
        grid=(Bp // _BT,),
        in_specs=[
            pl.BlockSpec((_BT, 3, 1024), lambda g: (g, 0, 0)),   # 8 images per step
            _const_spec((6, _KC)), _const_spec((6, 1)),
            _const_spec((16, _KC)), _const_spec((16, 1)),
            _const_spec((_H2, 32)),
            _const_spec((512, 120)), _const_spec((1, 120)),
            _const_spec((120, 84)), _const_spec((1, 84)),
            _const_spec((84, 10)), _const_spec((1, 10)),
        ],
        out_specs=pl.BlockSpec((_BT, 10), lambda g: (g, 0)),
        scratch_shapes=[
            pltpu.VMEM((_KC, _W1), jnp.float32),   # conv1 stacked im2col
            pltpu.VMEM((_KC, _W2), jnp.float32),   # conv2 stacked im2col
            pltpu.VMEM((_BT, 1, 512), jnp.float32),  # per-image flattened fc1 inputs
        ],
        compiler_params=pltpu.CompilerParams(
            dimension_semantics=("parallel",)),    # sub-batches across TCs on v7x
    )(x0, prep["w1s"], prep["cb1"], prep["w2s"], prep["cb2"], prep["e"],
      prep["w1f"], prep["b1f"], prep["w2f"], prep["b2f"], prep["w3f"], prep["b3f"])
    return out[:B]


# ----------------------------------------------------------------------------
# Pure-JAX reference (mirrors the PyTorch forward exactly, all f32)
# ----------------------------------------------------------------------------
def reference(x, p):
    def conv_block(y, w, b):
        y = lax.conv_general_dilated(y, w, (1, 1), "VALID")  # NCHW / OIHW
        y = jax.nn.relu(y + b[None, :, None, None])
        return lax.reduce_window(y, -jnp.inf, lax.max,
                                 (1, 1, 2, 2), (1, 1, 2, 2), "VALID")

    y = conv_block(x, p["conv1_w"], p["conv1_b"])
    y = conv_block(y, p["conv2_w"], p["conv2_b"])
    y = y.reshape(y.shape[0], -1)
    y = jax.nn.relu(y @ p["fc1_w"].T + p["fc1_b"])
    y = jax.nn.relu(y @ p["fc2_w"].T + p["fc2_b"])
    return y @ p["fc3_w"].T + p["fc3_b"]


# ----------------------------------------------------------------------------
if __name__ == "__main__":
    key = jax.random.PRNGKey(0)
    ks = jax.random.split(key, 11)
    f32 = jnp.float32

    # 32x32 RGB images; B=16 -> two grid steps of 8 images (keeps both v7x TCs busy).
    B = 16
    x = jax.random.normal(ks[0], (B, 3, 32, 32), f32)

    params = {
        "conv1_w": jax.random.normal(ks[1], (6, 3, 5, 5), f32) * 0.1,
        "conv1_b": jax.random.normal(ks[2], (6,), f32) * 0.1,
        "conv2_w": jax.random.normal(ks[3], (16, 6, 5, 5), f32) * 0.1,
        "conv2_b": jax.random.normal(ks[4], (16,), f32) * 0.1,
        "fc1_w":   jax.random.normal(ks[5], (120, 400), f32) * 0.05,
        "fc1_b":   jax.random.normal(ks[6], (120,), f32) * 0.05,
        "fc2_w":   jax.random.normal(ks[7], (84, 120), f32) * 0.05,
        "fc2_b":   jax.random.normal(ks[8], (84,), f32) * 0.05,
        "fc3_w":   jax.random.normal(ks[9], (10, 84), f32) * 0.05,
        "fc3_b":   jax.random.normal(ks[10], (10,), f32) * 0.05,
    }

    prep = prepare_params(params)            # one-time parameter layout work
    out = jax.block_until_ready(net_forward(x, prep))

    ref = reference(x, params)
    assert out.shape == (B, 10), out.shape
    assert bool(jnp.all(jnp.isfinite(out)))
    max_err = float(jnp.max(jnp.abs(out - ref)))
    # fc layers use bf16 operands with f32 accumulation -> a few 1e-3 of deviation.
    assert bool(jnp.allclose(out, ref, atol=2e-2, rtol=2e-2)), max_err

    print("KERNEL_OK")
</pallas_src>

<mosaic_0001>
module attributes {stable_mosaic.version = 11 : i64} {
  func.func @lenet_kernel(%arg0: i32, %arg1: memref<8x3x1024xf32, #tpu.memory_space<vmem>>, %arg2: memref<6x200xf32, #tpu.memory_space<vmem>>, %arg3: memref<6x1xf32, #tpu.memory_space<vmem>>, %arg4: memref<16x200xf32, #tpu.memory_space<vmem>>, %arg5: memref<16x1xf32, #tpu.memory_space<vmem>>, %arg6: memref<529x32xf32, #tpu.memory_space<vmem>>, %arg7: memref<512x120xbf16, #tpu.memory_space<vmem>>, %arg8: memref<1x120xf32, #tpu.memory_space<vmem>>, %arg9: memref<120x84xbf16, #tpu.memory_space<vmem>>, %arg10: memref<1x84xf32, #tpu.memory_space<vmem>>, %arg11: memref<84x10xbf16, #tpu.memory_space<vmem>>, %arg12: memref<1x10xf32, #tpu.memory_space<vmem>>, %arg13: memref<8x10xf32, #tpu.memory_space<vmem>>, %arg14: memref<200x892xf32, #tpu.memory_space<vmem>>, %arg15: memref<200x595xf32, #tpu.memory_space<vmem>>, %arg16: memref<8x1x512xf32, #tpu.memory_space<vmem>>) attributes {dimension_semantics = [#tpu.dimension_semantics<parallel>], iteration_bounds = array<i64: 2>, scalar_prefetch = 0 : i64, scratch_operands = 3 : i64, tpu.core_type = #tpu.core_type<tc>, window_params = [{transform_indices = @transform_0, window_bounds = array<i64: 8, 3, 1024>}, {pipeline_mode = #tpu.pipeline_mode<synchronous>, transform_indices = @transform_1, window_bounds = array<i64: 6, 200>}, {pipeline_mode = #tpu.pipeline_mode<synchronous>, transform_indices = @transform_2, window_bounds = array<i64: 6, 1>}, {pipeline_mode = #tpu.pipeline_mode<synchronous>, transform_indices = @transform_3, window_bounds = array<i64: 16, 200>}, {pipeline_mode = #tpu.pipeline_mode<synchronous>, transform_indices = @transform_4, window_bounds = array<i64: 16, 1>}, {pipeline_mode = #tpu.pipeline_mode<synchronous>, transform_indices = @transform_5, window_bounds = array<i64: 529, 32>}, {pipeline_mode = #tpu.pipeline_mode<synchronous>, transform_indices = @transform_6, window_bounds = array<i64: 512, 120>}, {pipeline_mode = #tpu.pipeline_mode<synchronous>, transform_indices = @transform_7, window_bounds = array<i64: 1, 120>}, {pipeline_mode = #tpu.pipeline_mode<synchronous>, transform_indices = @transform_8, window_bounds = array<i64: 120, 84>}, {pipeline_mode = #tpu.pipeline_mode<synchronous>, transform_indices = @transform_9, window_bounds = array<i64: 1, 84>}, {pipeline_mode = #tpu.pipeline_mode<synchronous>, transform_indices = @transform_10, window_bounds = array<i64: 84, 10>}, {pipeline_mode = #tpu.pipeline_mode<synchronous>, transform_indices = @transform_11, window_bounds = array<i64: 1, 10>}, {transform_indices = @transform_12, window_bounds = array<i64: 8, 10>}]} {
    %cst = arith.constant 0.000000e+00 : f32
    %0 = vector.broadcast %cst : f32 to vector<200x892xf32>
    %c0 = arith.constant 0 : index
    %c0_0 = arith.constant 0 : index
    %1 = vector.load %arg14[%c0, %c0_0] : memref<200x892xf32, #tpu.memory_space<vmem>>, vector<200x892xf32>
    tpu.vector_store %arg14[%c0, %c0_0], %0 {strides = array<i32>} : memref<200x892xf32, #tpu.memory_space<vmem>>, vector<200x892xf32>,
    %cst_1 = arith.constant 0.000000e+00 : f32
    %2 = vector.broadcast %cst_1 : f32 to vector<200x595xf32>
    %c0_2 = arith.constant 0 : index
    %c0_3 = arith.constant 0 : index
    %3 = vector.load %arg15[%c0_2, %c0_3] : memref<200x595xf32, #tpu.memory_space<vmem>>, vector<200x595xf32>
    tpu.vector_store %arg15[%c0_2, %c0_3], %2 {strides = array<i32>} : memref<200x595xf32, #tpu.memory_space<vmem>>, vector<200x595xf32>,
    %c0_i32 = arith.constant 0 : i32
    %c8_i32 = arith.constant 8 : i32
    %4 = arith.addi %c0_i32, %c8_i32 : i32
    %c1_i32 = arith.constant 1 : i32
    scf.for %arg17 = %c0_i32 to %4 step %c1_i32  : i32 {
      %45 = arith.index_cast %arg17 : i32 to index
      %c0_41 = arith.constant 0 : index
      %c0_42 = arith.constant 0 : index
      %46 = vector.load %arg1[%45, %c0_41, %c0_42] : memref<8x3x1024xf32, #tpu.memory_space<vmem>>, vector<1x3x1024xf32>
      %47 = vector.shape_cast %46 : vector<1x3x1024xf32> to vector<3x1024xf32>
      %48 = vector.extract_strided_slice %47 {offsets = [0, 0], sizes = [3, 892], strides = [1, 1]} : vector<3x1024xf32> to vector<3x892xf32>
      %c0_43 = arith.constant 0 : index
      %c0_44 = arith.constant 0 : index
      %49 = vector.load %arg14[%c0_43, %c0_44] : memref<200x892xf32, #tpu.memory_space<vmem>>, vector<3x892xf32>
      tpu.vector_store %arg14[%c0_43, %c0_44], %48 {strides = array<i32>} : memref<200x892xf32, #tpu.memory_space<vmem>>, vector<3x892xf32>,
      %50 = vector.extract_strided_slice %47 {offsets = [0, 1], sizes = [3, 892], strides = [1, 1]} : vector<3x1024xf32> to vector<3x892xf32>
      %c8 = arith.constant 8 : index
      %c0_45 = arith.constant 0 : index
      %51 = vector.load %arg14[%c8, %c0_45] : memref<200x892xf32, #tpu.memory_space<vmem>>, vector<3x892xf32>
      tpu.vector_store %arg14[%c8, %c0_45], %50 {strides = array<i32>} : memref<200x892xf32, #tpu.memory_space<vmem>>, vector<3x892xf32>,
      %52 = vector.extract_strided_slice %47 {offsets = [0, 2], sizes = [3, 892], strides = [1, 1]} : vector<3x1024xf32> to vector<3x892xf32>
      %c16 = arith.constant 16 : index
      %c0_46 = arith.constant 0 : index
      %53 = vector.load %arg14[%c16, %c0_46] : memref<200x892xf32, #tpu.memory_space<vmem>>, vector<3x892xf32>
      tpu.vector_store %arg14[%c16, %c0_46], %52 {strides = array<i32>} : memref<200x892xf32, #tpu.memory_space<vmem>>, vector<3x892xf32>,
      %54 = vector.extract_strided_slice %47 {offsets = [0, 3], sizes = [3, 892], strides = [1, 1]} : vector<3x1024xf32> to vector<3x892xf32>
      %c24 = arith.constant 24 : index
      %c0_47 = arith.constant 0 : index
      %55 = vector.load %arg14[%c24, %c0_47] : memref<200x892xf32, #tpu.memory_space<vmem>>, vector<3x892xf32>
      tpu.vector_store %arg14[%c24, %c0_47], %54 {strides = array<i32>} : memref<200x892xf32, #tpu.memory_space<vmem>>, vector<3x892xf32>,
      %56 = vector.extract_strided_slice %47 {offsets = [0, 4], sizes = [3, 892], strides = [1, 1]} : vector<3x1024xf32> to vector<3x892xf32>
      %c32 = arith.constant 32 : index
      %c0_48 = arith.constant 0 : index
      %57 = vector.load %arg14[%c32, %c0_48] : memref<200x892xf32, #tpu.memory_space<vmem>>, vector<3x892xf32>
      tpu.vector_store %arg14[%c32, %c0_48], %56 {strides = array<i32>} : memref<200x892xf32, #tpu.memory_space<vmem>>, vector<3x892xf32>,
      %58 = vector.extract_strided_slice %47 {offsets = [0, 32], sizes = [3, 892], strides = [1, 1]} : vector<3x1024xf32> to vector<3x892xf32>
      %c40 = arith.constant 40 : index
      %c0_49 = arith.constant 0 : index
      %59 = vector.load %arg14[%c40, %c0_49] : memref<200x892xf32, #tpu.memory_space<vmem>>, vector<3x892xf32>
      tpu.vector_store %arg14[%c40, %c0_49], %58 {strides = array<i32>} : memref<200x892xf32, #tpu.memory_space<vmem>>, vector<3x892xf32>,
      %60 = vector.extract_strided_slice %47 {offsets = [0, 33], sizes = [3, 892], strides = [1, 1]} : vector<3x1024xf32> to vector<3x892xf32>
      %c48 = arith.constant 48 : index
      %c0_50 = arith.constant 0 : index
      %61 = vector.load %arg14[%c48, %c0_50] : memref<200x892xf32, #tpu.memory_space<vmem>>, vector<3x892xf32>
      tpu.vector_store %arg14[%c48, %c0_50], %60 {strides = array<i32>} : memref<200x892xf32, #tpu.memory_space<vmem>>, vector<3x892xf32>,
      %62 = vector.extract_strided_slice %47 {offsets = [0, 34], sizes = [3, 892], strides = [1, 1]} : vector<3x1024xf32> to vector<3x892xf32>
      %c56 = arith.constant 56 : index
      %c0_51 = arith.constant 0 : index
      %63 = vector.load %arg14[%c56, %c0_51] : memref<200x892xf32, #tpu.memory_space<vmem>>, vector<3x892xf32>
      tpu.vector_store %arg14[%c56, %c0_51], %62 {strides = array<i32>} : memref<200x892xf32, #tpu.memory_space<vmem>>, vector<3x892xf32>,
      %64 = vector.extract_strided_slice %47 {offsets = [0, 35], sizes = [3, 892], strides = [1, 1]} : vector<3x1024xf32> to vector<3x892xf32>
      %c64 = arith.constant 64 : index
      %c0_52 = arith.constant 0 : index
      %65 = vector.load %arg14[%c64, %c0_52] : memref<200x892xf32, #tpu.memory_space<vmem>>, vector<3x892xf32>
      tpu.vector_store %arg14[%c64, %c0_52], %64 {strides = array<i32>} : memref<200x892xf32, #tpu.memory_space<vmem>>, vector<3x892xf32>,
      %66 = vector.extract_strided_slice %47 {offsets = [0, 36], sizes = [3, 892], strides = [1, 1]} : vector<3x1024xf32> to vector<3x892xf32>
      %c72 = arith.constant 72 : index
      %c0_53 = arith.constant 0 : index
      %67 = vector.load %arg14[%c72, %c0_53] : memref<200x892xf32, #tpu.memory_space<vmem>>, vector<3x892xf32>
      tpu.vector_store %arg14[%c72, %c0_53], %66 {strides = array<i32>} : memref<200x892xf32, #tpu.memory_space<vmem>>, vector<3x892xf32>,
      %68 = vector.extract_strided_slice %47 {offsets = [0, 64], sizes = [3, 892], strides = [1, 1]} : vector<3x1024xf32> to vector<3x892xf32>
      %c80 = arith.constant 80 : index
      %c0_54 = arith.constant 0 : index
      %69 = vector.load %arg14[%c80, %c0_54] : memref<200x892xf32, #tpu.memory_space<vmem>>, vector<3x892xf32>
      tpu.vector_store %arg14[%c80, %c0_54], %68 {strides = array<i32>} : memref<200x892xf32, #tpu.memory_space<vmem>>, vector<3x892xf32>,
      %70 = vector.extract_strided_slice %47 {offsets = [0, 65], sizes = [3, 892], strides = [1, 1]} : vector<3x1024xf32> to vector<3x892xf32>
      %c88 = arith.constant 88 : index
      %c0_55 = arith.constant 0 : index
      %71 = vector.load %arg14[%c88, %c0_55] : memref<200x892xf32, #tpu.memory_space<vmem>>, vector<3x892xf32>
      tpu.vector_store %arg14[%c88, %c0_55], %70 {strides = array<i32>} : memref<200x892xf32, #tpu.memory_space<vmem>>, vector<3x892xf32>,
      %72 = vector.extract_strided_slice %47 {offsets = [0, 66], sizes = [3, 892], strides = [1, 1]} : vector<3x1024xf32> to vector<3x892xf32>
      %c96 = arith.constant 96 : index
      %c0_56 = arith.constant 0 : index
      %73 = vector.load %arg14[%c96, %c0_56] : memref<200x892xf32, #tpu.memory_space<vmem>>, vector<3x892xf32>
      tpu.vector_store %arg14[%c96, %c0_56], %72 {strides = array<i32>} : memref<200x892xf32, #tpu.memory_space<vmem>>, vector<3x892xf32>,
      %74 = vector.extract_strided_slice %47 {offsets = [0, 67], sizes = [3, 892], strides = [1, 1]} : vector<3x1024xf32> to vector<3x892xf32>
      %c104 = arith.constant 104 : index
      %c0_57 = arith.constant 0 : index
      %75 = vector.load %arg14[%c104, %c0_57] : memref<200x892xf32, #tpu.memory_space<vmem>>, vector<3x892xf32>
      tpu.vector_store %arg14[%c104, %c0_57], %74 {strides = array<i32>} : memref<200x892xf32, #tpu.memory_space<vmem>>, vector<3x892xf32>,
      %76 = vector.extract_strided_slice %47 {offsets = [0, 68], sizes = [3, 892], strides = [1, 1]} : vector<3x1024xf32> to vector<3x892xf32>
      %c112 = arith.constant 112 : index
      %c0_58 = arith.constant 0 : index
      %77 = vector.load %arg14[%c112, %c0_58] : memref<200x892xf32, #tpu.memory_space<vmem>>, vector<3x892xf32>
      tpu.vector_store %arg14[%c112, %c0_58], %76 {strides = array<i32>} : memref<200x892xf32, #tpu.memory_space<vmem>>, vector<3x892xf32>,
      %78 = vector.extract_strided_slice %47 {offsets = [0, 96], sizes = [3, 892], strides = [1, 1]} : vector<3x1024xf32> to vector<3x892xf32>
      %c120 = arith.constant 120 : index
      %c0_59 = arith.constant 0 : index
      %79 = vector.load %arg14[%c120, %c0_59] : memref<200x892xf32, #tpu.memory_space<vmem>>, vector<3x892xf32>
      tpu.vector_store %arg14[%c120, %c0_59], %78 {strides = array<i32>} : memref<200x892xf32, #tpu.memory_space<vmem>>, vector<3x892xf32>,
      %80 = vector.extract_strided_slice %47 {offsets = [0, 97], sizes = [3, 892], strides = [1, 1]} : vector<3x1024xf32> to vector<3x892xf32>
      %c128 = arith.constant 128 : index
      %c0_60 = arith.constant 0 : index
      %81 = vector.load %arg14[%c128, %c0_60] : memref<200x892xf32, #tpu.memory_space<vmem>>, vector<3x892xf32>
      tpu.vector_store %arg14[%c128, %c0_60], %80 {strides = array<i32>} : memref<200x892xf32, #tpu.memory_space<vmem>>, vector<3x892xf32>,
      %82 = vector.extract_strided_slice %47 {offsets = [0, 98], sizes = [3, 892], strides = [1, 1]} : vector<3x1024xf32> to vector<3x892xf32>
      %c136 = arith.constant 136 : index
      %c0_61 = arith.constant 0 : index
      %83 = vector.load %arg14[%c136, %c0_61] : memref<200x892xf32, #tpu.memory_space<vmem>>, vector<3x892xf32>
      tpu.vector_store %arg14[%c136, %c0_61], %82 {strides = array<i32>} : memref<200x892xf32, #tpu.memory_space<vmem>>, vector<3x892xf32>,
      %84 = vector.extract_strided_slice %47 {offsets = [0, 99], sizes = [3, 892], strides = [1, 1]} : vector<3x1024xf32> to vector<3x892xf32>
      %c144 = arith.constant 144 : index
      %c0_62 = arith.constant 0 : index
      %85 = vector.load %arg14[%c144, %c0_62] : memref<200x892xf32, #tpu.memory_space<vmem>>, vector<3x892xf32>
      tpu.vector_store %arg14[%c144, %c0_62], %84 {strides = array<i32>} : memref<200x892xf32, #tpu.memory_space<vmem>>, vector<3x892xf32>,
      %86 = vector.extract_strided_slice %47 {offsets = [0, 100], sizes = [3, 892], strides = [1, 1]} : vector<3x1024xf32> to vector<3x892xf32>
      %c152 = arith.constant 152 : index
      %c0_63 = arith.constant 0 : index
      %87 = vector.load %arg14[%c152, %c0_63] : memref<200x892xf32, #tpu.memory_space<vmem>>, vector<3x892xf32>
      tpu.vector_store %arg14[%c152, %c0_63], %86 {strides = array<i32>} : memref<200x892xf32, #tpu.memory_space<vmem>>, vector<3x892xf32>,
      %88 = vector.extract_strided_slice %47 {offsets = [0, 128], sizes = [3, 892], strides = [1, 1]} : vector<3x1024xf32> to vector<3x892xf32>
      %c160 = arith.constant 160 : index
      %c0_64 = arith.constant 0 : index
      %89 = vector.load %arg14[%c160, %c0_64] : memref<200x892xf32, #tpu.memory_space<vmem>>, vector<3x892xf32>
      tpu.vector_store %arg14[%c160, %c0_64], %88 {strides = array<i32>} : memref<200x892xf32, #tpu.memory_space<vmem>>, vector<3x892xf32>,
      %90 = vector.extract_strided_slice %47 {offsets = [0, 129], sizes = [3, 892], strides = [1, 1]} : vector<3x1024xf32> to vector<3x892xf32>
      %c168 = arith.constant 168 : index
      %c0_65 = arith.constant 0 : index
      %91 = vector.load %arg14[%c168, %c0_65] : memref<200x892xf32, #tpu.memory_space<vmem>>, vector<3x892xf32>
      tpu.vector_store %arg14[%c168, %c0_65], %90 {strides = array<i32>} : memref<200x892xf32, #tpu.memory_space<vmem>>, vector<3x892xf32>,
      %92 = vector.extract_strided_slice %47 {offsets = [0, 130], sizes = [3, 892], strides = [1, 1]} : vector<3x1024xf32> to vector<3x892xf32>
      %c176 = arith.constant 176 : index
      %c0_66 = arith.constant 0 : index
      %93 = vector.load %arg14[%c176, %c0_66] : memref<200x892xf32, #tpu.memory_space<vmem>>, vector<3x892xf32>
      tpu.vector_store %arg14[%c176, %c0_66], %92 {strides = array<i32>} : memref<200x892xf32, #tpu.memory_space<vmem>>, vector<3x892xf32>,
      %94 = vector.extract_strided_slice %47 {offsets = [0, 131], sizes = [3, 892], strides = [1, 1]} : vector<3x1024xf32> to vector<3x892xf32>
      %c184 = arith.constant 184 : index
      %c0_67 = arith.constant 0 : index
      %95 = vector.load %arg14[%c184, %c0_67] : memref<200x892xf32, #tpu.memory_space<vmem>>, vector<3x892xf32>
      tpu.vector_store %arg14[%c184, %c0_67], %94 {strides = array<i32>} : memref<200x892xf32, #tpu.memory_space<vmem>>, vector<3x892xf32>,
      %96 = vector.extract_strided_slice %47 {offsets = [0, 132], sizes = [3, 892], strides = [1, 1]} : vector<3x1024xf32> to vector<3x892xf32>
      %c192 = arith.constant 192 : index
      %c0_68 = arith.constant 0 : index
      %97 = vector.load %arg14[%c192, %c0_68] : memref<200x892xf32, #tpu.memory_space<vmem>>, vector<3x892xf32>
      tpu.vector_store %arg14[%c192, %c0_68], %96 {strides = array<i32>} : memref<200x892xf32, #tpu.memory_space<vmem>>, vector<3x892xf32>,
      %c0_69 = arith.constant 0 : index
      %c0_70 = arith.constant 0 : index
      %98 = vector.load %arg2[%c0_69, %c0_70] : memref<6x200xf32, #tpu.memory_space<vmem>>, vector<6x200xf32>
      %c0_71 = arith.constant 0 : index
      %c0_72 = arith.constant 0 : index
      %99 = vector.load %arg14[%c0_71, %c0_72] : memref<200x892xf32, #tpu.memory_space<vmem>>, vector<200x892xf32>
      %cst_73 = arith.constant dense<0.000000e+00> : vector<6x892xf32>
      %100 = tpu.matmul %98, %99, %cst_73 {dimension_numbers = #tpu.dot_dimension_numbers<[1], [0], [0], [1], [0, 0, 1, 1], [], []>} : vector<6x200xf32>, vector<200x892xf32>, vector<6x892xf32> -> vector<6x892xf32>
      %101 = vector.extract_strided_slice %100 {offsets = [0, 0], sizes = [6, 859], strides = [1, 1]} : vector<6x892xf32> to vector<6x859xf32>
      %102 = vector.extract_strided_slice %100 {offsets = [0, 1], sizes = [6, 859], strides = [1, 1]} : vector<6x892xf32> to vector<6x859xf32>
      %103 = arith.maximumf %101, %102 : vector<6x859xf32>
      %104 = vector.extract_strided_slice %100 {offsets = [0, 32], sizes = [6, 859], strides = [1, 1]} : vector<6x892xf32> to vector<6x859xf32>
      %105 = vector.extract_strided_slice %100 {offsets = [0, 33], sizes = [6, 859], strides = [1, 1]} : vector<6x892xf32> to vector<6x859xf32>
      %106 = arith.maximumf %104, %105 : vector<6x859xf32>
      %107 = arith.maximumf %103, %106 : vector<6x859xf32>
      %c0_74 = arith.constant 0 : index
      %c0_75 = arith.constant 0 : index
      %108 = vector.load %arg3[%c0_74, %c0_75] : memref<6x1xf32, #tpu.memory_space<vmem>>, vector<6x1xf32>
      %109 = vector.broadcast %108 : vector<6x1xf32> to vector<6x859xf32>
      %110 = arith.addf %107, %109 : vector<6x859xf32>
      %cst_76 = arith.constant 0.000000e+00 : f32
      %111 = vector.broadcast %cst_76 : f32 to vector<6x859xf32>
      %112 = arith.maximumf %110, %111 : vector<6x859xf32>
      %113 = vector.extract_strided_slice %112 {offsets = [0, 0], sizes = [6, 595], strides = [1, 1]} : vector<6x859xf32> to vector<6x595xf32>
      %c0_77 = arith.constant 0 : index
      %c0_78 = arith.constant 0 : index
      %114 = vector.load %arg15[%c0_77, %c0_78] : memref<200x595xf32, #tpu.memory_space<vmem>>, vector<6x595xf32>
      tpu.vector_store %arg15[%c0_77, %c0_78], %113 {strides = array<i32>} : memref<200x595xf32, #tpu.memory_space<vmem>>, vector<6x595xf32>,
      %115 = vector.extract_strided_slice %112 {offsets = [0, 2], sizes = [6, 595], strides = [1, 1]} : vector<6x859xf32> to vector<6x595xf32>
      %c8_79 = arith.constant 8 : index
      %c0_80 = arith.constant 0 : index
      %116 = vector.load %arg15[%c8_79, %c0_80] : memref<200x595xf32, #tpu.memory_space<vmem>>, vector<6x595xf32>
      tpu.vector_store %arg15[%c8_79, %c0_80], %115 {strides = array<i32>} : memref<200x595xf32, #tpu.memory_space<vmem>>, vector<6x595xf32>,
      %117 = vector.extract_strided_slice %112 {offsets = [0, 4], sizes = [6, 595], strides = [1, 1]} : vector<6x859xf32> to vector<6x595xf32>
      %c16_81 = arith.constant 16 : index
      %c0_82 = arith.constant 0 : index
      %118 = vector.load %arg15[%c16_81, %c0_82] : memref<200x595xf32, #tpu.memory_space<vmem>>, vector<6x595xf32>
      tpu.vector_store %arg15[%c16_81, %c0_82], %117 {strides = array<i32>} : memref<200x595xf32, #tpu.memory_space<vmem>>, vector<6x595xf32>,
      %119 = vector.extract_strided_slice %112 {offsets = [0, 6], sizes = [6, 595], strides = [1, 1]} : vector<6x859xf32> to vector<6x595xf32>
      %c24_83 = arith.constant 24 : index
      %c0_84 = arith.constant 0 : index
      %120 = vector.load %arg15[%c24_83, %c0_84] : memref<200x595xf32, #tpu.memory_space<vmem>>, vector<6x595xf32>
      tpu.vector_store %arg15[%c24_83, %c0_84], %119 {strides = array<i32>} : memref<200x595xf32, #tpu.memory_space<vmem>>, vector<6x595xf32>,
      %121 = vector.extract_strided_slice %112 {offsets = [0, 8], sizes = [6, 595], strides = [1, 1]} : vector<6x859xf32> to vector<6x595xf32>
      %c32_85 = arith.constant 32 : index
      %c0_86 = arith.constant 0 : index
      %122 = vector.load %arg15[%c32_85, %c0_86] : memref<200x595xf32, #tpu.memory_space<vmem>>, vector<6x595xf32>
      tpu.vector_store %arg15[%c32_85, %c0_86], %121 {strides = array<i32>} : memref<200x595xf32, #tpu.memory_space<vmem>>, vector<6x595xf32>,
      %123 = vector.extract_strided_slice %112 {offsets = [0, 64], sizes = [6, 595], strides = [1, 1]} : vector<6x859xf32> to vector<6x595xf32>
      %c40_87 = arith.constant 40 : index
      %c0_88 = arith.constant 0 : index
      %124 = vector.load %arg15[%c40_87, %c0_88] : memref<200x595xf32, #tpu.memory_space<vmem>>, vector<6x595xf32>
      tpu.vector_store %arg15[%c40_87, %c0_88], %123 {strides = array<i32>} : memref<200x595xf32, #tpu.memory_space<vmem>>, vector<6x595xf32>,
      %125 = vector.extract_strided_slice %112 {offsets = [0, 66], sizes = [6, 595], strides = [1, 1]} : vector<6x859xf32> to vector<6x595xf32>
      %c48_89 = arith.constant 48 : index
      %c0_90 = arith.constant 0 : index
      %126 = vector.load %arg15[%c48_89, %c0_90] : memref<200x595xf32, #tpu.memory_space<vmem>>, vector<6x595xf32>
      tpu.vector_store %arg15[%c48_89, %c0_90], %125 {strides = array<i32>} : memref<200x595xf32, #tpu.memory_space<vmem>>, vector<6x595xf32>,
      %127 = vector.extract_strided_slice %112 {offsets = [0, 68], sizes = [6, 595], strides = [1, 1]} : vector<6x859xf32> to vector<6x595xf32>
      %c56_91 = arith.constant 56 : index
      %c0_92 = arith.constant 0 : index
      %128 = vector.load %arg15[%c56_91, %c0_92] : memref<200x595xf32, #tpu.memory_space<vmem>>, vector<6x595xf32>
      tpu.vector_store %arg15[%c56_91, %c0_92], %127 {strides = array<i32>} : memref<200x595xf32, #tpu.memory_space<vmem>>, vector<6x595xf32>,
      %129 = vector.extract_strided_slice %112 {offsets = [0, 70], sizes = [6, 595], strides = [1, 1]} : vector<6x859xf32> to vector<6x595xf32>
      %c64_93 = arith.constant 64 : index
      %c0_94 = arith.constant 0 : index
      %130 = vector.load %arg15[%c64_93, %c0_94] : memref<200x595xf32, #tpu.memory_space<vmem>>, vector<6x595xf32>
      tpu.vector_store %arg15[%c64_93, %c0_94], %129 {strides = array<i32>} : memref<200x595xf32, #tpu.memory_space<vmem>>, vector<6x595xf32>,
      %131 = vector.extract_strided_slice %112 {offsets = [0, 72], sizes = [6, 595], strides = [1, 1]} : vector<6x859xf32> to vector<6x595xf32>
      %c72_95 = arith.constant 72 : index
      %c0_96 = arith.constant 0 : index
      %132 = vector.load %arg15[%c72_95, %c0_96] : memref<200x595xf32, #tpu.memory_space<vmem>>, vector<6x595xf32>
      tpu.vector_store %arg15[%c72_95, %c0_96], %131 {strides = array<i32>} : memref<200x595xf32, #tpu.memory_space<vmem>>, vector<6x595xf32>,
      %133 = vector.extract_strided_slice %112 {offsets = [0, 128], sizes = [6, 595], strides = [1, 1]} : vector<6x859xf32> to vector<6x595xf32>
      %c80_97 = arith.constant 80 : index
      %c0_98 = arith.constant 0 : index
      %134 = vector.load %arg15[%c80_97, %c0_98] : memref<200x595xf32, #tpu.memory_space<vmem>>, vector<6x595xf32>
      tpu.vector_store %arg15[%c80_97, %c0_98], %133 {strides = array<i32>} : memref<200x595xf32, #tpu.memory_space<vmem>>, vector<6x595xf32>,
      %135 = vector.extract_strided_slice %112 {offsets = [0, 130], sizes = [6, 595], strides = [1, 1]} : vector<6x859xf32> to vector<6x595xf32>
      %c88_99 = arith.constant 88 : index
      %c0_100 = arith.constant 0 : index
      %136 = vector.load %arg15[%c88_99, %c0_100] : memref<200x595xf32, #tpu.memory_space<vmem>>, vector<6x595xf32>
      tpu.vector_store %arg15[%c88_99, %c0_100], %135 {strides = array<i32>} : memref<200x595xf32, #tpu.memory_space<vmem>>, vector<6x595xf32>,
      %137 = vector.extract_strided_slice %112 {offsets = [0, 132], sizes = [6, 595], strides = [1, 1]} : vector<6x859xf32> to vector<6x595xf32>
      %c96_101 = arith.constant 96 : index
      %c0_102 = arith.constant 0 : index
      %138 = vector.load %arg15[%c96_101, %c0_102] : memref<200x595xf32, #tpu.memory_space<vmem>>, vector<6x595xf32>
      tpu.vector_store %arg15[%c96_101, %c0_102], %137 {strides = array<i32>} : memref<200x595xf32, #tpu.memory_space<vmem>>, vector<6x595xf32>,
      %139 = vector.extract_strided_slice %112 {offsets = [0, 134], sizes = [6, 595], strides = [1, 1]} : vector<6x859xf32> to vector<6x595xf32>
      %c104_103 = arith.constant 104 : index
      %c0_104 = arith.constant 0 : index
      %140 = vector.load %arg15[%c104_103, %c0_104] : memref<200x595xf32, #tpu.memory_space<vmem>>, vector<6x595xf32>
      tpu.vector_store %arg15[%c104_103, %c0_104], %139 {strides = array<i32>} : memref<200x595xf32, #tpu.memory_space<vmem>>, vector<6x595xf32>,
      %141 = vector.extract_strided_slice %112 {offsets = [0, 136], sizes = [6, 595], strides = [1, 1]} : vector<6x859xf32> to vector<6x595xf32>
      %c112_105 = arith.constant 112 : index
      %c0_106 = arith.constant 0 : index
      %142 = vector.load %arg15[%c112_105, %c0_106] : memref<200x595xf32, #tpu.memory_space<vmem>>, vector<6x595xf32>
      tpu.vector_store %arg15[%c112_105, %c0_106], %141 {strides = array<i32>} : memref<200x595xf32, #tpu.memory_space<vmem>>, vector<6x595xf32>,
      %143 = vector.extract_strided_slice %112 {offsets = [0, 192], sizes = [6, 595], strides = [1, 1]} : vector<6x859xf32> to vector<6x595xf32>
      %c120_107 = arith.constant 120 : index
      %c0_108 = arith.constant 0 : index
      %144 = vector.load %arg15[%c120_107, %c0_108] : memref<200x595xf32, #tpu.memory_space<vmem>>, vector<6x595xf32>
      tpu.vector_store %arg15[%c120_107, %c0_108], %143 {strides = array<i32>} : memref<200x595xf32, #tpu.memory_space<vmem>>, vector<6x595xf32>,
      %145 = vector.extract_strided_slice %112 {offsets = [0, 194], sizes = [6, 595], strides = [1, 1]} : vector<6x859xf32> to vector<6x595xf32>
      %c128_109 = arith.constant 128 : index
      %c0_110 = arith.constant 0 : index
      %146 = vector.load %arg15[%c128_109, %c0_110] : memref<200x595xf32, #tpu.memory_space<vmem>>, vector<6x595xf32>
      tpu.vector_store %arg15[%c128_109, %c0_110], %145 {strides = array<i32>} : memref<200x595xf32, #tpu.memory_space<vmem>>, vector<6x595xf32>,
      %147 = vector.extract_strided_slice %112 {offsets = [0, 196], sizes = [6, 595], strides = [1, 1]} : vector<6x859xf32> to vector<6x595xf32>
      %c136_111 = arith.constant 136 : index
      %c0_112 = arith.constant 0 : index
      %148 = vector.load %arg15[%c136_111, %c0_112] : memref<200x595xf32, #tpu.memory_space<vmem>>, vector<6x595xf32>
      tpu.vector_store %arg15[%c136_111, %c0_112], %147 {strides = array<i32>} : memref<200x595xf32, #tpu.memory_space<vmem>>, vector<6x595xf32>,
      %149 = vector.extract_strided_slice %112 {offsets = [0, 198], sizes = [6, 595], strides = [1, 1]} : vector<6x859xf32> to vector<6x595xf32>
      %c144_113 = arith.constant 144 : index
      %c0_114 = arith.constant 0 : index
      %150 = vector.load %arg15[%c144_113, %c0_114] : memref<200x595xf32, #tpu.memory_space<vmem>>, vector<6x595xf32>
      tpu.vector_store %arg15[%c144_113, %c0_114], %149 {strides = array<i32>} : memref<200x595xf32, #tpu.memory_space<vmem>>, vector<6x595xf32>,
      %151 = vector.extract_strided_slice %112 {offsets = [0, 200], sizes = [6, 595], strides = [1, 1]} : vector<6x859xf32> to vector<6x595xf32>
      %c152_115 = arith.constant 152 : index
      %c0_116 = arith.constant 0 : index
      %152 = vector.load %arg15[%c152_115, %c0_116] : memref<200x595xf32, #tpu.memory_space<vmem>>, vector<6x595xf32>
      tpu.vector_store %arg15[%c152_115, %c0_116], %151 {strides = array<i32>} : memref<200x595xf32, #tpu.memory_space<vmem>>, vector<6x595xf32>,
      %153 = vector.extract_strided_slice %112 {offsets = [0, 256], sizes = [6, 595], strides = [1, 1]} : vector<6x859xf32> to vector<6x595xf32>
      %c160_117 = arith.constant 160 : index
      %c0_118 = arith.constant 0 : index
      %154 = vector.load %arg15[%c160_117, %c0_118] : memref<200x595xf32, #tpu.memory_space<vmem>>, vector<6x595xf32>
      tpu.vector_store %arg15[%c160_117, %c0_118], %153 {strides = array<i32>} : memref<200x595xf32, #tpu.memory_space<vmem>>, vector<6x595xf32>,
      %155 = vector.extract_strided_slice %112 {offsets = [0, 258], sizes = [6, 595], strides = [1, 1]} : vector<6x859xf32> to vector<6x595xf32>
      %c168_119 = arith.constant 168 : index
      %c0_120 = arith.constant 0 : index
      %156 = vector.load %arg15[%c168_119, %c0_120] : memref<200x595xf32, #tpu.memory_space<vmem>>, vector<6x595xf32>
      tpu.vector_store %arg15[%c168_119, %c0_120], %155 {strides = array<i32>} : memref<200x595xf32, #tpu.memory_space<vmem>>, vector<6x595xf32>,
      %157 = vector.extract_strided_slice %112 {offsets = [0, 260], sizes = [6, 595], strides = [1, 1]} : vector<6x859xf32> to vector<6x595xf32>
      %c176_121 = arith.constant 176 : index
      %c0_122 = arith.constant 0 : index
      %158 = vector.load %arg15[%c176_121, %c0_122] : memref<200x595xf32, #tpu.memory_space<vmem>>, vector<6x595xf32>
      tpu.vector_store %arg15[%c176_121, %c0_122], %157 {strides = array<i32>} : memref<200x595xf32, #tpu.memory_space<vmem>>, vector<6x595xf32>,
      %159 = vector.extract_strided_slice %112 {offsets = [0, 262], sizes = [6, 595], strides = [1, 1]} : vector<6x859xf32> to vector<6x595xf32>
      %c184_123 = arith.constant 184 : index
      %c0_124 = arith.constant 0 : index
      %160 = vector.load %arg15[%c184_123, %c0_124] : memref<200x595xf32, #tpu.memory_space<vmem>>, vector<6x595xf32>
      tpu.vector_store %arg15[%c184_123, %c0_124], %159 {strides = array<i32>} : memref<200x595xf32, #tpu.memory_space<vmem>>, vector<6x595xf32>,
      %161 = vector.extract_strided_slice %112 {offsets = [0, 264], sizes = [6, 595], strides = [1, 1]} : vector<6x859xf32> to vector<6x595xf32>
      %c192_125 = arith.constant 192 : index
      %c0_126 = arith.constant 0 : index
      %162 = vector.load %arg15[%c192_125, %c0_126] : memref<200x595xf32, #tpu.memory_space<vmem>>, vector<6x595xf32>
      tpu.vector_store %arg15[%c192_125, %c0_126], %161 {strides = array<i32>} : memref<200x595xf32, #tpu.memory_space<vmem>>, vector<6x595xf32>,
      %c0_127 = arith.constant 0 : index
      %c0_128 = arith.constant 0 : index
      %163 = vector.load %arg4[%c0_127, %c0_128] : memref<16x200xf32, #tpu.memory_space<vmem>>, vector<16x200xf32>
      %c0_129 = arith.constant 0 : index
      %c0_130 = arith.constant 0 : index
      %164 = vector.load %arg15[%c0_129, %c0_130] : memref<200x595xf32, #tpu.memory_space<vmem>>, vector<200x595xf32>
      %cst_131 = arith.constant dense<0.000000e+00> : vector<16x595xf32>
      %165 = tpu.matmul %163, %164, %cst_131 {dimension_numbers = #tpu.dot_dimension_numbers<[1], [0], [0], [1], [0, 0, 1, 1], [], []>} : vector<16x200xf32>, vector<200x595xf32>, vector<16x595xf32> -> vector<16x595xf32>
      %166 = vector.extract_strided_slice %165 {offsets = [0, 0], sizes = [16, 529], strides = [1, 1]} : vector<16x595xf32> to vector<16x529xf32>
      %167 = vector.extract_strided_slice %165 {offsets = [0, 2], sizes = [16, 529], strides = [1, 1]} : vector<16x595xf32> to vector<16x529xf32>
      %168 = arith.maximumf %166, %167 : vector<16x529xf32>
      %169 = vector.extract_strided_slice %165 {offsets = [0, 64], sizes = [16, 529], strides = [1, 1]} : vector<16x595xf32> to vector<16x529xf32>
      %170 = vector.extract_strided_slice %165 {offsets = [0, 66], sizes = [16, 529], strides = [1, 1]} : vector<16x595xf32> to vector<16x529xf32>
      %171 = arith.maximumf %169, %170 : vector<16x529xf32>
      %172 = arith.maximumf %168, %171 : vector<16x529xf32>
      %c0_132 = arith.constant 0 : index
      %c0_133 = arith.constant 0 : index
      %173 = vector.load %arg5[%c0_132, %c0_133] : memref<16x1xf32, #tpu.memory_space<vmem>>, vector<16x1xf32>
      %174 = vector.broadcast %173 : vector<16x1xf32> to vector<16x529xf32>
      %175 = arith.addf %172, %174 : vector<16x529xf32>
      %cst_134 = arith.constant 0.000000e+00 : f32
      %176 = vector.broadcast %cst_134 : f32 to vector<16x529xf32>
      %177 = arith.maximumf %175, %176 : vector<16x529xf32>
      %c0_135 = arith.constant 0 : index
      %c0_136 = arith.constant 0 : index
      %178 = vector.load %arg6[%c0_135, %c0_136] : memref<529x32xf32, #tpu.memory_space<vmem>>, vector<529x32xf32>
      %cst_137 = arith.constant dense<0.000000e+00> : vector<16x32xf32>
      %179 = tpu.matmul %177, %178, %cst_137 {dimension_numbers = #tpu.dot_dimension_numbers<[1], [0], [0], [1], [0, 0, 1, 1], [], []>} : vector<16x529xf32>, vector<529x32xf32>, vector<16x32xf32> -> vector<16x32xf32>
      %180 = vector.extract_strided_slice %179 {offsets = [0, 0], sizes = [1, 32], strides = [1, 1]} : vector<16x32xf32> to vector<1x32xf32>
      %181 = vector.extract_strided_slice %179 {offsets = [1, 0], sizes = [1, 32], strides = [1, 1]} : vector<16x32xf32> to vector<1x32xf32>
      %182 = vector.extract_strided_slice %179 {offsets = [2, 0], sizes = [1, 32], strides = [1, 1]} : vector<16x32xf32> to vector<1x32xf32>
      %183 = vector.extract_strided_slice %179 {offsets = [3, 0], sizes = [1, 32], strides = [1, 1]} : vector<16x32xf32> to vector<1x32xf32>
      %184 = vector.extract_strided_slice %179 {offsets = [4, 0], sizes = [1, 32], strides = [1, 1]} : vector<16x32xf32> to vector<1x32xf32>
      %185 = vector.extract_strided_slice %179 {offsets = [5, 0], sizes = [1, 32], strides = [1, 1]} : vector<16x32xf32> to vector<1x32xf32>
      %186 = vector.extract_strided_slice %179 {offsets = [6, 0], sizes = [1, 32], strides = [1, 1]} : vector<16x32xf32> to vector<1x32xf32>
      %187 = vector.extract_strided_slice %179 {offsets = [7, 0], sizes = [1, 32], strides = [1, 1]} : vector<16x32xf32> to vector<1x32xf32>
      %188 = vector.extract_strided_slice %179 {offsets = [8, 0], sizes = [1, 32], strides = [1, 1]} : vector<16x32xf32> to vector<1x32xf32>
      %189 = vector.extract_strided_slice %179 {offsets = [9, 0], sizes = [1, 32], strides = [1, 1]} : vector<16x32xf32> to vector<1x32xf32>
      %190 = vector.extract_strided_slice %179 {offsets = [10, 0], sizes = [1, 32], strides = [1, 1]} : vector<16x32xf32> to vector<1x32xf32>
      %191 = vector.extract_strided_slice %179 {offsets = [11, 0], sizes = [1, 32], strides = [1, 1]} : vector<16x32xf32> to vector<1x32xf32>
      %192 = vector.extract_strided_slice %179 {offsets = [12, 0], sizes = [1, 32], strides = [1, 1]} : vector<16x32xf32> to vector<1x32xf32>
      %193 = vector.extract_strided_slice %179 {offsets = [13, 0], sizes = [1, 32], strides = [1, 1]} : vector<16x32xf32> to vector<1x32xf32>
      %194 = vector.extract_strided_slice %179 {offsets = [14, 0], sizes = [1, 32], strides = [1, 1]} : vector<16x32xf32> to vector<1x32xf32>
      %195 = vector.extract_strided_slice %179 {offsets = [15, 0], sizes = [1, 32], strides = [1, 1]} : vector<16x32xf32> to vector<1x32xf32>
      %196 = tpu.concatenate %180, %181, %182, %183, %184, %185, %186, %187, %188, %189, %190, %191, %192, %193, %194, %195 in 1 : vector<1x32xf32>, vector<1x32xf32>, vector<1x32xf32>, vector<1x32xf32>, vector<1x32xf32>, vector<1x32xf32>, vector<1x32xf32>, vector<1x32xf32>, vector<1x32xf32>, vector<1x32xf32>, vector<1x32xf32>, vector<1x32xf32>, vector<1x32xf32>, vector<1x32xf32>, vector<1x32xf32>, vector<1x32xf32> -> vector<1x512xf32>
      %197 = arith.index_cast %arg17 : i32 to index
      %c0_138 = arith.constant 0 : index
      %c0_139 = arith.constant 0 : index
      %198 = vector.load %arg16[%197, %c0_138, %c0_139] : memref<8x1x512xf32, #tpu.memory_space<vmem>>, vector<1x1x512xf32>
      %199 = vector.shape_cast %198 : vector<1x1x512xf32> to vector<1x512xf32>
      %200 = vector.shape_cast %196 : vector<1x512xf32> to vector<1x1x512xf32>
      tpu.vector_store %arg16[%197, %c0_138, %c0_139], %200 {strides = array<i32>} : memref<8x1x512xf32, #tpu.memory_space<vmem>>, vector<1x1x512xf32>,
    }
    %c8_i32_4 = arith.constant 8 : i32
    %c0_5 = arith.constant 0 : index
    %c0_6 = arith.constant 0 : index
    %c0_7 = arith.constant 0 : index
    %5 = vector.load %arg16[%c0_5, %c0_6, %c0_7] : memref<8x1x512xf32, #tpu.memory_space<vmem>>, vector<1x1x512xf32>
    %6 = vector.shape_cast %5 : vector<1x1x512xf32> to vector<1x512xf32>
    %c1 = arith.constant 1 : index
    %c0_8 = arith.constant 0 : index
    %c0_9 = arith.constant 0 : index
    %7 = vector.load %arg16[%c1, %c0_8, %c0_9] : memref<8x1x512xf32, #tpu.memory_space<vmem>>, vector<1x1x512xf32>
    %8 = vector.shape_cast %7 : vector<1x1x512xf32> to vector<1x512xf32>
    %c2 = arith.constant 2 : index
    %c0_10 = arith.constant 0 : index
    %c0_11 = arith.constant 0 : index
    %9 = vector.load %arg16[%c2, %c0_10, %c0_11] : memref<8x1x512xf32, #tpu.memory_space<vmem>>, vector<1x1x512xf32>
    %10 = vector.shape_cast %9 : vector<1x1x512xf32> to vector<1x512xf32>
    %c3 = arith.constant 3 : index
    %c0_12 = arith.constant 0 : index
    %c0_13 = arith.constant 0 : index
    %11 = vector.load %arg16[%c3, %c0_12, %c0_13] : memref<8x1x512xf32, #tpu.memory_space<vmem>>, vector<1x1x512xf32>
    %12 = vector.shape_cast %11 : vector<1x1x512xf32> to vector<1x512xf32>
    %c4 = arith.constant 4 : index
    %c0_14 = arith.constant 0 : index
    %c0_15 = arith.constant 0 : index
    %13 = vector.load %arg16[%c4, %c0_14, %c0_15] : memref<8x1x512xf32, #tpu.memory_space<vmem>>, vector<1x1x512xf32>
    %14 = vector.shape_cast %13 : vector<1x1x512xf32> to vector<1x512xf32>
    %c5 = arith.constant 5 : index
    %c0_16 = arith.constant 0 : index
    %c0_17 = arith.constant 0 : index
    %15 = vector.load %arg16[%c5, %c0_16, %c0_17] : memref<8x1x512xf32, #tpu.memory_space<vmem>>, vector<1x1x512xf32>
    %16 = vector.shape_cast %15 : vector<1x1x512xf32> to vector<1x512xf32>
    %c6 = arith.constant 6 : index
    %c0_18 = arith.constant 0 : index
    %c0_19 = arith.constant 0 : index
    %17 = vector.load %arg16[%c6, %c0_18, %c0_19] : memref<8x1x512xf32, #tpu.memory_space<vmem>>, vector<1x1x512xf32>
    %18 = vector.shape_cast %17 : vector<1x1x512xf32> to vector<1x512xf32>
    %c7 = arith.constant 7 : index
    %c0_20 = arith.constant 0 : index
    %c0_21 = arith.constant 0 : index
    %19 = vector.load %arg16[%c7, %c0_20, %c0_21] : memref<8x1x512xf32, #tpu.memory_space<vmem>>, vector<1x1x512xf32>
    %20 = vector.shape_cast %19 : vector<1x1x512xf32> to vector<1x512xf32>
    %21 = tpu.concatenate %6, %8, %10, %12, %14, %16, %18, %20 in 0 : vector<1x512xf32>, vector<1x512xf32>, vector<1x512xf32>, vector<1x512xf32>, vector<1x512xf32>, vector<1x512xf32>, vector<1x512xf32>, vector<1x512xf32> -> vector<8x512xf32>
    %22 = arith.truncf %21 : vector<8x512xf32> to vector<8x512xbf16>
    %c0_22 = arith.constant 0 : index
    %c0_23 = arith.constant 0 : index
    %23 = vector.load %arg7[%c0_22, %c0_23] : memref<512x120xbf16, #tpu.memory_space<vmem>>, vector<512x120xbf16>
    %cst_24 = arith.constant dense<0.000000e+00> : vector<8x120xf32>
    %24 = tpu.matmul %22, %23, %cst_24 {dimension_numbers = #tpu.dot_dimension_numbers<[1], [0], [0], [1], [0, 0, 1, 1], [], []>} : vector<8x512xbf16>, vector<512x120xbf16>, vector<8x120xf32> -> vector<8x120xf32>
    %c0_25 = arith.constant 0 : index
    %c0_26 = arith.constant 0 : index
    %25 = vector.load %arg8[%c0_25, %c0_26] : memref<1x120xf32, #tpu.memory_space<vmem>>, vector<1x120xf32>
    %26 = vector.broadcast %25 : vector<1x120xf32> to vector<8x120xf32>
    %27 = arith.addf %24, %26 : vector<8x120xf32>
    %cst_27 = arith.constant 0.000000e+00 : f32
    %28 = vector.broadcast %cst_27 : f32 to vector<8x120xf32>
    %29 = arith.maximumf %27, %28 : vector<8x120xf32>
    %30 = arith.truncf %29 : vector<8x120xf32> to vector<8x120xbf16>
    %c0_28 = arith.constant 0 : index
    %c0_29 = arith.constant 0 : index
    %31 = vector.load %arg9[%c0_28, %c0_29] : memref<120x84xbf16, #tpu.memory_space<vmem>>, vector<120x84xbf16>
    %cst_30 = arith.constant dense<0.000000e+00> : vector<8x84xf32>
    %32 = tpu.matmul %30, %31, %cst_30 {dimension_numbers = #tpu.dot_dimension_numbers<[1], [0], [0], [1], [0, 0, 1, 1], [], []>} : vector<8x120xbf16>, vector<120x84xbf16>, vector<8x84xf32> -> vector<8x84xf32>
    %c0_31 = arith.constant 0 : index
    %c0_32 = arith.constant 0 : index
    %33 = vector.load %arg10[%c0_31, %c0_32] : memref<1x84xf32, #tpu.memory_space<vmem>>, vector<1x84xf32>
    %34 = vector.broadcast %33 : vector<1x84xf32> to vector<8x84xf32>
    %35 = arith.addf %32, %34 : vector<8x84xf32>
    %cst_33 = arith.constant 0.000000e+00 : f32
    %36 = vector.broadcast %cst_33 : f32 to vector<8x84xf32>
    %37 = arith.maximumf %35, %36 : vector<8x84xf32>
    %38 = arith.truncf %37 : vector<8x84xf32> to vector<8x84xbf16>
    %c0_34 = arith.constant 0 : index
    %c0_35 = arith.constant 0 : index
    %39 = vector.load %arg11[%c0_34, %c0_35] : memref<84x10xbf16, #tpu.memory_space<vmem>>, vector<84x10xbf16>
    %cst_36 = arith.constant dense<0.000000e+00> : vector<8x10xf32>
    %40 = tpu.matmul %38, %39, %cst_36 {dimension_numbers = #tpu.dot_dimension_numbers<[1], [0], [0], [1], [0, 0, 1, 1], [], []>} : vector<8x84xbf16>, vector<84x10xbf16>, vector<8x10xf32> -> vector<8x10xf32>
    %c0_37 = arith.constant 0 : index
    %c0_38 = arith.constant 0 : index
    %41 = vector.load %arg12[%c0_37, %c0_38] : memref<1x10xf32, #tpu.memory_space<vmem>>, vector<1x10xf32>
    %42 = vector.broadcast %41 : vector<1x10xf32> to vector<8x10xf32>
    %43 = arith.addf %40, %42 : vector<8x10xf32>
    %c0_39 = arith.constant 0 : index
    %c0_40 = arith.constant 0 : index
    %44 = vector.load %arg13[%c0_39, %c0_40] : memref<8x10xf32, #tpu.memory_space<vmem>>, vector<8x10xf32>
    tpu.vector_store %arg13[%c0_39, %c0_40], %43 {strides = array<i32>} : memref<8x10xf32, #tpu.memory_space<vmem>>, vector<8x10xf32>,
    return
  }
  func.func @transform_0(%arg0: i32) -> (i32, i32, i32) {
    %c0_i32 = arith.constant 0 : i32
    %c0_i32_0 = arith.constant 0 : i32
    %c0_i32_1 = arith.constant 0 : i32
    return %arg0, %c0_i32, %c0_i32_0 : i32, i32, i32
  }
  func.func @transform_1(%arg0: i32) -> (i32, i32) {
    %c0_i32 = arith.constant 0 : i32
    %c0_i32_0 = arith.constant 0 : i32
    %c0_i32_1 = arith.constant 0 : i32
    return %c0_i32, %c0_i32_0 : i32, i32
  }
  func.func @transform_2(%arg0: i32) -> (i32, i32) {
    %c0_i32 = arith.constant 0 : i32
    %c0_i32_0 = arith.constant 0 : i32
    %c0_i32_1 = arith.constant 0 : i32
    return %c0_i32, %c0_i32_0 : i32, i32
  }
  func.func @transform_3(%arg0: i32) -> (i32, i32) {
    %c0_i32 = arith.constant 0 : i32
    %c0_i32_0 = arith.constant 0 : i32
    %c0_i32_1 = arith.constant 0 : i32
    return %c0_i32, %c0_i32_0 : i32, i32
  }
  func.func @transform_4(%arg0: i32) -> (i32, i32) {
    %c0_i32 = arith.constant 0 : i32
    %c0_i32_0 = arith.constant 0 : i32
    %c0_i32_1 = arith.constant 0 : i32
    return %c0_i32, %c0_i32_0 : i32, i32
  }
  func.func @transform_5(%arg0: i32) -> (i32, i32) {
    %c0_i32 = arith.constant 0 : i32
    %c0_i32_0 = arith.constant 0 : i32
    %c0_i32_1 = arith.constant 0 : i32
    return %c0_i32, %c0_i32_0 : i32, i32
  }
  func.func @transform_6(%arg0: i32) -> (i32, i32) {
    %c0_i32 = arith.constant 0 : i32
    %c0_i32_0 = arith.constant 0 : i32
    %c0_i32_1 = arith.constant 0 : i32
    return %c0_i32, %c0_i32_0 : i32, i32
  }
  func.func @transform_7(%arg0: i32) -> (i32, i32) {
    %c0_i32 = arith.constant 0 : i32
    %c0_i32_0 = arith.constant 0 : i32
    %c0_i32_1 = arith.constant 0 : i32
    return %c0_i32, %c0_i32_0 : i32, i32
  }
  func.func @transform_8(%arg0: i32) -> (i32, i32) {
    %c0_i32 = arith.constant 0 : i32
    %c0_i32_0 = arith.constant 0 : i32
    %c0_i32_1 = arith.constant 0 : i32
    return %c0_i32, %c0_i32_0 : i32, i32
  }
  func.func @transform_9(%arg0: i32) -> (i32, i32) {
    %c0_i32 = arith.constant 0 : i32
    %c0_i32_0 = arith.constant 0 : i32
    %c0_i32_1 = arith.constant 0 : i32
    return %c0_i32, %c0_i32_0 : i32, i32
  }
  func.func @transform_10(%arg0: i32) -> (i32, i32) {
    %c0_i32 = arith.constant 0 : i32
    %c0_i32_0 = arith.constant 0 : i32
    %c0_i32_1 = arith.constant 0 : i32
    return %c0_i32, %c0_i32_0 : i32, i32
  }
  func.func @transform_11(%arg0: i32) -> (i32, i32) {
    %c0_i32 = arith.constant 0 : i32
    %c0_i32_0 = arith.constant 0 : i32
    %c0_i32_1 = arith.constant 0 : i32
    return %c0_i32, %c0_i32_0 : i32, i32
  }
  func.func @transform_12(%arg0: i32) -> (i32, i32) {
    %c0_i32 = arith.constant 0 : i32
    %c0_i32_0 = arith.constant 0 : i32
    return %arg0, %c0_i32 : i32, i32
  }
}

</mosaic_0001>

<llo_original>
// kernel: net_forward.1
$region0: #{net_forward.1}
  #allocation0 [shape = 'u32[]', space=smem, size = 0x4, offset = 0x4, fixed_abs, tag = 'smem constant byte address 0x4 - core index']
  #allocation1 [shape = 'u32[144,128]{1,0:T(1,128)}', space=vmem, size = 0x12000, scoped, tag = 'internal scratch']
  #allocation2 [shape = 'f32[200,892]{1,0:T(8,128)}', space=vmem, size = 0xaf000, scoped, tag = 'scratch operand']
  #allocation3 [shape = 'f32[200,595]{1,0:T(8,128)}', space=vmem, size = 0x7d000, scoped, tag = 'scratch operand']
  #allocation4 [shape = 'f32[8,1,512]{2,1,0:T(1,128)}', space=vmem, size = 0x4000, scoped, tag = 'scratch operand']
  %s0 = inlined_call_operand.vmem [shape: f32[16,3,1024], index: 0, kind: input, shape index: {}]
  %s1 = inlined_call_operand.vmem [shape: f32[6,200], index: 1, kind: input, shape index: {}]
  %s2 = inlined_call_operand.vmem [shape: f32[6,1], index: 2, kind: input, shape index: {}]
  %s3 = inlined_call_operand.vmem [shape: f32[16,200], index: 3, kind: input, shape index: {}]
  %s4 = inlined_call_operand.vmem [shape: f32[16,1], index: 4, kind: input, shape index: {}]
  %s5 = inlined_call_operand.vmem [shape: f32[529,32], index: 5, kind: input, shape index: {}]
  %s6 = inlined_call_operand.vmem [shape: bf16[512,120], index: 6, kind: input, shape index: {}]
  %s7 = inlined_call_operand.vmem [shape: f32[1,120], index: 7, kind: input, shape index: {}]
  %s8 = inlined_call_operand.vmem [shape: bf16[120,84], index: 8, kind: input, shape index: {}]
  %s9 = inlined_call_operand.vmem [shape: f32[1,84], index: 9, kind: input, shape index: {}]
  %s10 = inlined_call_operand.vmem [shape: bf16[84,10], index: 10, kind: input, shape index: {}]
  %s11 = inlined_call_operand.vmem [shape: f32[1,10], index: 11, kind: input, shape index: {}]
  %s12 = inlined_call_operand.hbm [shape: f32[16,10], index: 12, kind: output, shape index: {}]
  %s13 = sld [smem:[#allocation0]]
  $region88: #{net_forward.1} parent=0
    _
  %s15 = ssub.s32 1, %s13
  %s16 = scalar_select 0, %s15, %s13
  $region1: #{net_forward.1} parent=0
    #allocation5 [shape = 'u8[8192]{0}', space=vmem, size = 0x2000, scoped, tag = 'output window, operand 0']
    #allocation6 [shape = 's32[2]{0}', space=sflag, size = 0x8, scoped, tag = 'scoped memory for net_forward.1']
    %17 = vsyncpa [#allocation6], 0
    %s18 = scalar_lea.sflag [#allocation6], 1
    %19 = vsyncpa %s18, 0
    loop: start=0, step=1, limit=4
    $region2: #{net_forward.1} parent=1 // loop_pre_header
      _
    $region3: #{net_forward.1} parent=1 // loop_header
      %s21 = sphi 0, %s25
      %p22 = scmp.ge.s32.totalorder %s21, 4
      %s31 = sphi 0, %s33
      %s34 = sphi 0, %s31
      %s35 = sphi 0, %s34
      %s51 = sphi 0, %s35
      %s55 = sphi 0, %s55
      %s57 = sphi 0, %s55
      %s58 = sphi 0, %s57
      %s72 = sphi 0, %s58
      %s76 = sphi 0, %s76
      %s78 = sphi 0, %s76
      %s79 = sphi 0, %s78
      %s93 = sphi 0, %s79
      %s97 = sphi 0, %s97
      %s99 = sphi 0, %s97
      %s100 = sphi 0, %s99
      %s114 = sphi 0, %s100
      %s118 = sphi 0, %s118
      %s120 = sphi 0, %s118
      %s121 = sphi 0, %s120
      %s135 = sphi 0, %s121
      %s139 = sphi 0, %s139
      %s141 = sphi 0, %s139
      %s142 = sphi 0, %s141
      %s156 = sphi 0, %s142
      %s160 = sphi 0, %s160
      %s162 = sphi 0, %s160
      %s163 = sphi 0, %s162
      %s177 = sphi 0, %s163
      %s181 = sphi 0, %s181
      %s183 = sphi 0, %s181
      %s184 = sphi 0, %s183
      %s198 = sphi 0, %s184
      %s202 = sphi 0, %s202
      %s204 = sphi 0, %s202
      %s205 = sphi 0, %s204
      %s219 = sphi 0, %s205
      %s223 = sphi 0, %s223
      %s225 = sphi 0, %s223
      %s226 = sphi 0, %s225
      %s240 = sphi 0, %s226
      %s244 = sphi 0, %s244
      %s246 = sphi 0, %s244
      %s247 = sphi 0, %s246
      %s261 = sphi 0, %s247
      %s265 = sphi 0, %s265
      %s267 = sphi 0, %s265
      %s268 = sphi 0, %s267
      %s282 = sphi 0, %s268
      %s288 = sphi 0, %s290
      %s291 = sphi 0, %s288
      %s292 = sphi 0, %s291
      %s308 = sphi 0, %s292
    $region4: #{net_forward.1} parent=1 // loop_header_branch
      %24 = sbr.rel (%p22) target = $region8
    $region5: #{net_forward.1} parent=1 // loop_body
      %s26 = ssub.s32 %s21, 1
      %s27 = ssub.s32 %s21, 2
      %s28 = sadd.s32 %s21, 1
      %s29 = ssub.s32 %s21, %s28
      %p30 = scmp.eq.s32.totalorder %s29, 0
      %s32 = sadd.s32 %s31, 1
      %s33 = scalar_select %p30, %s31, %s32
      %p36 = pneg %p30
      %p37 = scmp.eq.s32.totalorder %s21, 1
      %p38 = por %p36, %p37
      %p39 = scmp.ne.s32.totalorder %s31, %s34
      %p40 = scmp.eq.s32.totalorder %s21, 0
      %p41 = por %p39, %p40
      %p42 = scmp.ne.s32.totalorder %s31, %s34
      %p43 = scmp.eq.s32.totalorder %s26, 1
      %p44 = por %p42, %p43
      %p45 = scmp.ne.s32.totalorder %s34, %s35
      %p46 = scmp.eq.s32.totalorder %s26, 0
      %p47 = por %p45, %p46
      %p48 = scmp.ne.s32.totalorder %s34, %s35
      %p49 = scmp.eq.s32.totalorder %s27, 1
      %p50 = por %p48, %p49
      %p52 = scmp.ne.s32.totalorder %s35, %s51
      %p53 = scmp.eq.s32.totalorder %s27, 0
      %p54 = por %p52, %p53
      %s56 = sadd.s32 %s55, 1
      %p59 = scmp.eq.s32.totalorder %s21, 1
      %p60 = scmp.ne.s32.totalorder %s55, %s57
      %p61 = scmp.eq.s32.totalorder %s21, 0
      %p62 = por %p60, %p61
      %p63 = scmp.ne.s32.totalorder %s55, %s57
      %p64 = scmp.eq.s32.totalorder %s26, 1
      %p65 = por %p63, %p64
      %p66 = scmp.ne.s32.totalorder %s57, %s58
      %p67 = scmp.eq.s32.totalorder %s26, 0
      %p68 = por %p66, %p67
      %p69 = scmp.ne.s32.totalorder %s57, %s58
      %p70 = scmp.eq.s32.totalorder %s27, 1
      %p71 = por %p69, %p70
      %p73 = scmp.ne.s32.totalorder %s58, %s72
      %p74 = scmp.eq.s32.totalorder %s27, 0
      %p75 = por %p73, %p74
      %s77 = sadd.s32 %s76, 1
      %p80 = scmp.eq.s32.totalorder %s21, 1
      %p81 = scmp.ne.s32.totalorder %s76, %s78
      %p82 = scmp.eq.s32.totalorder %s21, 0
      %p83 = por %p81, %p82
      %p84 = scmp.ne.s32.totalorder %s76, %s78
      %p85 = scmp.eq.s32.totalorder %s26, 1
      %p86 = por %p84, %p85
      %p87 = scmp.ne.s32.totalorder %s78, %s79
      %p88 = scmp.eq.s32.totalorder %s26, 0
      %p89 = por %p87, %p88
      %p90 = scmp.ne.s32.totalorder %s78, %s79
      %p91 = scmp.eq.s32.totalorder %s27, 1
      %p92 = por %p90, %p91
      %p94 = scmp.ne.s32.totalorder %s79, %s93
      %p95 = scmp.eq.s32.totalorder %s27, 0
      %p96 = por %p94, %p95
      %s98 = sadd.s32 %s97, 1
      %p101 = scmp.eq.s32.totalorder %s21, 1
      %p102 = scmp.ne.s32.totalorder %s97, %s99
      %p103 = scmp.eq.s32.totalorder %s21, 0
      %p104 = por %p102, %p103
      %p105 = scmp.ne.s32.totalorder %s97, %s99
      %p106 = scmp.eq.s32.totalorder %s26, 1
      %p107 = por %p105, %p106
      %p108 = scmp.ne.s32.totalorder %s99, %s100
      %p109 = scmp.eq.s32.totalorder %s26, 0
      %p110 = por %p108, %p109
      %p111 = scmp.ne.s32.totalorder %s99, %s100
      %p112 = scmp.eq.s32.totalorder %s27, 1
      %p113 = por %p111, %p112
      %p115 = scmp.ne.s32.totalorder %s100, %s114
      %p116 = scmp.eq.s32.totalorder %s27, 0
      %p117 = por %p115, %p116
      %s119 = sadd.s32 %s118, 1
      %p122 = scmp.eq.s32.totalorder %s21, 1
      %p123 = scmp.ne.s32.totalorder %s118, %s120
      %p124 = scmp.eq.s32.totalorder %s21, 0
      %p125 = por %p123, %p124
      %p126 = scmp.ne.s32.totalorder %s118, %s120
      %p127 = scmp.eq.s32.totalorder %s26, 1
      %p128 = por %p126, %p127
      %p129 = scmp.ne.s32.totalorder %s120, %s121
      %p130 = scmp.eq.s32.totalorder %s26, 0
      %p131 = por %p129, %p130
      %p132 = scmp.ne.s32.totalorder %s120, %s121
      %p133 = scmp.eq.s32.totalorder %s27, 1
      %p134 = por %p132, %p133
      %p136 = scmp.ne.s32.totalorder %s121, %s135
      %p137 = scmp.eq.s32.totalorder %s27, 0
      %p138 = por %p136, %p137
      %s140 = sadd.s32 %s139, 1
      %p143 = scmp.eq.s32.totalorder %s21, 1
      %p144 = scmp.ne.s32.totalorder %s139, %s141
      %p145 = scmp.eq.s32.totalorder %s21, 0
      %p146 = por %p144, %p145
      %p147 = scmp.ne.s32.totalorder %s139, %s141
      %p148 = scmp.eq.s32.totalorder %s26, 1
      %p149 = por %p147, %p148
      %p150 = scmp.ne.s32.totalorder %s141, %s142
      %p151 = scmp.eq.s32.totalorder %s26, 0
      %p152 = por %p150, %p151
      %p153 = scmp.ne.s32.totalorder %s141, %s142
      %p154 = scmp.eq.s32.totalorder %s27, 1
      %p155 = por %p153, %p154
      %p157 = scmp.ne.s32.totalorder %s142, %s156
      %p158 = scmp.eq.s32.totalorder %s27, 0
      %p159 = por %p157, %p158
      %s161 = sadd.s32 %s160, 1
      %p164 = scmp.eq.s32.totalorder %s21, 1
      %p165 = scmp.ne.s32.totalorder %s160, %s162
      %p166 = scmp.eq.s32.totalorder %s21, 0
      %p167 = por %p165, %p166
      %p168 = scmp.ne.s32.totalorder %s160, %s162
      %p169 = scmp.eq.s32.totalorder %s26, 1
      %p170 = por %p168, %p169
      %p171 = scmp.ne.s32.totalorder %s162, %s163
      %p172 = scmp.eq.s32.totalorder %s26, 0
      %p173 = por %p171, %p172
      %p174 = scmp.ne.s32.totalorder %s162, %s163
      %p175 = scmp.eq.s32.totalorder %s27, 1
      %p176 = por %p174, %p175
      %p178 = scmp.ne.s32.totalorder %s163, %s177
      %p179 = scmp.eq.s32.totalorder %s27, 0
      %p180 = por %p178, %p179
      %s182 = sadd.s32 %s181, 1
      %p185 = scmp.eq.s32.totalorder %s21, 1
      %p186 = scmp.ne.s32.totalorder %s181, %s183
      %p187 = scmp.eq.s32.totalorder %s21, 0
      %p188 = por %p186, %p187
      %p189 = scmp.ne.s32.totalorder %s181, %s183
      %p190 = scmp.eq.s32.totalorder %s26, 1
      %p191 = por %p189, %p190
      %p192 = scmp.ne.s32.totalorder %s183, %s184
      %p193 = scmp.eq.s32.totalorder %s26, 0
      %p194 = por %p192, %p193
      %p195 = scmp.ne.s32.totalorder %s183, %s184
      %p196 = scmp.eq.s32.totalorder %s27, 1
      %p197 = por %p195, %p196
      %p199 = scmp.ne.s32.totalorder %s184, %s198
      %p200 = scmp.eq.s32.totalorder %s27, 0
      %p201 = por %p199, %p200
      %s203 = sadd.s32 %s202, 1
      %p206 = scmp.eq.s32.totalorder %s21, 1
      %p207 = scmp.ne.s32.totalorder %s202, %s204
      %p208 = scmp.eq.s32.totalorder %s21, 0
      %p209 = por %p207, %p208
      %p210 = scmp.ne.s32.totalorder %s202, %s204
      %p211 = scmp.eq.s32.totalorder %s26, 1
      %p212 = por %p210, %p211
      %p213 = scmp.ne.s32.totalorder %s204, %s205
      %p214 = scmp.eq.s32.totalorder %s26, 0
      %p215 = por %p213, %p214
      %p216 = scmp.ne.s32.totalorder %s204, %s205
      %p217 = scmp.eq.s32.totalorder %s27, 1
      %p218 = por %p216, %p217
      %p220 = scmp.ne.s32.totalorder %s205, %s219
      %p221 = scmp.eq.s32.totalorder %s27, 0
      %p222 = por %p220, %p221
      %s224 = sadd.s32 %s223, 1
      %p227 = scmp.eq.s32.totalorder %s21, 1
      %p228 = scmp.ne.s32.totalorder %s223, %s225
      %p229 = scmp.eq.s32.totalorder %s21, 0
      %p230 = por %p228, %p229
      %p231 = scmp.ne.s32.totalorder %s223, %s225
      %p232 = scmp.eq.s32.totalorder %s26, 1
      %p233 = por %p231, %p232
      %p234 = scmp.ne.s32.totalorder %s225, %s226
      %p235 = scmp.eq.s32.totalorder %s26, 0
      %p236 = por %p234, %p235
      %p237 = scmp.ne.s32.totalorder %s225, %s226
      %p238 = scmp.eq.s32.totalorder %s27, 1
      %p239 = por %p237, %p238
      %p241 = scmp.ne.s32.totalorder %s226, %s240
      %p242 = scmp.eq.s32.totalorder %s27, 0
      %p243 = por %p241, %p242
      %s245 = sadd.s32 %s244, 1
      %p248 = scmp.eq.s32.totalorder %s21, 1
      %p249 = scmp.ne.s32.totalorder %s244, %s246
      %p250 = scmp.eq.s32.totalorder %s21, 0
      %p251 = por %p249, %p250
      %p252 = scmp.ne.s32.totalorder %s244, %s246
      %p253 = scmp.eq.s32.totalorder %s26, 1
      %p254 = por %p252, %p253
      %p255 = scmp.ne.s32.totalorder %s246, %s247
      %p256 = scmp.eq.s32.totalorder %s26, 0
      %p257 = por %p255, %p256
      %p258 = scmp.ne.s32.totalorder %s246, %s247
      %p259 = scmp.eq.s32.totalorder %s27, 1
      %p260 = por %p258, %p259
      %p262 = scmp.ne.s32.totalorder %s247, %s261
      %p263 = scmp.eq.s32.totalorder %s27, 0
      %p264 = por %p262, %p263
      %s266 = sadd.s32 %s265, 1
      %p269 = scmp.eq.s32.totalorder %s21, 1
      %p270 = scmp.ne.s32.totalorder %s265, %s267
      %p271 = scmp.eq.s32.totalorder %s21, 0
      %p272 = por %p270, %p271
      %p273 = scmp.ne.s32.totalorder %s265, %s267
      %p274 = scmp.eq.s32.totalorder %s26, 1
      %p275 = por %p273, %p274
      %p276 = scmp.ne.s32.totalorder %s267, %s268
      %p277 = scmp.eq.s32.totalorder %s26, 0
      %p278 = por %p276, %p277
      %p279 = scmp.ne.s32.totalorder %s267, %s268
      %p280 = scmp.eq.s32.totalorder %s27, 1
      %p281 = por %p279, %p280
      %p283 = scmp.ne.s32.totalorder %s268, %s282
      %p284 = scmp.eq.s32.totalorder %s27, 0
      %p285 = por %p283, %p284
      %s286 = ssub.s32 %s21, %s28
      %p287 = scmp.eq.s32.totalorder %s286, 0
      %s289 = sadd.s32 %s288, 1
      %s290 = scalar_select %p287, %s288, %s289
      %p293 = pneg %p287
      %p294 = scmp.eq.s32.totalorder %s21, 1
      %p295 = por %p293, %p294
      %p296 = scmp.ne.s32.totalorder %s288, %s291
      %p297 = scmp.eq.s32.totalorder %s21, 0
      %p298 = por %p296, %p297
      %p299 = scmp.ne.s32.totalorder %s288, %s291
      %p300 = scmp.eq.s32.totalorder %s26, 1
      %p301 = por %p299, %p300
      %p302 = scmp.ne.s32.totalorder %s291, %s292
      %p303 = scmp.eq.s32.totalorder %s26, 0
      %p304 = por %p302, %p303
      %p305 = scmp.ne.s32.totalorder %s291, %s292
      %p306 = scmp.eq.s32.totalorder %s27, 1
      %p307 = por %p305, %p306
      %p309 = scmp.ne.s32.totalorder %s292, %s308
      %p310 = scmp.eq.s32.totalorder %s27, 0
      %p311 = por %p309, %p310
      %p312 = scmp.le.s32.totalorder 1, %s21
      %p313 = scmp.lt.s32.totalorder %s21, 3
      %p314 = pnand %p312, %p313
      %p315 = pneg %p314
      // Predicated region
      $region9: #{net_forward.1} parent=5 // pred_check
        _
      $region10: #{net_forward.1} parent=5 // pred_check_branch
        %317 = sbr.rel (%p314) target = $region12
      $region11: #{net_forward.1} parent=5 // pred_region
        %s318 = ssub.s32 %s21, 1
        // Predicated region
        $region13: #{net_forward.1} parent=11 // pred_check
          %p319 = pneg %p68
        $region14: #{net_forward.1} parent=11 // pred_check_branch
          %321 = sbr.rel (%p319) target = $region16
        $region15: #{net_forward.1} parent=11 // pred_region
          _
        $region16: #{net_forward.1} parent=11 // pred_fallthru
          _
        // Predicated region
        $region17: #{net_forward.1} parent=11 // pred_check
          %p322 = pneg %p89
        $region18: #{net_forward.1} parent=11 // pred_check_branch
          %324 = sbr.rel (%p322) target = $region20
        $region19: #{net_forward.1} parent=11 // pred_region
          _
        $region20: #{net_forward.1} parent=11 // pred_fallthru
          _
        // Predicated region
        $region21: #{net_forward.1} parent=11 // pred_check
          %p325 = pneg %p110
        $region22: #{net_forward.1} parent=11 // pred_check_branch
          %327 = sbr.rel (%p325) target = $region24
        $region23: #{net_forward.1} parent=11 // pred_region
          _
        $region24: #{net_forward.1} parent=11 // pred_fallthru
          _
        // Predicated region
        $region25: #{net_forward.1} parent=11 // pred_check
          %p328 = pneg %p131
        $region26: #{net_forward.1} parent=11 // pred_check_branch
          %330 = sbr.rel (%p328) target = $region28
        $region27: #{net_forward.1} parent=11 // pred_region
          _
        $region28: #{net_forward.1} parent=11 // pred_fallthru
          _
        // Predicated region
        $region29: #{net_forward.1} parent=11 // pred_check
          %p331 = pneg %p152
        $region30: #{net_forward.1} parent=11 // pred_check_branch
          %333 = sbr.rel (%p331) target = $region32
        $region31: #{net_forward.1} parent=11 // pred_region
          _
        $region32: #{net_forward.1} parent=11 // pred_fallthru
          _
        // Predicated region
        $region33: #{net_forward.1} parent=11 // pred_check
          %p334 = pneg %p173
        $region34: #{net_forward.1} parent=11 // pred_check_branch
          %336 = sbr.rel (%p334) target = $region36
        $region35: #{net_forward.1} parent=11 // pred_region
          _
        $region36: #{net_forward.1} parent=11 // pred_fallthru
          _
        // Predicated region
        $region37: #{net_forward.1} parent=11 // pred_check
          %p337 = pneg %p194
        $region38: #{net_forward.1} parent=11 // pred_check_branch
          %339 = sbr.rel (%p337) target = $region40
        $region39: #{net_forward.1} parent=11 // pred_region
          _
        $region40: #{net_forward.1} parent=11 // pred_fallthru
          _
        // Predicated region
        $region41: #{net_forward.1} parent=11 // pred_check
          %p340 = pneg %p215
        $region42: #{net_forward.1} parent=11 // pred_check_branch
          %342 = sbr.rel (%p340) target = $region44
        $region43: #{net_forward.1} parent=11 // pred_region
          _
        $region44: #{net_forward.1} parent=11 // pred_fallthru
          _
        // Predicated region
        $region45: #{net_forward.1} parent=11 // pred_check
          %p343 = pneg %p236
        $region46: #{net_forward.1} parent=11 // pred_check_branch
          %345 = sbr.rel (%p343) target = $region48
        $region47: #{net_forward.1} parent=11 // pred_region
          _
        $region48: #{net_forward.1} parent=11 // pred_fallthru
          _
        // Predicated region
        $region49: #{net_forward.1} parent=11 // pred_check
          %p346 = pneg %p257
        $region50: #{net_forward.1} parent=11 // pred_check_branch
          %348 = sbr.rel (%p346) target = $region52
        $region51: #{net_forward.1} parent=11 // pred_region
          _
        $region52: #{net_forward.1} parent=11 // pred_fallthru
          _
        // Predicated region
        $region53: #{net_forward.1} parent=11 // pred_check
          %p349 = pneg %p278
        $region54: #{net_forward.1} parent=11 // pred_check_branch
          %351 = sbr.rel (%p349) target = $region56
        $region55: #{net_forward.1} parent=11 // pred_region
          _
        $region56: #{net_forward.1} parent=11 // pred_fallthru
          _
      $region12: #{net_forward.1} parent=5 // pred_fallthru
        _
      %p352 = scmp.lt.s32.totalorder %s21, 2
      // Predicated region
      $region57: #{net_forward.1} parent=5 // pred_check
        %p353 = pneg %p352
      $region58: #{net_forward.1} parent=5 // pred_check_branch
        %355 = sbr.rel (%p353) target = $region60
      $region59: #{net_forward.1} parent=5 // pred_region
        // Predicated region
        $region61: #{net_forward.1} parent=59 // pred_check
          %p356 = pneg %p41
        $region62: #{net_forward.1} parent=59 // pred_check_branch
          %358 = sbr.rel (%p356) target = $region64
        $region63: #{net_forward.1} parent=59 // pred_region
          %s359 = smul.u32 8, %s21
          %p360 = scmp.lt.s32.totalorder %s359, 15
          %s361 = scalar_select %p360, %s359, 15
          %s362 = smul.addr %s361, 8
          %s363 = smul.addr %s362, 4
          %s364 = scalar_lea.vmem %s0, %s363
          %s365 = smul.u32 8, %s21
        $region64: #{net_forward.1} parent=59 // pred_fallthru
          _
      $region60: #{net_forward.1} parent=5 // pred_fallthru
        _
      %p366 = scmp.le.s32.totalorder 1, %s21
      %p367 = scmp.lt.s32.totalorder %s21, 3
      %p368 = pnand %p366, %p367
      %p369 = pneg %p368
      // Predicated region
      $region65: #{net_forward.1} parent=5 // pred_check
        _
      $region66: #{net_forward.1} parent=5 // pred_check_branch
        %371 = sbr.rel (%p368) target = $region68
      $region67: #{net_forward.1} parent=5 // pred_region
        %s372 = ssub.s32 %s21, 1
        %s373 = smul.u32 8, %s26
        %p374 = scmp.lt.s32.totalorder %s373, 15
        %s375 = scalar_select %p374, %s373, 15
        %s376 = smul.addr %s375, 8
        %s377 = smul.addr %s376, 4
        %s378 = scalar_lea.vmem %s0, %s377
        %p379 = pneg %p47
        %p380 = pneg %p44
        %p381 = pneg %p68
        %p382 = pneg %p65
        %p383 = pneg %p89
        %p384 = pneg %p86
        %p385 = pneg %p110
        %p386 = pneg %p107
        %p387 = pneg %p131
        %p388 = pneg %p128
        %p389 = pneg %p152
        %p390 = pneg %p149
        %p391 = pneg %p173
        %p392 = pneg %p170
        %p393 = pneg %p194
        %p394 = pneg %p191
        %p395 = pneg %p215
        %p396 = pneg %p212
        %p397 = pneg %p236
        %p398 = pneg %p233
        %p399 = pneg %p257
        %p400 = pneg %p254
        %p401 = pneg %p278
        %p402 = pneg %p275
        %p403 = pneg %p304
        %p404 = pneg %p301
        %s405 = sand.u32 %s291, 1
        %s406 = scalar_lea.sflag [#allocation6], %s405
        %s407 = sand.u32 %s291, 1
        %s408 = smul.addr %s407, 8
        %s409 = scalar_lea.vmem [#allocation5], %s408
        %s410 = smul.u32 8, %s26
        %p411 = scmp.lt.s32.totalorder %s410, 15
        %s412 = scalar_select %p411, %s410, 15
        %s413 = smul.addr %s412, 8
        %s414 = smul.addr %s413, 4
        %s415 = scalar_lea.vmem %s0, %s414
        %s416 = smul.u32 8, %s26
        %418 = vst [vmem:[#allocation2] sm:$0xff] 0.0
        %419 = vst [vmem:[#allocation2 + $0x8] sm:$0xff] 0.0
        %420 = vst [vmem:[#allocation2 + $0x10] sm:$0xff] 0.0
        %421 = vst [vmem:[#allocation2 + $0x18] sm:$0xff] 0.0
        %422 = vst [vmem:[#allocation2 + $0x20] sm:$0xff] 0.0
        %423 = vst [vmem:[#allocation2 + $0x28] sm:$0xff] 0.0
        %vm424 = vcmask 1014784
        %425 = vst.msk [vmem:[#allocation2 + $0x30] sm:$0xff] %vm424, 0.0
        %426 = vst [vmem:[#allocation2 + $0x38] sm:$0xff] 0.0
        %427 = vst [vmem:[#allocation2 + $0x40] sm:$0xff] 0.0
        %428 = vst [vmem:[#allocation2 + $0x48] sm:$0xff] 0.0
        %429 = vst [vmem:[#allocation2 + $0x50] sm:$0xff] 0.0
        %430 = vst [vmem:[#allocation2 + $0x58] sm:$0xff] 0.0
        %431 = vst [vmem:[#allocation2 + $0x60] sm:$0xff] 0.0
        %432 = vst.msk [vmem:[#allocation2 + $0x68] sm:$0xff] %vm424, 0.0
        %433 = vst [vmem:[#allocation2 + $0x70] sm:$0xff] 0.0
        %434 = vst [vmem:[#allocation2 + $0x78] sm:$0xff] 0.0
        %435 = vst [vmem:[#allocation2 + $0x80] sm:$0xff] 0.0
        %436 = vst [vmem:[#allocation2 + $0x88] sm:$0xff] 0.0
        %437 = vst [vmem:[#allocation2 + $0x90] sm:$0xff] 0.0
        %438 = vst [vmem:[#allocation2 + $0x98] sm:$0xff] 0.0
        %439 = vst.msk [vmem:[#allocation2 + $0xa0] sm:$0xff] %vm424, 0.0
        %440 = vst [vmem:[#allocation2 + $0xa8] sm:$0xff] 0.0
        %441 = vst [vmem:[#allocation2 + $0xb0] sm:$0xff] 0.0
        %442 = vst [vmem:[#allocation2 + $0xb8] sm:$0xff] 0.0
        %443 = vst [vmem:[#allocation2 + $0xc0] sm:$0xff] 0.0
        %444 = vst [vmem:[#allocation2 + $0xc8] sm:$0xff] 0.0
        %445 = vst [vmem:[#allocation2 + $0xd0] sm:$0xff] 0.0
        %446 = vst.msk [vmem:[#allocation2 + $0xd8] sm:$0xff] %vm424, 0.0
        %447 = vst [vmem:[#allocation2 + $0xe0] sm:$0xff] 0.0
        %448 = vst [vmem:[#allocation2 + $0xe8] sm:$0xff] 0.0
        %449 = vst [vmem:[#allocation2 + $0xf0] sm:$0xff] 0.0
        %450 = vst [vmem:[#allocation2 + $0xf8] sm:$0xff] 0.0
        %451 = vst [vmem:[#allocation2 + $0x100] sm:$0xff] 0.0
        %452 = vst [vmem:[#allocation2 + $0x108] sm:$0xff] 0.0
        %453 = vst.msk [vmem:[#allocation2 + $0x110] sm:$0xff] %vm424, 0.0
        %454 = vst [vmem:[#allocation2 + $0x118] sm:$0xff] 0.0
        %455 = vst [vmem:[#allocation2 + $0x120] sm:$0xff] 0.0
        %456 = vst [vmem:[#allocation2 + $0x128] sm:$0xff] 0.0
        %457 = vst [vmem:[#allocation2 + $0x130] sm:$0xff] 0.0
        %458 = vst [vmem:[#allocation2 + $0x138] sm:$0xff] 0.0
        %459 = vst [vmem:[#allocation2 + $0x140] sm:$0xff] 0.0
        %460 = vst.msk [vmem:[#allocation2 + $0x148] sm:$0xff] %vm424, 0.0
        %461 = vst [vmem:[#allocation2 + $0x150] sm:$0xff] 0.0
        %462 = vst [vmem:[#allocation2 + $0x158] sm:$0xff] 0.0
        %463 = vst [vmem:[#allocation2 + $0x160] sm:$0xff] 0.0
        %464 = vst [vmem:[#allocation2 + $0x168] sm:$0xff] 0.0
        %465 = vst [vmem:[#allocation2 + $0x170] sm:$0xff] 0.0
        %466 = vst [vmem:[#allocation2 + $0x178] sm:$0xff] 0.0
        %467 = vst.msk [vmem:[#allocation2 + $0x180] sm:$0xff] %vm424, 0.0
        %468 = vst [vmem:[#allocation2 + $0x188] sm:$0xff] 0.0
        %469 = vst [vmem:[#allocation2 + $0x190] sm:$0xff] 0.0
        %470 = vst [vmem:[#allocation2 + $0x198] sm:$0xff] 0.0
        %471 = vst [vmem:[#allocation2 + $0x1a0] sm:$0xff] 0.0
        %472 = vst [vmem:[#allocation2 + $0x1a8] sm:$0xff] 0.0
        %473 = vst [vmem:[#allocation2 + $0x1b0] sm:$0xff] 0.0
        %474 = vst.msk [vmem:[#allocation2 + $0x1b8] sm:$0xff] %vm424, 0.0
        %475 = vst [vmem:[#allocation2 + $0x1c0] sm:$0xff] 0.0
        %476 = vst [vmem:[#allocation2 + $0x1c8] sm:$0xff] 0.0
        %477 = vst [vmem:[#allocation2 + $0x1d0] sm:$0xff] 0.0
        %478 = vst [vmem:[#allocation2 + $0x1d8] sm:$0xff] 0.0
        %479 = vst [vmem:[#allocation2 + $0x1e0] sm:$0xff] 0.0
        %480 = vst [vmem:[#allocation2 + $0x1e8] sm:$0xff] 0.0
        %481 = vst.msk [vmem:[#allocation2 + $0x1f0] sm:$0xff] %vm424, 0.0
        %482 = vst [vmem:[#allocation2 + $0x1f8] sm:$0xff] 0.0
        %483 = vst [vmem:[#allocation2 + $0x200] sm:$0xff] 0.0
        %484 = vst [vmem:[#allocation2 + $0x208] sm:$0xff] 0.0
        %485 = vst [vmem:[#allocation2 + $0x210] sm:$0xff] 0.0
        %486 = vst [vmem:[#allocation2 + $0x218] sm:$0xff] 0.0
        %487 = vst [vmem:[#allocation2 + $0x220] sm:$0xff] 0.0
        %488 = vst.msk [vmem:[#allocation2 + $0x228] sm:$0xff] %vm424, 0.0
        %489 = vst [vmem:[#allocation2 + $0x230] sm:$0xff] 0.0
        %490 = vst [vmem:[#allocation2 + $0x238] sm:$0xff] 0.0
        %491 = vst [vmem:[#allocation2 + $0x240] sm:$0xff] 0.0
        %492 = vst [vmem:[#allocation2 + $0x248] sm:$0xff] 0.0
        %493 = vst [vmem:[#allocation2 + $0x250] sm:$0xff] 0.0
        %494 = vst [vmem:[#allocation2 + $0x258] sm:$0xff] 0.0
        %495 = vst.msk [vmem:[#allocation2 + $0x260] sm:$0xff] %vm424, 0.0
        %496 = vst [vmem:[#allocation2 + $0x268] sm:$0xff] 0.0
        %497 = vst [vmem:[#allocation2 + $0x270] sm:$0xff] 0.0
        %498 = vst [vmem:[#allocation2 + $0x278] sm:$0xff] 0.0
        %499 = vst [vmem:[#allocation2 + $0x280] sm:$0xff] 0.0
        %500 = vst [vmem:[#allocation2 + $0x288] sm:$0xff] 0.0
        %501 = vst [vmem:[#allocation2 + $0x290] sm:$0xff] 0.0
        %502 = vst.msk [vmem:[#allocation2 + $0x298] sm:$0xff] %vm424, 0.0
        %503 = vst [vmem:[#allocation2 + $0x2a0] sm:$0xff] 0.0
        %504 = vst [vmem:[#allocation2 + $0x2a8] sm:$0xff] 0.0
        %505 = vst [vmem:[#allocation2 + $0x2b0] sm:$0xff] 0.0
        %506 = vst [vmem:[#allocation2 + $0x2b8] sm:$0xff] 0.0
        %507 = vst [vmem:[#allocation2 + $0x2c0] sm:$0xff] 0.0
        %508 = vst [vmem:[#allocation2 + $0x2c8] sm:$0xff] 0.0
        %509 = vst.msk [vmem:[#allocation2 + $0x2d0] sm:$0xff] %vm424, 0.0
        %510 = vst [vmem:[#allocation2 + $0x2d8] sm:$0xff] 0.0
        %511 = vst [vmem:[#allocation2 + $0x2e0] sm:$0xff] 0.0
        %512 = vst [vmem:[#allocation2 + $0x2e8] sm:$0xff] 0.0
        %513 = vst [vmem:[#allocation2 + $0x2f0] sm:$0xff] 0.0
        %514 = vst [vmem:[#allocation2 + $0x2f8] sm:$0xff] 0.0
        %515 = vst [vmem:[#allocation2 + $0x300] sm:$0xff] 0.0
        %516 = vst.msk [vmem:[#allocation2 + $0x308] sm:$0xff] %vm424, 0.0
        %517 = vst [vmem:[#allocation2 + $0x310] sm:$0xff] 0.0
        %518 = vst [vmem:[#allocation2 + $0x318] sm:$0xff] 0.0
        %519 = vst [vmem:[#allocation2 + $0x320] sm:$0xff] 0.0
        %520 = vst [vmem:[#allocation2 + $0x328] sm:$0xff] 0.0
        %521 = vst [vmem:[#allocation2 + $0x330] sm:$0xff] 0.0
        %522 = vst [vmem:[#allocation2 + $0x338] sm:$0xff] 0.0
        %523 = vst.msk [vmem:[#allocation2 + $0x340] sm:$0xff] %vm424, 0.0
        %524 = vst [vmem:[#allocation2 + $0x348] sm:$0xff] 0.0
        %525 = vst [vmem:[#allocation2 + $0x350] sm:$0xff] 0.0
        %526 = vst [vmem:[#allocation2 + $0x358] sm:$0xff] 0.0
        %527 = vst [vmem:[#allocation2 + $0x360] sm:$0xff] 0.0
        %528 = vst [vmem:[#allocation2 + $0x368] sm:$0xff] 0.0
        %529 = vst [vmem:[#allocation2 + $0x370] sm:$0xff] 0.0
        %530 = vst.msk [vmem:[#allocation2 + $0x378] sm:$0xff] %vm424, 0.0
        %531 = vst [vmem:[#allocation2 + $0x380] sm:$0xff] 0.0
        %532 = vst [vmem:[#allocation2 + $0x388] sm:$0xff] 0.0
        %533 = vst [vmem:[#allocation2 + $0x390] sm:$0xff] 0.0
        %534 = vst [vmem:[#allocation2 + $0x398] sm:$0xff] 0.0
        %535 = vst [vmem:[#allocation2 + $0x3a0] sm:$0xff] 0.0
        %536 = vst [vmem:[#allocation2 + $0x3a8] sm:$0xff] 0.0
        %537 = vst.msk [vmem:[#allocation2 + $0x3b0] sm:$0xff] %vm424, 0.0
        %538 = vst [vmem:[#allocation2 + $0x3b8] sm:$0xff] 0.0
        %539 = vst [vmem:[#allocation2 + $0x3c0] sm:$0xff] 0.0
        %540 = vst [vmem:[#allocation2 + $0x3c8] sm:$0xff] 0.0
        %541 = vst [vmem:[#allocation2 + $0x3d0] sm:$0xff] 0.0
        %542 = vst [vmem:[#allocation2 + $0x3d8] sm:$0xff] 0.0
        %543 = vst [vmem:[#allocation2 + $0x3e0] sm:$0xff] 0.0
        %544 = vst.msk [vmem:[#allocation2 + $0x3e8] sm:$0xff] %vm424, 0.0
        %545 = vst [vmem:[#allocation2 + $0x3f0] sm:$0xff] 0.0
        %546 = vst [vmem:[#allocation2 + $0x3f8] sm:$0xff] 0.0
        %547 = vst [vmem:[#allocation2 + $0x400] sm:$0xff] 0.0
        %548 = vst [vmem:[#allocation2 + $0x408] sm:$0xff] 0.0
        %549 = vst [vmem:[#allocation2 + $0x410] sm:$0xff] 0.0
        %550 = vst [vmem:[#allocation2 + $0x418] sm:$0xff] 0.0
        %551 = vst.msk [vmem:[#allocation2 + $0x420] sm:$0xff] %vm424, 0.0
        %552 = vst [vmem:[#allocation2 + $0x428] sm:$0xff] 0.0
        %553 = vst [vmem:[#allocation2 + $0x430] sm:$0xff] 0.0
        %554 = vst [vmem:[#allocation2 + $0x438] sm:$0xff] 0.0
        %555 = vst [vmem:[#allocation2 + $0x440] sm:$0xff] 0.0
        %556 = vst [vmem:[#allocation2 + $0x448] sm:$0xff] 0.0
        %557 = vst [vmem:[#allocation2 + $0x450] sm:$0xff] 0.0
        %558 = vst.msk [vmem:[#allocation2 + $0x458] sm:$0xff] %vm424, 0.0
        %559 = vst [vmem:[#allocation2 + $0x460] sm:$0xff] 0.0
        %560 = vst [vmem:[#allocation2 + $0x468] sm:$0xff] 0.0
        %561 = vst [vmem:[#allocation2 + $0x470] sm:$0xff] 0.0
        %562 = vst [vmem:[#allocation2 + $0x478] sm:$0xff] 0.0
        %563 = vst [vmem:[#allocation2 + $0x480] sm:$0xff] 0.0
        %564 = vst [vmem:[#allocation2 + $0x488] sm:$0xff] 0.0
        %565 = vst.msk [vmem:[#allocation2 + $0x490] sm:$0xff] %vm424, 0.0
        %566 = vst [vmem:[#allocation2 + $0x498] sm:$0xff] 0.0
        %567 = vst [vmem:[#allocation2 + $0x4a0] sm:$0xff] 0.0
        %568 = vst [vmem:[#allocation2 + $0x4a8] sm:$0xff] 0.0
        %569 = vst [vmem:[#allocation2 + $0x4b0] sm:$0xff] 0.0
        %570 = vst [vmem:[#allocation2 + $0x4b8] sm:$0xff] 0.0
        %571 = vst [vmem:[#allocation2 + $0x4c0] sm:$0xff] 0.0
        %572 = vst.msk [vmem:[#allocation2 + $0x4c8] sm:$0xff] %vm424, 0.0
        %573 = vst [vmem:[#allocation2 + $0x4d0] sm:$0xff] 0.0
        %574 = vst [vmem:[#allocation2 + $0x4d8] sm:$0xff] 0.0
        %575 = vst [vmem:[#allocation2 + $0x4e0] sm:$0xff] 0.0
        %576 = vst [vmem:[#allocation2 + $0x4e8] sm:$0xff] 0.0
        %577 = vst [vmem:[#allocation2 + $0x4f0] sm:$0xff] 0.0
        %578 = vst [vmem:[#allocation2 + $0x4f8] sm:$0xff] 0.0
        %579 = vst.msk [vmem:[#allocation2 + $0x500] sm:$0xff] %vm424, 0.0
        %580 = vst [vmem:[#allocation2 + $0x508] sm:$0xff] 0.0
        %581 = vst [vmem:[#allocation2 + $0x510] sm:$0xff] 0.0
        %582 = vst [vmem:[#allocation2 + $0x518] sm:$0xff] 0.0
        %583 = vst [vmem:[#allocation2 + $0x520] sm:$0xff] 0.0
        %584 = vst [vmem:[#allocation2 + $0x528] sm:$0xff] 0.0
        %585 = vst [vmem:[#allocation2 + $0x530] sm:$0xff] 0.0
        %586 = vst.msk [vmem:[#allocation2 + $0x538] sm:$0xff] %vm424, 0.0
        %587 = vst [vmem:[#allocation2 + $0x540] sm:$0xff] 0.0
        %588 = vst [vmem:[#allocation2 + $0x548] sm:$0xff] 0.0
        %589 = vst [vmem:[#allocation2 + $0x550] sm:$0xff] 0.0
        %590 = vst [vmem:[#allocation2 + $0x558] sm:$0xff] 0.0
        %591 = vst [vmem:[#allocation2 + $0x560] sm:$0xff] 0.0
        %592 = vst [vmem:[#allocation2 + $0x568] sm:$0xff] 0.0
        %593 = vst.msk [vmem:[#allocation2 + $0x570] sm:$0xff] %vm424, 0.0
        %594 = vst [vmem:[#allocation3] sm:$0xff] 0.0
        %595 = vst [vmem:[#allocation3 + $0x8] sm:$0xff] 0.0
        %596 = vst [vmem:[#allocation3 + $0x10] sm:$0xff] 0.0
        %597 = vst [vmem:[#allocation3 + $0x18] sm:$0xff] 0.0
        %vm598 = vcmask 678912
        %599 = vst.msk [vmem:[#allocation3 + $0x20] sm:$0xff] %vm598, 0.0
        %600 = vst [vmem:[#allocation3 + $0x28] sm:$0xff] 0.0
        %601 = vst [vmem:[#allocation3 + $0x30] sm:$0xff] 0.0
        %602 = vst [vmem:[#allocation3 + $0x38] sm:$0xff] 0.0
        %603 = vst [vmem:[#allocation3 + $0x40] sm:$0xff] 0.0
        %604 = vst.msk [vmem:[#allocation3 + $0x48] sm:$0xff] %vm598, 0.0
        %605 = vst [vmem:[#allocation3 + $0x50] sm:$0xff] 0.0
        %606 = vst [vmem:[#allocation3 + $0x58] sm:$0xff] 0.0
        %607 = vst [vmem:[#allocation3 + $0x60] sm:$0xff] 0.0
        %608 = vst [vmem:[#allocation3 + $0x68] sm:$0xff] 0.0
        %609 = vst.msk [vmem:[#allocation3 + $0x70] sm:$0xff] %vm598, 0.0
        %610 = vst [vmem:[#allocation3 + $0x78] sm:$0xff] 0.0
        %611 = vst [vmem:[#allocation3 + $0x80] sm:$0xff] 0.0
        %612 = vst [vmem:[#allocation3 + $0x88] sm:$0xff] 0.0
        %613 = vst [vmem:[#allocation3 + $0x90] sm:$0xff] 0.0
        %614 = vst.msk [vmem:[#allocation3 + $0x98] sm:$0xff] %vm598, 0.0
        %615 = vst [vmem:[#allocation3 + $0xa0] sm:$0xff] 0.0
        %616 = vst [vmem:[#allocation3 + $0xa8] sm:$0xff] 0.0
        %617 = vst [vmem:[#allocation3 + $0xb0] sm:$0xff] 0.0
        %618 = vst [vmem:[#allocation3 + $0xb8] sm:$0xff] 0.0
        %619 = vst.msk [vmem:[#allocation3 + $0xc0] sm:$0xff] %vm598, 0.0
        %620 = vst [vmem:[#allocation3 + $0xc8] sm:$0xff] 0.0
        %621 = vst [vmem:[#allocation3 + $0xd0] sm:$0xff] 0.0
        %622 = vst [vmem:[#allocation3 + $0xd8] sm:$0xff] 0.0
        %623 = vst [vmem:[#allocation3 + $0xe0] sm:$0xff] 0.0
        %624 = vst.msk [vmem:[#allocation3 + $0xe8] sm:$0xff] %vm598, 0.0
        %625 = vst [vmem:[#allocation3 + $0xf0] sm:$0xff] 0.0
        %626 = vst [vmem:[#allocation3 + $0xf8] sm:$0xff] 0.0
        %627 = vst [vmem:[#allocation3 + $0x100] sm:$0xff] 0.0
        %628 = vst [vmem:[#allocation3 + $0x108] sm:$0xff] 0.0
        %629 = vst.msk [vmem:[#allocation3 + $0x110] sm:$0xff] %vm598, 0.0
        %630 = vst [vmem:[#allocation3 + $0x118] sm:$0xff] 0.0
        %631 = vst [vmem:[#allocation3 + $0x120] sm:$0xff] 0.0
        %632 = vst [vmem:[#allocation3 + $0x128] sm:$0xff] 0.0
        %633 = vst [vmem:[#allocation3 + $0x130] sm:$0xff] 0.0
        %634 = vst.msk [vmem:[#allocation3 + $0x138] sm:$0xff] %vm598, 0.0
        %635 = vst [vmem:[#allocation3 + $0x140] sm:$0xff] 0.0
        %636 = vst [vmem:[#allocation3 + $0x148] sm:$0xff] 0.0
        %637 = vst [vmem:[#allocation3 + $0x150] sm:$0xff] 0.0
        %638 = vst [vmem:[#allocation3 + $0x158] sm:$0xff] 0.0
        %639 = vst.msk [vmem:[#allocation3 + $0x160] sm:$0xff] %vm598, 0.0
        %640 = vst [vmem:[#allocation3 + $0x168] sm:$0xff] 0.0
        %641 = vst [vmem:[#allocation3 + $0x170] sm:$0xff] 0.0
        %642 = vst [vmem:[#allocation3 + $0x178] sm:$0xff] 0.0
        %643 = vst [vmem:[#allocation3 + $0x180] sm:$0xff] 0.0
        %644 = vst.msk [vmem:[#allocation3 + $0x188] sm:$0xff] %vm598, 0.0
        %645 = vst [vmem:[#allocation3 + $0x190] sm:$0xff] 0.0
        %646 = vst [vmem:[#allocation3 + $0x198] sm:$0xff] 0.0
        %647 = vst [vmem:[#allocation3 + $0x1a0] sm:$0xff] 0.0
        %648 = vst [vmem:[#allocation3 + $0x1a8] sm:$0xff] 0.0
        %649 = vst.msk [vmem:[#allocation3 + $0x1b0] sm:$0xff] %vm598, 0.0
        %650 = vst [vmem:[#allocation3 + $0x1b8] sm:$0xff] 0.0
        %651 = vst [vmem:[#allocation3 + $0x1c0] sm:$0xff] 0.0
        %652 = vst [vmem:[#allocation3 + $0x1c8] sm:$0xff] 0.0
        %653 = vst [vmem:[#allocation3 + $0x1d0] sm:$0xff] 0.0
        %654 = vst.msk [vmem:[#allocation3 + $0x1d8] sm:$0xff] %vm598, 0.0
        %655 = vst [vmem:[#allocation3 + $0x1e0] sm:$0xff] 0.0
        %656 = vst [vmem:[#allocation3 + $0x1e8] sm:$0xff] 0.0
        %657 = vst [vmem:[#allocation3 + $0x1f0] sm:$0xff] 0.0
        %658 = vst [vmem:[#allocation3 + $0x1f8] sm:$0xff] 0.0
        %659 = vst.msk [vmem:[#allocation3 + $0x200] sm:$0xff] %vm598, 0.0
        %660 = vst [vmem:[#allocation3 + $0x208] sm:$0xff] 0.0
        %661 = vst [vmem:[#allocation3 + $0x210] sm:$0xff] 0.0
        %662 = vst [vmem:[#allocation3 + $0x218] sm:$0xff] 0.0
        %663 = vst [vmem:[#allocation3 + $0x220] sm:$0xff] 0.0
        %664 = vst.msk [vmem:[#allocation3 + $0x228] sm:$0xff] %vm598, 0.0
        %665 = vst [vmem:[#allocation3 + $0x230] sm:$0xff] 0.0
        %666 = vst [vmem:[#allocation3 + $0x238] sm:$0xff] 0.0
        %667 = vst [vmem:[#allocation3 + $0x240] sm:$0xff] 0.0
        %668 = vst [vmem:[#allocation3 + $0x248] sm:$0xff] 0.0
        %669 = vst.msk [vmem:[#allocation3 + $0x250] sm:$0xff] %vm598, 0.0
        %670 = vst [vmem:[#allocation3 + $0x258] sm:$0xff] 0.0
        %671 = vst [vmem:[#allocation3 + $0x260] sm:$0xff] 0.0
        %672 = vst [vmem:[#allocation3 + $0x268] sm:$0xff] 0.0
        %673 = vst [vmem:[#allocation3 + $0x270] sm:$0xff] 0.0
        %674 = vst.msk [vmem:[#allocation3 + $0x278] sm:$0xff] %vm598, 0.0
        %675 = vst [vmem:[#allocation3 + $0x280] sm:$0xff] 0.0
        %676 = vst [vmem:[#allocation3 + $0x288] sm:$0xff] 0.0
        %677 = vst [vmem:[#allocation3 + $0x290] sm:$0xff] 0.0
        %678 = vst [vmem:[#allocation3 + $0x298] sm:$0xff] 0.0
        %679 = vst.msk [vmem:[#allocation3 + $0x2a0] sm:$0xff] %vm598, 0.0
        %680 = vst [vmem:[#allocation3 + $0x2a8] sm:$0xff] 0.0
        %681 = vst [vmem:[#allocation3 + $0x2b0] sm:$0xff] 0.0
        %682 = vst [vmem:[#allocation3 + $0x2b8] sm:$0xff] 0.0
        %683 = vst [vmem:[#allocation3 + $0x2c0] sm:$0xff] 0.0
        %684 = vst.msk [vmem:[#allocation3 + $0x2c8] sm:$0xff] %vm598, 0.0
        %685 = vst [vmem:[#allocation3 + $0x2d0] sm:$0xff] 0.0
        %686 = vst [vmem:[#allocation3 + $0x2d8] sm:$0xff] 0.0
        %687 = vst [vmem:[#allocation3 + $0x2e0] sm:$0xff] 0.0
        %688 = vst [vmem:[#allocation3 + $0x2e8] sm:$0xff] 0.0
        %689 = vst.msk [vmem:[#allocation3 + $0x2f0] sm:$0xff] %vm598, 0.0
        %690 = vst [vmem:[#allocation3 + $0x2f8] sm:$0xff] 0.0
        %691 = vst [vmem:[#allocation3 + $0x300] sm:$0xff] 0.0
        %692 = vst [vmem:[#allocation3 + $0x308] sm:$0xff] 0.0
        %693 = vst [vmem:[#allocation3 + $0x310] sm:$0xff] 0.0
        %694 = vst.msk [vmem:[#allocation3 + $0x318] sm:$0xff] %vm598, 0.0
        %695 = vst [vmem:[#allocation3 + $0x320] sm:$0xff] 0.0
        %696 = vst [vmem:[#allocation3 + $0x328] sm:$0xff] 0.0
        %697 = vst [vmem:[#allocation3 + $0x330] sm:$0xff] 0.0
        %698 = vst [vmem:[#allocation3 + $0x338] sm:$0xff] 0.0
        %699 = vst.msk [vmem:[#allocation3 + $0x340] sm:$0xff] %vm598, 0.0
        %700 = vst [vmem:[#allocation3 + $0x348] sm:$0xff] 0.0
        %701 = vst [vmem:[#allocation3 + $0x350] sm:$0xff] 0.0
        %702 = vst [vmem:[#allocation3 + $0x358] sm:$0xff] 0.0
        %703 = vst [vmem:[#allocation3 + $0x360] sm:$0xff] 0.0
        %704 = vst.msk [vmem:[#allocation3 + $0x368] sm:$0xff] %vm598, 0.0
        %705 = vst [vmem:[#allocation3 + $0x370] sm:$0xff] 0.0
        %706 = vst [vmem:[#allocation3 + $0x378] sm:$0xff] 0.0
        %707 = vst [vmem:[#allocation3 + $0x380] sm:$0xff] 0.0
        %708 = vst [vmem:[#allocation3 + $0x388] sm:$0xff] 0.0
        %709 = vst.msk [vmem:[#allocation3 + $0x390] sm:$0xff] %vm598, 0.0
        %710 = vst [vmem:[#allocation3 + $0x398] sm:$0xff] 0.0
        %711 = vst [vmem:[#allocation3 + $0x3a0] sm:$0xff] 0.0
        %712 = vst [vmem:[#allocation3 + $0x3a8] sm:$0xff] 0.0
        %713 = vst [vmem:[#allocation3 + $0x3b0] sm:$0xff] 0.0
        %714 = vst.msk [vmem:[#allocation3 + $0x3b8] sm:$0xff] %vm598, 0.0
        %715 = vst [vmem:[#allocation3 + $0x3c0] sm:$0xff] 0.0
        %716 = vst [vmem:[#allocation3 + $0x3c8] sm:$0xff] 0.0
        %717 = vst [vmem:[#allocation3 + $0x3d0] sm:$0xff] 0.0
        %718 = vst [vmem:[#allocation3 + $0x3d8] sm:$0xff] 0.0
        %719 = vst.msk [vmem:[#allocation3 + $0x3e0] sm:$0xff] %vm598, 0.0
        loop: start=0, step=1, limit=8
        $region69: #{net_forward.1} parent=67 // loop_pre_header
          _
        $region70: #{net_forward.1} parent=67 // loop_header
          %s721 = sphi 0, %s725
          %p722 = scmp.ge.s32.totalorder %s721, 8
        $region71: #{net_forward.1} parent=67 // loop_header_branch
          %724 = sbr.rel (%p722) target = $region75
        $region72: #{net_forward.1} parent=67 // loop_body
          %s726 = smul.u32 %s721, 8
          %s727 = smul.addr %s726, 4
          %s728 = scalar_lea.vmem %s415, %s727
          %v729 = vld [vmem:[%s728] sm:$0x77]
          %v730 = vld [vmem:[%s728 + $0x8] sm:$0x77]
          %v731 = vld [vmem:[%s728 + $0x10] sm:$0x77]
          %v732 = vld [vmem:[%s728 + $0x18] sm:$0x77]
          %v737 = vcombine.high %v729, %v729
          %v738 = vcombine.high %v730, %v730
          %v739 = vcombine.high %v731, %v731
          %743 = vst [vmem:[#allocation2] sm:$0x7] %v729
          %744 = vst [vmem:[#allocation2 + $0x8] sm:$0x7] %v737
          %745 = vst [vmem:[#allocation2 + $0x10] sm:$0x7] %v730
          %746 = vst [vmem:[#allocation2 + $0x18] sm:$0x7] %v738
          %747 = vst [vmem:[#allocation2 + $0x20] sm:$0x7] %v731
          %748 = vst [vmem:[#allocation2 + $0x28] sm:$0x7] %v739
          %vm749 = vcmask 1009664
          %750 = vst.msk [vmem:[#allocation2 + $0x30] sm:$0x7] %vm749, %v732
          %751 = vrot.lane.b32.xlu0 %v729, 127
          %v752 = vpop.permute.xlu0 %751
          %753 = vrot.lane.b32.xlu0 %v737, 127
          %v754 = vpop.permute.xlu0 %753
          %755 = vrot.lane.b32.xlu0 %v730, 127
          %v756 = vpop.permute.xlu0 %755
          %757 = vrot.lane.b32.xlu0 %v738, 127
          %v758 = vpop.permute.xlu0 %757
          %759 = vrot.lane.b32.xlu0 %v731, 127
          %v760 = vpop.permute.xlu0 %759
          %761 = vrot.lane.b32.xlu0 %v739, 127
          %v762 = vpop.permute.xlu0 %761
          %763 = vrot.lane.b32.xlu0 %v732, 127
          %v764 = vpop.permute.xlu0 %763
          %vm765 = vcmask 1039360
          %v766 = vsel %vm765, %v752, %v754
          %v767 = vsel %vm765, %v754, %v756
          %v768 = vsel %vm765, %v756, %v758
          %v769 = vsel %vm765, %v758, %v760
          %v770 = vsel %vm765, %v760, %v762
          %v771 = vsel %vm765, %v762, %v764
          %779 = vst [vmem:[#allocation2 + $0x38] sm:$0x7] %v766
          %780 = vst [vmem:[#allocation2 + $0x40] sm:$0x7] %v767
          %781 = vst [vmem:[#allocation2 + $0x48] sm:$0x7] %v768
          %782 = vst [vmem:[#allocation2 + $0x50] sm:$0x7] %v769
          %783 = vst [vmem:[#allocation2 + $0x58] sm:$0x7] %v770
          %784 = vst [vmem:[#allocation2 + $0x60] sm:$0x7] %v771
          %785 = vst.msk [vmem:[#allocation2 + $0x68] sm:$0x7] %vm749, %v764
          %786 = vrot.lane.b32.xlu0 %v729, 126
          %v787 = vpop.permute.xlu0 %786
          %788 = vrot.lane.b32.xlu0 %v737, 126
          %v789 = vpop.permute.xlu0 %788
          %790 = vrot.lane.b32.xlu0 %v730, 126
          %v791 = vpop.permute.xlu0 %790
          %792 = vrot.lane.b32.xlu0 %v738, 126
          %v793 = vpop.permute.xlu0 %792
          %794 = vrot.lane.b32.xlu0 %v731, 126
          %v795 = vpop.permute.xlu0 %794
          %796 = vrot.lane.b32.xlu0 %v739, 126
          %v797 = vpop.permute.xlu0 %796
          %798 = vrot.lane.b32.xlu0 %v732, 126
          %v799 = vpop.permute.xlu0 %798
          %vm800 = vcmask 1031168
          %v801 = vsel %vm800, %v787, %v789
          %v802 = vsel %vm800, %v789, %v791
          %v803 = vsel %vm800, %v791, %v793
          %v804 = vsel %vm800, %v793, %v795
          %v805 = vsel %vm800, %v795, %v797
          %v806 = vsel %vm800, %v797, %v799
          %814 = vst [vmem:[#allocation2 + $0x70] sm:$0x7] %v801
          %815 = vst [vmem:[#allocation2 + $0x78] sm:$0x7] %v802
          %816 = vst [vmem:[#allocation2 + $0x80] sm:$0x7] %v803
          %817 = vst [vmem:[#allocation2 + $0x88] sm:$0x7] %v804
          %818 = vst [vmem:[#allocation2 + $0x90] sm:$0x7] %v805
          %819 = vst [vmem:[#allocation2 + $0x98] sm:$0x7] %v806
          %820 = vst.msk [vmem:[#allocation2 + $0xa0] sm:$0x7] %vm749, %v799
          %821 = vrot.lane.b32.xlu0 %v729, 125
          %v822 = vpop.permute.xlu0 %821
          %823 = vrot.lane.b32.xlu0 %v737, 125
          %v824 = vpop.permute.xlu0 %823
          %825 = vrot.lane.b32.xlu0 %v730, 125
          %v826 = vpop.permute.xlu0 %825
          %827 = vrot.lane.b32.xlu0 %v738, 125
          %v828 = vpop.permute.xlu0 %827
          %829 = vrot.lane.b32.xlu0 %v731, 125
          %v830 = vpop.permute.xlu0 %829
          %831 = vrot.lane.b32.xlu0 %v739, 125
          %v832 = vpop.permute.xlu0 %831
          %833 = vrot.lane.b32.xlu0 %v732, 125
          %v834 = vpop.permute.xlu0 %833
          %vm835 = vcmask 1022976
          %v836 = vsel %vm835, %v822, %v824
          %v837 = vsel %vm835, %v824, %v826
          %v838 = vsel %vm835, %v826, %v828
          %v839 = vsel %vm835, %v828, %v830
          %v840 = vsel %vm835, %v830, %v832
          %v841 = vsel %vm835, %v832, %v834
          %849 = vst [vmem:[#allocation2 + $0xa8] sm:$0x7] %v836
          %850 = vst [vmem:[#allocation2 + $0xb0] sm:$0x7] %v837
          %851 = vst [vmem:[#allocation2 + $0xb8] sm:$0x7] %v838
          %852 = vst [vmem:[#allocation2 + $0xc0] sm:$0x7] %v839
          %853 = vst [vmem:[#allocation2 + $0xc8] sm:$0x7] %v840
          %854 = vst [vmem:[#allocation2 + $0xd0] sm:$0x7] %v841
          %855 = vst.msk [vmem:[#allocation2 + $0xd8] sm:$0x7] %vm749, %v834
          %856 = vrot.lane.b32.xlu0 %v729, 124
          %v857 = vpop.permute.xlu0 %856
          %858 = vrot.lane.b32.xlu0 %v737, 124
          %v859 = vpop.permute.xlu0 %858
          %860 = vrot.lane.b32.xlu0 %v730, 124
          %v861 = vpop.permute.xlu0 %860
          %862 = vrot.lane.b32.xlu0 %v738, 124
          %v863 = vpop.permute.xlu0 %862
          %864 = vrot.lane.b32.xlu0 %v731, 124
          %v865 = vpop.permute.xlu0 %864
          %866 = vrot.lane.b32.xlu0 %v739, 124
          %v867 = vpop.permute.xlu0 %866
          %868 = vrot.lane.b32.xlu0 %v732, 124
          %v869 = vpop.permute.xlu0 %868
          %v870 = vsel %vm424, %v857, %v859
          %v871 = vsel %vm424, %v859, %v861
          %v872 = vsel %vm424, %v861, %v863
          %v873 = vsel %vm424, %v863, %v865
          %v874 = vsel %vm424, %v865, %v867
          %v875 = vsel %vm424, %v867, %v869
          %883 = vst [vmem:[#allocation2 + $0xe0] sm:$0x7] %v870
          %884 = vst [vmem:[#allocation2 + $0xe8] sm:$0x7] %v871
          %885 = vst [vmem:[#allocation2 + $0xf0] sm:$0x7] %v872
          %886 = vst [vmem:[#allocation2 + $0xf8] sm:$0x7] %v873
          %887 = vst [vmem:[#allocation2 + $0x100] sm:$0x7] %v874
          %888 = vst [vmem:[#allocation2 + $0x108] sm:$0x7] %v875
          %889 = vst.msk [vmem:[#allocation2 + $0x110] sm:$0x7] %vm749, %v869
          %v890 = vcombine.high %v732, %v732
          %891 = vrot.lane.b32.xlu0 %v729, 96
          %v892 = vpop.permute.xlu0 %891
          %893 = vrot.lane.b32.xlu0 %v737, 96
          %v894 = vpop.permute.xlu0 %893
          %895 = vrot.lane.b32.xlu0 %v730, 96
          %v896 = vpop.permute.xlu0 %895
          %897 = vrot.lane.b32.xlu0 %v738, 96
          %v898 = vpop.permute.xlu0 %897
          %899 = vrot.lane.b32.xlu0 %v731, 96
          %v900 = vpop.permute.xlu0 %899
          %901 = vrot.lane.b32.xlu0 %v739, 96
          %v902 = vpop.permute.xlu0 %901
          %903 = vrot.lane.b32.xlu0 %v732, 96
          %v904 = vpop.permute.xlu0 %903
          %905 = vrot.lane.b32.xlu0 %v890, 96
          %v906 = vpop.permute.xlu0 %905
          %vm907 = vcmask 785408
          %v908 = vsel %vm907, %v892, %v894
          %v909 = vsel %vm907, %v894, %v896
          %v910 = vsel %vm907, %v896, %v898
          %v911 = vsel %vm907, %v898, %v900
          %v912 = vsel %vm907, %v900, %v902
          %v913 = vsel %vm907, %v902, %v904
          %v914 = vsel %vm907, %v904, %v906
          %922 = vst [vmem:[#allocation2 + $0x118] sm:$0x7] %v908
          %923 = vst [vmem:[#allocation2 + $0x120] sm:$0x7] %v909
          %924 = vst [vmem:[#allocation2 + $0x128] sm:$0x7] %v910
          %925 = vst [vmem:[#allocation2 + $0x130] sm:$0x7] %v911
          %926 = vst [vmem:[#allocation2 + $0x138] sm:$0x7] %v912
          %927 = vst [vmem:[#allocation2 + $0x140] sm:$0x7] %v913
          %928 = vst.msk [vmem:[#allocation2 + $0x148] sm:$0x7] %vm749, %v914
          %929 = vrot.lane.b32.xlu0 %v729, 95
          %v930 = vpop.permute.xlu0 %929
          %931 = vrot.lane.b32.xlu0 %v737, 95
          %v932 = vpop.permute.xlu0 %931
          %933 = vrot.lane.b32.xlu0 %v730, 95
          %v934 = vpop.permute.xlu0 %933
          %935 = vrot.lane.b32.xlu0 %v738, 95
          %v936 = vpop.permute.xlu0 %935
          %937 = vrot.lane.b32.xlu0 %v731, 95
          %v938 = vpop.permute.xlu0 %937
          %939 = vrot.lane.b32.xlu0 %v739, 95
          %v940 = vpop.permute.xlu0 %939
          %941 = vrot.lane.b32.xlu0 %v732, 95
          %v942 = vpop.permute.xlu0 %941
          %943 = vrot.lane.b32.xlu0 %v890, 95
          %v944 = vpop.permute.xlu0 %943
          %vm945 = vcmask 777216
          %v946 = vsel %vm945, %v930, %v932
          %v947 = vsel %vm945, %v932, %v934
          %v948 = vsel %vm945, %v934, %v936
          %v949 = vsel %vm945, %v936, %v938
          %v950 = vsel %vm945, %v938, %v940
          %v951 = vsel %vm945, %v940, %v942
          %v952 = vsel %vm945, %v942, %v944
          %960 = vst [vmem:[#allocation2 + $0x150] sm:$0x7] %v946
          %961 = vst [vmem:[#allocation2 + $0x158] sm:$0x7] %v947
          %962 = vst [vmem:[#allocation2 + $0x160] sm:$0x7] %v948
          %963 = vst [vmem:[#allocation2 + $0x168] sm:$0x7] %v949
          %964 = vst [vmem:[#allocation2 + $0x170] sm:$0x7] %v950
          %965 = vst [vmem:[#allocation2 + $0x178] sm:$0x7] %v951
          %966 = vst.msk [vmem:[#allocation2 + $0x180] sm:$0x7] %vm749, %v952
          %967 = vrot.lane.b32.xlu0 %v729, 94
          %v968 = vpop.permute.xlu0 %967
          %969 = vrot.lane.b32.xlu0 %v737, 94
          %v970 = vpop.permute.xlu0 %969
          %971 = vrot.lane.b32.xlu0 %v730, 94
          %v972 = vpop.permute.xlu0 %971
          %973 = vrot.lane.b32.xlu0 %v738, 94
          %v974 = vpop.permute.xlu0 %973
          %975 = vrot.lane.b32.xlu0 %v731, 94
          %v976 = vpop.permute.xlu0 %975
          %977 = vrot.lane.b32.xlu0 %v739, 94
          %v978 = vpop.permute.xlu0 %977
          %979 = vrot.lane.b32.xlu0 %v732, 94
          %v980 = vpop.permute.xlu0 %979
          %981 = vrot.lane.b32.xlu0 %v890, 94
          %v982 = vpop.permute.xlu0 %981
          %vm983 = vcmask 769024
          %v984 = vsel %vm983, %v968, %v970
          %v985 = vsel %vm983, %v970, %v972
          %v986 = vsel %vm983, %v972, %v974
          %v987 = vsel %vm983, %v974, %v976
          %v988 = vsel %vm983, %v976, %v978
          %v989 = vsel %vm983, %v978, %v980
          %v990 = vsel %vm983, %v980, %v982
          %998 = vst [vmem:[#allocation2 + $0x188] sm:$0x7] %v984
          %999 = vst [vmem:[#allocation2 + $0x190] sm:$0x7] %v985
          %1000 = vst [vmem:[#allocation2 + $0x198] sm:$0x7] %v986
          %1001 = vst [vmem:[#allocation2 + $0x1a0] sm:$0x7] %v987
          %1002 = vst [vmem:[#allocation2 + $0x1a8] sm:$0x7] %v988
          %1003 = vst [vmem:[#allocation2 + $0x1b0] sm:$0x7] %v989
          %1004 = vst.msk [vmem:[#allocation2 + $0x1b8] sm:$0x7] %vm749, %v990
          %1005 = vrot.lane.b32.xlu0 %v729, 93
          %v1006 = vpop.permute.xlu0 %1005
          %1007 = vrot.lane.b32.xlu0 %v737, 93
          %v1008 = vpop.permute.xlu0 %1007
          %1009 = vrot.lane.b32.xlu0 %v730, 93
          %v1010 = vpop.permute.xlu0 %1009
          %1011 = vrot.lane.b32.xlu0 %v738, 93
          %v1012 = vpop.permute.xlu0 %1011
          %1013 = vrot.lane.b32.xlu0 %v731, 93
          %v1014 = vpop.permute.xlu0 %1013
          %1015 = vrot.lane.b32.xlu0 %v739, 93
          %v1016 = vpop.permute.xlu0 %1015
          %1017 = vrot.lane.b32.xlu0 %v732, 93
          %v1018 = vpop.permute.xlu0 %1017
          %1019 = vrot.lane.b32.xlu0 %v890, 93
          %v1020 = vpop.permute.xlu0 %1019
          %vm1021 = vcmask 760832
          %v1022 = vsel %vm1021, %v1006, %v1008
          %v1023 = vsel %vm1021, %v1008, %v1010
          %v1024 = vsel %vm1021, %v1010, %v1012
          %v1025 = vsel %vm1021, %v1012, %v1014
          %v1026 = vsel %vm1021, %v1014, %v1016
          %v1027 = vsel %vm1021, %v1016, %v1018
          %v1028 = vsel %vm1021, %v1018, %v1020
          %1036 = vst [vmem:[#allocation2 + $0x1c0] sm:$0x7] %v1022
          %1037 = vst [vmem:[#allocation2 + $0x1c8] sm:$0x7] %v1023
          %1038 = vst [vmem:[#allocation2 + $0x1d0] sm:$0x7] %v1024
          %1039 = vst [vmem:[#allocation2 + $0x1d8] sm:$0x7] %v1025
          %1040 = vst [vmem:[#allocation2 + $0x1e0] sm:$0x7] %v1026
          %1041 = vst [vmem:[#allocation2 + $0x1e8] sm:$0x7] %v1027
          %1042 = vst.msk [vmem:[#allocation2 + $0x1f0] sm:$0x7] %vm749, %v1028
          %1043 = vrot.lane.b32.xlu0 %v729, 92
          %v1044 = vpop.permute.xlu0 %1043
          %1045 = vrot.lane.b32.xlu0 %v737, 92
          %v1046 = vpop.permute.xlu0 %1045
          %1047 = vrot.lane.b32.xlu0 %v730, 92
          %v1048 = vpop.permute.xlu0 %1047
          %1049 = vrot.lane.b32.xlu0 %v738, 92
          %v1050 = vpop.permute.xlu0 %1049
          %1051 = vrot.lane.b32.xlu0 %v731, 92
          %v1052 = vpop.permute.xlu0 %1051
          %1053 = vrot.lane.b32.xlu0 %v739, 92
          %v1054 = vpop.permute.xlu0 %1053
          %1055 = vrot.lane.b32.xlu0 %v732, 92
          %v1056 = vpop.permute.xlu0 %1055
          %1057 = vrot.lane.b32.xlu0 %v890, 92
          %v1058 = vpop.permute.xlu0 %1057
          %vm1059 = vcmask 752640
          %v1060 = vsel %vm1059, %v1044, %v1046
          %v1061 = vsel %vm1059, %v1046, %v1048
          %v1062 = vsel %vm1059, %v1048, %v1050
          %v1063 = vsel %vm1059, %v1050, %v1052
          %v1064 = vsel %vm1059, %v1052, %v1054
          %v1065 = vsel %vm1059, %v1054, %v1056
          %v1066 = vsel %vm1059, %v1056, %v1058
          %1074 = vst [vmem:[#allocation2 + $0x1f8] sm:$0x7] %v1060
          %1075 = vst [vmem:[#allocation2 + $0x200] sm:$0x7] %v1061
          %1076 = vst [vmem:[#allocation2 + $0x208] sm:$0x7] %v1062
          %1077 = vst [vmem:[#allocation2 + $0x210] sm:$0x7] %v1063
          %1078 = vst [vmem:[#allocation2 + $0x218] sm:$0x7] %v1064
          %1079 = vst [vmem:[#allocation2 + $0x220] sm:$0x7] %v1065
          %1080 = vst.msk [vmem:[#allocation2 + $0x228] sm:$0x7] %vm749, %v1066
          %1081 = vrot.lane.b32.xlu0 %v729, 64
          %v1082 = vpop.permute.xlu0 %1081
          %1083 = vrot.lane.b32.xlu0 %v737, 64
          %v1084 = vpop.permute.xlu0 %1083
          %1085 = vrot.lane.b32.xlu0 %v730, 64
          %v1086 = vpop.permute.xlu0 %1085
          %1087 = vrot.lane.b32.xlu0 %v738, 64
          %v1088 = vpop.permute.xlu0 %1087
          %1089 = vrot.lane.b32.xlu0 %v731, 64
          %v1090 = vpop.permute.xlu0 %1089
          %1091 = vrot.lane.b32.xlu0 %v739, 64
          %v1092 = vpop.permute.xlu0 %1091
          %1093 = vrot.lane.b32.xlu0 %v732, 64
          %v1094 = vpop.permute.xlu0 %1093
          %1095 = vrot.lane.b32.xlu0 %v890, 64
          %v1096 = vpop.permute.xlu0 %1095
          %vm1097 = vcmask 523264
          %v1098 = vsel %vm1097, %v1082, %v1084
          %v1099 = vsel %vm1097, %v1084, %v1086
          %v1100 = vsel %vm1097, %v1086, %v1088
          %v1101 = vsel %vm1097, %v1088, %v1090
          %v1102 = vsel %vm1097, %v1090, %v1092
          %v1103 = vsel %vm1097, %v1092, %v1094
          %v1104 = vsel %vm1097, %v1094, %v1096
          %1112 = vst [vmem:[#allocation2 + $0x230] sm:$0x7] %v1098
          %1113 = vst [vmem:[#allocation2 + $0x238] sm:$0x7] %v1099
          %1114 = vst [vmem:[#allocation2 + $0x240] sm:$0x7] %v1100
          %1115 = vst [vmem:[#allocation2 + $0x248] sm:$0x7] %v1101
          %1116 = vst [vmem:[#allocation2 + $0x250] sm:$0x7] %v1102
          %1117 = vst [vmem:[#allocation2 + $0x258] sm:$0x7] %v1103
          %1118 = vst.msk [vmem:[#allocation2 + $0x260] sm:$0x7] %vm749, %v1104
          %1119 = vrot.lane.b32.xlu0 %v729, 63
          %v1120 = vpop.permute.xlu0 %1119
          %1121 = vrot.lane.b32.xlu0 %v737, 63
          %v1122 = vpop.permute.xlu0 %1121
          %1123 = vrot.lane.b32.xlu0 %v730, 63
          %v1124 = vpop.permute.xlu0 %1123
          %1125 = vrot.lane.b32.xlu0 %v738, 63
          %v1126 = vpop.permute.xlu0 %1125
          %1127 = vrot.lane.b32.xlu0 %v731, 63
          %v1128 = vpop.permute.xlu0 %1127
          %1129 = vrot.lane.b32.xlu0 %v739, 63
          %v1130 = vpop.permute.xlu0 %1129
          %1131 = vrot.lane.b32.xlu0 %v732, 63
          %v1132 = vpop.permute.xlu0 %1131
          %1133 = vrot.lane.b32.xlu0 %v890, 63
          %v1134 = vpop.permute.xlu0 %1133
          %vm1135 = vcmask 515072
          %v1136 = vsel %vm1135, %v1120, %v1122
          %v1137 = vsel %vm1135, %v1122, %v1124
          %v1138 = vsel %vm1135, %v1124, %v1126
          %v1139 = vsel %vm1135, %v1126, %v1128
          %v1140 = vsel %vm1135, %v1128, %v1130
          %v1141 = vsel %vm1135, %v1130, %v1132
          %v1142 = vsel %vm1135, %v1132, %v1134
          %1150 = vst [vmem:[#allocation2 + $0x268] sm:$0x7] %v1136
          %1151 = vst [vmem:[#allocation2 + $0x270] sm:$0x7] %v1137
          %1152 = vst [vmem:[#allocation2 + $0x278] sm:$0x7] %v1138
          %1153 = vst [vmem:[#allocation2 + $0x280] sm:$0x7] %v1139
          %1154 = vst [vmem:[#allocation2 + $0x288] sm:$0x7] %v1140
          %1155 = vst [vmem:[#allocation2 + $0x290] sm:$0x7] %v1141
          %1156 = vst.msk [vmem:[#allocation2 + $0x298] sm:$0x7] %vm749, %v1142
          %1157 = vrot.lane.b32.xlu0 %v729, 62
          %v1158 = vpop.permute.xlu0 %1157
          %1159 = vrot.lane.b32.xlu0 %v737, 62
          %v1160 = vpop.permute.xlu0 %1159
          %1161 = vrot.lane.b32.xlu0 %v730, 62
          %v1162 = vpop.permute.xlu0 %1161
          %1163 = vrot.lane.b32.xlu0 %v738, 62
          %v1164 = vpop.permute.xlu0 %1163
          %1165 = vrot.lane.b32.xlu0 %v731, 62
          %v1166 = vpop.permute.xlu0 %1165
          %1167 = vrot.lane.b32.xlu0 %v739, 62
          %v1168 = vpop.permute.xlu0 %1167
          %1169 = vrot.lane.b32.xlu0 %v732, 62
          %v1170 = vpop.permute.xlu0 %1169
          %1171 = vrot.lane.b32.xlu0 %v890, 62
          %v1172 = vpop.permute.xlu0 %1171
          %vm1173 = vcmask 506880
          %v1174 = vsel %vm1173, %v1158, %v1160
          %v1175 = vsel %vm1173, %v1160, %v1162
          %v1176 = vsel %vm1173, %v1162, %v1164
          %v1177 = vsel %vm1173, %v1164, %v1166
          %v1178 = vsel %vm1173, %v1166, %v1168
          %v1179 = vsel %vm1173, %v1168, %v1170
          %v1180 = vsel %vm1173, %v1170, %v1172
          %1188 = vst [vmem:[#allocation2 + $0x2a0] sm:$0x7] %v1174
          %1189 = vst [vmem:[#allocation2 + $0x2a8] sm:$0x7] %v1175
          %1190 = vst [vmem:[#allocation2 + $0x2b0] sm:$0x7] %v1176
          %1191 = vst [vmem:[#allocation2 + $0x2b8] sm:$0x7] %v1177
          %1192 = vst [vmem:[#allocation2 + $0x2c0] sm:$0x7] %v1178
          %1193 = vst [vmem:[#allocation2 + $0x2c8] sm:$0x7] %v1179
          %1194 = vst.msk [vmem:[#allocation2 + $0x2d0] sm:$0x7] %vm749, %v1180
          %1195 = vrot.lane.b32.xlu0 %v729, 61
          %v1196 = vpop.permute.xlu0 %1195
          %1197 = vrot.lane.b32.xlu0 %v737, 61
          %v1198 = vpop.permute.xlu0 %1197
          %1199 = vrot.lane.b32.xlu0 %v730, 61
          %v1200 = vpop.permute.xlu0 %1199
          %1201 = vrot.lane.b32.xlu0 %v738, 61
          %v1202 = vpop.permute.xlu0 %1201
          %1203 = vrot.lane.b32.xlu0 %v731, 61
          %v1204 = vpop.permute.xlu0 %1203
          %1205 = vrot.lane.b32.xlu0 %v739, 61
          %v1206 = vpop.permute.xlu0 %1205
          %1207 = vrot.lane.b32.xlu0 %v732, 61
          %v1208 = vpop.permute.xlu0 %1207
          %1209 = vrot.lane.b32.xlu0 %v890, 61
          %v1210 = vpop.permute.xlu0 %1209
          %vm1211 = vcmask 498688
          %v1212 = vsel %vm1211, %v1196, %v1198
          %v1213 = vsel %vm1211, %v1198, %v1200
          %v1214 = vsel %vm1211, %v1200, %v1202
          %v1215 = vsel %vm1211, %v1202, %v1204
          %v1216 = vsel %vm1211, %v1204, %v1206
          %v1217 = vsel %vm1211, %v1206, %v1208
          %v1218 = vsel %vm1211, %v1208, %v1210
          %1226 = vst [vmem:[#allocation2 + $0x2d8] sm:$0x7] %v1212
          %1227 = vst [vmem:[#allocation2 + $0x2e0] sm:$0x7] %v1213
          %1228 = vst [vmem:[#allocation2 + $0x2e8] sm:$0x7] %v1214
          %1229 = vst [vmem:[#allocation2 + $0x2f0] sm:$0x7] %v1215
          %1230 = vst [vmem:[#allocation2 + $0x2f8] sm:$0x7] %v1216
          %1231 = vst [vmem:[#allocation2 + $0x300] sm:$0x7] %v1217
          %1232 = vst.msk [vmem:[#allocation2 + $0x308] sm:$0x7] %vm749, %v1218
          %1233 = vrot.lane.b32.xlu0 %v729, 60
          %v1234 = vpop.permute.xlu0 %1233
          %1235 = vrot.lane.b32.xlu0 %v737, 60
          %v1236 = vpop.permute.xlu0 %1235
          %1237 = vrot.lane.b32.xlu0 %v730, 60
          %v1238 = vpop.permute.xlu0 %1237
          %1239 = vrot.lane.b32.xlu0 %v738, 60
          %v1240 = vpop.permute.xlu0 %1239
          %1241 = vrot.lane.b32.xlu0 %v731, 60
          %v1242 = vpop.permute.xlu0 %1241
          %1243 = vrot.lane.b32.xlu0 %v739, 60
          %v1244 = vpop.permute.xlu0 %1243
          %1245 = vrot.lane.b32.xlu0 %v732, 60
          %v1246 = vpop.permute.xlu0 %1245
          %1247 = vrot.lane.b32.xlu0 %v890, 60
          %v1248 = vpop.permute.xlu0 %1247
          %vm1249 = vcmask 490496
          %v1250 = vsel %vm1249, %v1234, %v1236
          %v1251 = vsel %vm1249, %v1236, %v1238
          %v1252 = vsel %vm1249, %v1238, %v1240
          %v1253 = vsel %vm1249, %v1240, %v1242
          %v1254 = vsel %vm1249, %v1242, %v1244
          %v1255 = vsel %vm1249, %v1244, %v1246
          %v1256 = vsel %vm1249, %v1246, %v1248
          %1264 = vst [vmem:[#allocation2 + $0x310] sm:$0x7] %v1250
          %1265 = vst [vmem:[#allocation2 + $0x318] sm:$0x7] %v1251
          %1266 = vst [vmem:[#allocation2 + $0x320] sm:$0x7] %v1252
          %1267 = vst [vmem:[#allocation2 + $0x328] sm:$0x7] %v1253
          %1268 = vst [vmem:[#allocation2 + $0x330] sm:$0x7] %v1254
          %1269 = vst [vmem:[#allocation2 + $0x338] sm:$0x7] %v1255
          %1270 = vst.msk [vmem:[#allocation2 + $0x340] sm:$0x7] %vm749, %v1256
          %1271 = vrot.lane.b32.xlu0 %v729, 32
          %v1272 = vpop.permute.xlu0 %1271
          %1273 = vrot.lane.b32.xlu0 %v737, 32
          %v1274 = vpop.permute.xlu0 %1273
          %1275 = vrot.lane.b32.xlu0 %v730, 32
          %v1276 = vpop.permute.xlu0 %1275
          %1277 = vrot.lane.b32.xlu0 %v738, 32
          %v1278 = vpop.permute.xlu0 %1277
          %1279 = vrot.lane.b32.xlu0 %v731, 32
          %v1280 = vpop.permute.xlu0 %1279
          %1281 = vrot.lane.b32.xlu0 %v739, 32
          %v1282 = vpop.permute.xlu0 %1281
          %1283 = vrot.lane.b32.xlu0 %v732, 32
          %v1284 = vpop.permute.xlu0 %1283
          %1285 = vrot.lane.b32.xlu0 %v890, 32
          %v1286 = vpop.permute.xlu0 %1285
          %vm1287 = vcmask 261120
          %v1288 = vsel %vm1287, %v1272, %v1274
          %v1289 = vsel %vm1287, %v1274, %v1276
          %v1290 = vsel %vm1287, %v1276, %v1278
          %v1291 = vsel %vm1287, %v1278, %v1280
          %v1292 = vsel %vm1287, %v1280, %v1282
          %v1293 = vsel %vm1287, %v1282, %v1284
          %v1294 = vsel %vm1287, %v1284, %v1286
          %1302 = vst [vmem:[#allocation2 + $0x348] sm:$0x7] %v1288
          %1303 = vst [vmem:[#allocation2 + $0x350] sm:$0x7] %v1289
          %1304 = vst [vmem:[#allocation2 + $0x358] sm:$0x7] %v1290
          %1305 = vst [vmem:[#allocation2 + $0x360] sm:$0x7] %v1291
          %1306 = vst [vmem:[#allocation2 + $0x368] sm:$0x7] %v1292
          %1307 = vst [vmem:[#allocation2 + $0x370] sm:$0x7] %v1293
          %1308 = vst.msk [vmem:[#allocation2 + $0x378] sm:$0x7] %vm749, %v1294
          %1309 = vrot.lane.b32.xlu0 %v729, 31
          %v1310 = vpop.permute.xlu0 %1309
          %1311 = vrot.lane.b32.xlu0 %v737, 31
          %v1312 = vpop.permute.xlu0 %1311
          %1313 = vrot.lane.b32.xlu0 %v730, 31
          %v1314 = vpop.permute.xlu0 %1313
          %1315 = vrot.lane.b32.xlu0 %v738, 31
          %v1316 = vpop.permute.xlu0 %1315
          %1317 = vrot.lane.b32.xlu0 %v731, 31
          %v1318 = vpop.permute.xlu0 %1317
          %1319 = vrot.lane.b32.xlu0 %v739, 31
          %v1320 = vpop.permute.xlu0 %1319
          %1321 = vrot.lane.b32.xlu0 %v732, 31
          %v1322 = vpop.permute.xlu0 %1321
          %1323 = vrot.lane.b32.xlu0 %v890, 31
          %v1324 = vpop.permute.xlu0 %1323
          %vm1325 = vcmask 252928
          %v1326 = vsel %vm1325, %v1310, %v1312
          %v1327 = vsel %vm1325, %v1312, %v1314
          %v1328 = vsel %vm1325, %v1314, %v1316
          %v1329 = vsel %vm1325, %v1316, %v1318
          %v1330 = vsel %vm1325, %v1318, %v1320
          %v1331 = vsel %vm1325, %v1320, %v1322
          %v1332 = vsel %vm1325, %v1322, %v1324
          %1340 = vst [vmem:[#allocation2 + $0x380] sm:$0x7] %v1326
          %1341 = vst [vmem:[#allocation2 + $0x388] sm:$0x7] %v1327
          %1342 = vst [vmem:[#allocation2 + $0x390] sm:$0x7] %v1328
          %1343 = vst [vmem:[#allocation2 + $0x398] sm:$0x7] %v1329
          %1344 = vst [vmem:[#allocation2 + $0x3a0] sm:$0x7] %v1330
          %1345 = vst [vmem:[#allocation2 + $0x3a8] sm:$0x7] %v1331
          %1346 = vst.msk [vmem:[#allocation2 + $0x3b0] sm:$0x7] %vm749, %v1332
          %1347 = vrot.lane.b32.xlu0 %v729, 30
          %v1348 = vpop.permute.xlu0 %1347
          %1349 = vrot.lane.b32.xlu0 %v737, 30
          %v1350 = vpop.permute.xlu0 %1349
          %1351 = vrot.lane.b32.xlu0 %v730, 30
          %v1352 = vpop.permute.xlu0 %1351
          %1353 = vrot.lane.b32.xlu0 %v738, 30
          %v1354 = vpop.permute.xlu0 %1353
          %1355 = vrot.lane.b32.xlu0 %v731, 30
          %v1356 = vpop.permute.xlu0 %1355
          %1357 = vrot.lane.b32.xlu0 %v739, 30
          %v1358 = vpop.permute.xlu0 %1357
          %1359 = vrot.lane.b32.xlu0 %v732, 30
          %v1360 = vpop.permute.xlu0 %1359
          %1361 = vrot.lane.b32.xlu0 %v890, 30
          %v1362 = vpop.permute.xlu0 %1361
          %vm1363 = vcmask 244736
          %v1364 = vsel %vm1363, %v1348, %v1350
          %v1365 = vsel %vm1363, %v1350, %v1352
          %v1366 = vsel %vm1363, %v1352, %v1354
          %v1367 = vsel %vm1363, %v1354, %v1356
          %v1368 = vsel %vm1363, %v1356, %v1358
          %v1369 = vsel %vm1363, %v1358, %v1360
          %v1370 = vsel %vm1363, %v1360, %v1362
          %1378 = vst [vmem:[#allocation2 + $0x3b8] sm:$0x7] %v1364
          %1379 = vst [vmem:[#allocation2 + $0x3c0] sm:$0x7] %v1365
          %1380 = vst [vmem:[#allocation2 + $0x3c8] sm:$0x7] %v1366
          %1381 = vst [vmem:[#allocation2 + $0x3d0] sm:$0x7] %v1367
          %1382 = vst [vmem:[#allocation2 + $0x3d8] sm:$0x7] %v1368
          %1383 = vst [vmem:[#allocation2 + $0x3e0] sm:$0x7] %v1369
          %1384 = vst.msk [vmem:[#allocation2 + $0x3e8] sm:$0x7] %vm749, %v1370
          %1385 = vrot.lane.b32.xlu0 %v729, 29
          %v1386 = vpop.permute.xlu0 %1385
          %1387 = vrot.lane.b32.xlu0 %v737, 29
          %v1388 = vpop.permute.xlu0 %1387
          %1389 = vrot.lane.b32.xlu0 %v730, 29
          %v1390 = vpop.permute.xlu0 %1389
          %1391 = vrot.lane.b32.xlu0 %v738, 29
          %v1392 = vpop.permute.xlu0 %1391
          %1393 = vrot.lane.b32.xlu0 %v731, 29
          %v1394 = vpop.permute.xlu0 %1393
          %1395 = vrot.lane.b32.xlu0 %v739, 29
          %v1396 = vpop.permute.xlu0 %1395
          %1397 = vrot.lane.b32.xlu0 %v732, 29
          %v1398 = vpop.permute.xlu0 %1397
          %1399 = vrot.lane.b32.xlu0 %v890, 29
          %v1400 = vpop.permute.xlu0 %1399
          %vm1401 = vcmask 236544
          %v1402 = vsel %vm1401, %v1386, %v1388
          %v1403 = vsel %vm1401, %v1388, %v1390
          %v1404 = vsel %vm1401, %v1390, %v1392
          %v1405 = vsel %vm1401, %v1392, %v1394
          %v1406 = vsel %vm1401, %v1394, %v1396
          %v1407 = vsel %vm1401, %v1396, %v1398
          %v1408 = vsel %vm1401, %v1398, %v1400
          %1416 = vst [vmem:[#allocation2 + $0x3f0] sm:$0x7] %v1402
          %1417 = vst [vmem:[#allocation2 + $0x3f8] sm:$0x7] %v1403
          %1418 = vst [vmem:[#allocation2 + $0x400] sm:$0x7] %v1404
          %1419 = vst [vmem:[#allocation2 + $0x408] sm:$0x7] %v1405
          %1420 = vst [vmem:[#allocation2 + $0x410] sm:$0x7] %v1406
          %1421 = vst [vmem:[#allocation2 + $0x418] sm:$0x7] %v1407
          %1422 = vst.msk [vmem:[#allocation2 + $0x420] sm:$0x7] %vm749, %v1408
          %1423 = vrot.lane.b32.xlu0 %v729, 28
          %v1424 = vpop.permute.xlu0 %1423
          %1425 = vrot.lane.b32.xlu0 %v737, 28
          %v1426 = vpop.permute.xlu0 %1425
          %1427 = vrot.lane.b32.xlu0 %v730, 28
          %v1428 = vpop.permute.xlu0 %1427
          %1429 = vrot.lane.b32.xlu0 %v738, 28
          %v1430 = vpop.permute.xlu0 %1429
          %1431 = vrot.lane.b32.xlu0 %v731, 28
          %v1432 = vpop.permute.xlu0 %1431
          %1433 = vrot.lane.b32.xlu0 %v739, 28
          %v1434 = vpop.permute.xlu0 %1433
          %1435 = vrot.lane.b32.xlu0 %v732, 28
          %v1436 = vpop.permute.xlu0 %1435
          %1437 = vrot.lane.b32.xlu0 %v890, 28
          %v1438 = vpop.permute.xlu0 %1437
          %vm1439 = vcmask 228352
          %v1440 = vsel %vm1439, %v1424, %v1426
          %v1441 = vsel %vm1439, %v1426, %v1428
          %v1442 = vsel %vm1439, %v1428, %v1430
          %v1443 = vsel %vm1439, %v1430, %v1432
          %v1444 = vsel %vm1439, %v1432, %v1434
          %v1445 = vsel %vm1439, %v1434, %v1436
          %v1446 = vsel %vm1439, %v1436, %v1438
          %1454 = vst [vmem:[#allocation2 + $0x428] sm:$0x7] %v1440
          %1455 = vst [vmem:[#allocation2 + $0x430] sm:$0x7] %v1441
          %1456 = vst [vmem:[#allocation2 + $0x438] sm:$0x7] %v1442
          %1457 = vst [vmem:[#allocation2 + $0x440] sm:$0x7] %v1443
          %1458 = vst [vmem:[#allocation2 + $0x448] sm:$0x7] %v1444
          %1459 = vst [vmem:[#allocation2 + $0x450] sm:$0x7] %v1445
          %1460 = vst.msk [vmem:[#allocation2 + $0x458] sm:$0x7] %vm749, %v1446
          %1462 = vst [vmem:[#allocation2 + $0x460] sm:$0x7] %v737
          %1463 = vst [vmem:[#allocation2 + $0x468] sm:$0x7] %v730
          %1464 = vst [vmem:[#allocation2 + $0x470] sm:$0x7] %v738
          %1465 = vst [vmem:[#allocation2 + $0x478] sm:$0x7] %v731
          %1466 = vst [vmem:[#allocation2 + $0x480] sm:$0x7] %v739
          %1467 = vst [vmem:[#allocation2 + $0x488] sm:$0x7] %v732
          %1468 = vst.msk [vmem:[#allocation2 + $0x490] sm:$0x7] %vm749, %v890
          %1469 = vrot.lane.b32.xlu0 %v890, 127
          %v1470 = vpop.permute.xlu0 %1469
          %v1471 = vsel %vm765, %v764, %v1470
          %1474 = vst [vmem:[#allocation2 + $0x498] sm:$0x7] %v767
          %1475 = vst [vmem:[#allocation2 + $0x4a0] sm:$0x7] %v768
          %1476 = vst [vmem:[#allocation2 + $0x4a8] sm:$0x7] %v769
          %1477 = vst [vmem:[#allocation2 + $0x4b0] sm:$0x7] %v770
          %1478 = vst [vmem:[#allocation2 + $0x4b8] sm:$0x7] %v771
          %1479 = vst [vmem:[#allocation2 + $0x4c0] sm:$0x7] %v1471
          %1480 = vst.msk [vmem:[#allocation2 + $0x4c8] sm:$0x7] %vm749, %v1470
          %1481 = vrot.lane.b32.xlu0 %v890, 126
          %v1482 = vpop.permute.xlu0 %1481
          %v1483 = vsel %vm800, %v799, %v1482
          %1486 = vst [vmem:[#allocation2 + $0x4d0] sm:$0x7] %v802
          %1487 = vst [vmem:[#allocation2 + $0x4d8] sm:$0x7] %v803
          %1488 = vst [vmem:[#allocation2 + $0x4e0] sm:$0x7] %v804
          %1489 = vst [vmem:[#allocation2 + $0x4e8] sm:$0x7] %v805
          %1490 = vst [vmem:[#allocation2 + $0x4f0] sm:$0x7] %v806
          %1491 = vst [vmem:[#allocation2 + $0x4f8] sm:$0x7] %v1483
          %1492 = vst.msk [vmem:[#allocation2 + $0x500] sm:$0x7] %vm749, %v1482
          %1493 = vrot.lane.b32.xlu0 %v890, 125
          %v1494 = vpop.permute.xlu0 %1493
          %v1495 = vsel %vm835, %v834, %v1494
          %1498 = vst [vmem:[#allocation2 + $0x508] sm:$0x7] %v837
          %1499 = vst [vmem:[#allocation2 + $0x510] sm:$0x7] %v838
          %1500 = vst [vmem:[#allocation2 + $0x518] sm:$0x7] %v839
          %1501 = vst [vmem:[#allocation2 + $0x520] sm:$0x7] %v840
          %1502 = vst [vmem:[#allocation2 + $0x528] sm:$0x7] %v841
          %1503 = vst [vmem:[#allocation2 + $0x530] sm:$0x7] %v1495
          %1504 = vst.msk [vmem:[#allocation2 + $0x538] sm:$0x7] %vm749, %v1494
          %1505 = vrot.lane.b32.xlu0 %v890, 124
          %v1506 = vpop.permute.xlu0 %1505
          %v1507 = vsel %vm424, %v869, %v1506
          %1510 = vst [vmem:[#allocation2 + $0x540] sm:$0x7] %v871
          %1511 = vst [vmem:[#allocation2 + $0x548] sm:$0x7] %v872
          %1512 = vst [vmem:[#allocation2 + $0x550] sm:$0x7] %v873
          %1513 = vst [vmem:[#allocation2 + $0x558] sm:$0x7] %v874
          %1514 = vst [vmem:[#allocation2 + $0x560] sm:$0x7] %v875
          %1515 = vst [vmem:[#allocation2 + $0x568] sm:$0x7] %v1507
          %1516 = vst.msk [vmem:[#allocation2 + $0x570] sm:$0x7] %vm749, %v1506
          %v1517 = vld [vmem:[%s1] sm:$0x3f]
          %v1518 = vld [vmem:[%s1 + $0x8] sm:$0x3f]
          %v1519 = vld [vmem:[#allocation2] sm:$0xff]
          %v1520 = vld [vmem:[#allocation2 + $0x8] sm:$0xff]
          %v1521 = vld [vmem:[#allocation2 + $0x10] sm:$0xff]
          %v1522 = vld [vmem:[#allocation2 + $0x18] sm:$0xff]
          %v1523 = vld [vmem:[#allocation2 + $0x20] sm:$0xff]
          %v1524 = vld [vmem:[#allocation2 + $0x28] sm:$0xff]
          %v1525 = vld [vmem:[#allocation2 + $0x30] sm:$0xff]
          %v1526 = vld [vmem:[#allocation2 + $0x38] sm:$0xff]
          %v1527 = vld [vmem:[#allocation2 + $0x40] sm:$0xff]
          %v1528 = vld [vmem:[#allocation2 + $0x48] sm:$0xff]
          %v1529 = vld [vmem:[#allocation2 + $0x50] sm:$0xff]
          %v1530 = vld [vmem:[#allocation2 + $0x58] sm:$0xff]
          %v1531 = vld [vmem:[#allocation2 + $0x60] sm:$0xff]
          %v1532 = vld [vmem:[#allocation2 + $0x68] sm:$0xff]
          %v1533 = vld [vmem:[#allocation2 + $0x70] sm:$0xff]
          %v1534 = vld [vmem:[#allocation2 + $0x78] sm:$0xff]
          %v1535 = vld [vmem:[#allocation2 + $0x80] sm:$0xff]
          %v1536 = vld [vmem:[#allocation2 + $0x88] sm:$0xff]
          %v1537 = vld [vmem:[#allocation2 + $0x90] sm:$0xff]
          %v1538 = vld [vmem:[#allocation2 + $0x98] sm:$0xff]
          %v1539 = vld [vmem:[#allocation2 + $0xa0] sm:$0xff]
          %v1540 = vld [vmem:[#allocation2 + $0xa8] sm:$0xff]
          %v1541 = vld [vmem:[#allocation2 + $0xb0] sm:$0xff]
          %v1542 = vld [vmem:[#allocation2 + $0xb8] sm:$0xff]
          %v1543 = vld [vmem:[#allocation2 + $0xc0] sm:$0xff]
          %v1544 = vld [vmem:[#allocation2 + $0xc8] sm:$0xff]
          %v1545 = vld [vmem:[#allocation2 + $0xd0] sm:$0xff]
          %v1546 = vld [vmem:[#allocation2 + $0xd8] sm:$0xff]
          %v1547 = vld [vmem:[#allocation2 + $0xe0] sm:$0xff]
          %v1548 = vld [vmem:[#allocation2 + $0xe8] sm:$0xff]
          %v1549 = vld [vmem:[#allocation2 + $0xf0] sm:$0xff]
          %v1550 = vld [vmem:[#allocation2 + $0xf8] sm:$0xff]
          %v1551 = vld [vmem:[#allocation2 + $0x100] sm:$0xff]
          %v1552 = vld [vmem:[#allocation2 + $0x108] sm:$0xff]
          %v1553 = vld [vmem:[#allocation2 + $0x110] sm:$0xff]
          %v1554 = vld [vmem:[#allocation2 + $0x118] sm:$0xff]
          %v1555 = vld [vmem:[#allocation2 + $0x120] sm:$0xff]
          %v1556 = vld [vmem:[#allocation2 + $0x128] sm:$0xff]
          %v1557 = vld [vmem:[#allocation2 + $0x130] sm:$0xff]
          %v1558 = vld [vmem:[#allocation2 + $0x138] sm:$0xff]
          %v1559 = vld [vmem:[#allocation2 + $0x140] sm:$0xff]
          %v1560 = vld [vmem:[#allocation2 + $0x148] sm:$0xff]
          %v1561 = vld [vmem:[#allocation2 + $0x150] sm:$0xff]
          %v1562 = vld [vmem:[#allocation2 + $0x158] sm:$0xff]
          %v1563 = vld [vmem:[#allocation2 + $0x160] sm:$0xff]
          %v1564 = vld [vmem:[#allocation2 + $0x168] sm:$0xff]
          %v1565 = vld [vmem:[#allocation2 + $0x170] sm:$0xff]
          %v1566 = vld [vmem:[#allocation2 + $0x178] sm:$0xff]
          %v1567 = vld [vmem:[#allocation2 + $0x180] sm:$0xff]
          %v1568 = vld [vmem:[#allocation2 + $0x188] sm:$0xff]
          %v1569 = vld [vmem:[#allocation2 + $0x190] sm:$0xff]
          %v1570 = vld [vmem:[#allocation2 + $0x198] sm:$0xff]
          %v1571 = vld [vmem:[#allocation2 + $0x1a0] sm:$0xff]
          %v1572 = vld [vmem:[#allocation2 + $0x1a8] sm:$0xff]
          %v1573 = vld [vmem:[#allocation2 + $0x1b0] sm:$0xff]
          %v1574 = vld [vmem:[#allocation2 + $0x1b8] sm:$0xff]
          %v1575 = vld [vmem:[#allocation2 + $0x1c0] sm:$0xff]
          %v1576 = vld [vmem:[#allocation2 + $0x1c8] sm:$0xff]
          %v1577 = vld [vmem:[#allocation2 + $0x1d0] sm:$0xff]
          %v1578 = vld [vmem:[#allocation2 + $0x1d8] sm:$0xff]
          %v1579 = vld [vmem:[#allocation2 + $0x1e0] sm:$0xff]
          %v1580 = vld [vmem:[#allocation2 + $0x1e8] sm:$0xff]
          %v1581 = vld [vmem:[#allocation2 + $0x1f0] sm:$0xff]
          %v1582 = vld [vmem:[#allocation2 + $0x1f8] sm:$0xff]
          %v1583 = vld [vmem:[#allocation2 + $0x200] sm:$0xff]
          %v1584 = vld [vmem:[#allocation2 + $0x208] sm:$0xff]
          %v1585 = vld [vmem:[#allocation2 + $0x210] sm:$0xff]
          %v1586 = vld [vmem:[#allocation2 + $0x218] sm:$0xff]
          %v1587 = vld [vmem:[#allocation2 + $0x220] sm:$0xff]
          %v1588 = vld [vmem:[#allocation2 + $0x228] sm:$0xff]
          %v1589 = vld [vmem:[#allocation2 + $0x230] sm:$0xff]
          %v1590 = vld [vmem:[#allocation2 + $0x238] sm:$0xff]
          %v1591 = vld [vmem:[#allocation2 + $0x240] sm:$0xff]
          %v1592 = vld [vmem:[#allocation2 + $0x248] sm:$0xff]
          %v1593 = vld [vmem:[#allocation2 + $0x250] sm:$0xff]
          %v1594 = vld [vmem:[#allocation2 + $0x258] sm:$0xff]
          %v1595 = vld [vmem:[#allocation2 + $0x260] sm:$0xff]
          %v1596 = vld [vmem:[#allocation2 + $0x268] sm:$0xff]
          %v1597 = vld [vmem:[#allocation2 + $0x270] sm:$0xff]
          %v1598 = vld [vmem:[#allocation2 + $0x278] sm:$0xff]
          %v1599 = vld [vmem:[#allocation2 + $0x280] sm:$0xff]
          %v1600 = vld [vmem:[#allocation2 + $0x288] sm:$0xff]
          %v1601 = vld [vmem:[#allocation2 + $0x290] sm:$0xff]
          %v1602 = vld [vmem:[#allocation2 + $0x298] sm:$0xff]
          %v1603 = vld [vmem:[#allocation2 + $0x2a0] sm:$0xff]
          %v1604 = vld [vmem:[#allocation2 + $0x2a8] sm:$0xff]
          %v1605 = vld [vmem:[#allocation2 + $0x2b0] sm:$0xff]
          %v1606 = vld [vmem:[#allocation2 + $0x2b8] sm:$0xff]
          %v1607 = vld [vmem:[#allocation2 + $0x2c0] sm:$0xff]
          %v1608 = vld [vmem:[#allocation2 + $0x2c8] sm:$0xff]
          %v1609 = vld [vmem:[#allocation2 + $0x2d0] sm:$0xff]
          %v1610 = vld [vmem:[#allocation2 + $0x2d8] sm:$0xff]
          %v1611 = vld [vmem:[#allocation2 + $0x2e0] sm:$0xff]
          %v1612 = vld [vmem:[#allocation2 + $0x2e8] sm:$0xff]
          %v1613 = vld [vmem:[#allocation2 + $0x2f0] sm:$0xff]
          %v1614 = vld [vmem:[#allocation2 + $0x2f8] sm:$0xff]
          %v1615 = vld [vmem:[#allocation2 + $0x300] sm:$0xff]
          %v1616 = vld [vmem:[#allocation2 + $0x308] sm:$0xff]
          %v1617 = vld [vmem:[#allocation2 + $0x310] sm:$0xff]
          %v1618 = vld [vmem:[#allocation2 + $0x318] sm:$0xff]
          %v1619 = vld [vmem:[#allocation2 + $0x320] sm:$0xff]
          %v1620 = vld [vmem:[#allocation2 + $0x328] sm:$0xff]
          %v1621 = vld [vmem:[#allocation2 + $0x330] sm:$0xff]
          %v1622 = vld [vmem:[#allocation2 + $0x338] sm:$0xff]
          %v1623 = vld [vmem:[#allocation2 + $0x340] sm:$0xff]
          %v1624 = vld [vmem:[#allocation2 + $0x348] sm:$0xff]
          %v1625 = vld [vmem:[#allocation2 + $0x350] sm:$0xff]
          %v1626 = vld [vmem:[#allocation2 + $0x358] sm:$0xff]
          %v1627 = vld [vmem:[#allocation2 + $0x360] sm:$0xff]
          %v1628 = vld [vmem:[#allocation2 + $0x368] sm:$0xff]
          %v1629 = vld [vmem:[#allocation2 + $0x370] sm:$0xff]
          %v1630 = vld [vmem:[#allocation2 + $0x378] sm:$0xff]
          %v1631 = vld [vmem:[#allocation2 + $0x380] sm:$0xff]
          %v1632 = vld [vmem:[#allocation2 + $0x388] sm:$0xff]
          %v1633 = vld [vmem:[#allocation2 + $0x390] sm:$0xff]
          %v1634 = vld [vmem:[#allocation2 + $0x398] sm:$0xff]
          %v1635 = vld [vmem:[#allocation2 + $0x3a0] sm:$0xff]
          %v1636 = vld [vmem:[#allocation2 + $0x3a8] sm:$0xff]
          %v1637 = vld [vmem:[#allocation2 + $0x3b0] sm:$0xff]
          %v1638 = vld [vmem:[#allocation2 + $0x3b8] sm:$0xff]
          %v1639 = vld [vmem:[#allocation2 + $0x3c0] sm:$0xff]
          %v1640 = vld [vmem:[#allocation2 + $0x3c8] sm:$0xff]
          %v1641 = vld [vmem:[#allocation2 + $0x3d0] sm:$0xff]
          %v1642 = vld [vmem:[#allocation2 + $0x3d8] sm:$0xff]
          %v1643 = vld [vmem:[#allocation2 + $0x3e0] sm:$0xff]
          %v1644 = vld [vmem:[#allocation2 + $0x3e8] sm:$0xff]
          %v1645 = vld [vmem:[#allocation2 + $0x3f0] sm:$0xff]
          %v1646 = vld [vmem:[#allocation2 + $0x3f8] sm:$0xff]
          %v1647 = vld [vmem:[#allocation2 + $0x400] sm:$0xff]
          %v1648 = vld [vmem:[#allocation2 + $0x408] sm:$0xff]
          %v1649 = vld [vmem:[#allocation2 + $0x410] sm:$0xff]
          %v1650 = vld [vmem:[#allocation2 + $0x418] sm:$0xff]
          %v1651 = vld [vmem:[#allocation2 + $0x420] sm:$0xff]
          %v1652 = vld [vmem:[#allocation2 + $0x428] sm:$0xff]
          %v1653 = vld [vmem:[#allocation2 + $0x430] sm:$0xff]
          %v1654 = vld [vmem:[#allocation2 + $0x438] sm:$0xff]
          %v1655 = vld [vmem:[#allocation2 + $0x440] sm:$0xff]
          %v1656 = vld [vmem:[#allocation2 + $0x448] sm:$0xff]
          %v1657 = vld [vmem:[#allocation2 + $0x450] sm:$0xff]
          %v1658 = vld [vmem:[#allocation2 + $0x458] sm:$0xff]
          %v1659 = vld [vmem:[#allocation2 + $0x460] sm:$0xff]
          %v1660 = vld [vmem:[#allocation2 + $0x468] sm:$0xff]
          %v1661 = vld [vmem:[#allocation2 + $0x470] sm:$0xff]
          %v1662 = vld [vmem:[#allocation2 + $0x478] sm:$0xff]
          %v1663 = vld [vmem:[#allocation2 + $0x480] sm:$0xff]
          %v1664 = vld [vmem:[#allocation2 + $0x488] sm:$0xff]
          %v1665 = vld [vmem:[#allocation2 + $0x490] sm:$0xff]
          %v1666 = vld [vmem:[#allocation2 + $0x498] sm:$0xff]
          %v1667 = vld [vmem:[#allocation2 + $0x4a0] sm:$0xff]
          %v1668 = vld [vmem:[#allocation2 + $0x4a8] sm:$0xff]
          %v1669 = vld [vmem:[#allocation2 + $0x4b0] sm:$0xff]
          %v1670 = vld [vmem:[#allocation2 + $0x4b8] sm:$0xff]
          %v1671 = vld [vmem:[#allocation2 + $0x4c0] sm:$0xff]
          %v1672 = vld [vmem:[#allocation2 + $0x4c8] sm:$0xff]
          %v1673 = vld [vmem:[#allocation2 + $0x4d0] sm:$0xff]
          %v1674 = vld [vmem:[#allocation2 + $0x4d8] sm:$0xff]
          %v1675 = vld [vmem:[#allocation2 + $0x4e0] sm:$0xff]
          %v1676 = vld [vmem:[#allocation2 + $0x4e8] sm:$0xff]
          %v1677 = vld [vmem:[#allocation2 + $0x4f0] sm:$0xff]
          %v1678 = vld [vmem:[#allocation2 + $0x4f8] sm:$0xff]
          %v1679 = vld [vmem:[#allocation2 + $0x500] sm:$0xff]
          %v1680 = vld [vmem:[#allocation2 + $0x508] sm:$0xff]
          %v1681 = vld [vmem:[#allocation2 + $0x510] sm:$0xff]
          %v1682 = vld [vmem:[#allocation2 + $0x518] sm:$0xff]
          %v1683 = vld [vmem:[#allocation2 + $0x520] sm:$0xff]
          %v1684 = vld [vmem:[#allocation2 + $0x528] sm:$0xff]
          %v1685 = vld [vmem:[#allocation2 + $0x530] sm:$0xff]
          %v1686 = vld [vmem:[#allocation2 + $0x538] sm:$0xff]
          %v1687 = vld [vmem:[#allocation2 + $0x540] sm:$0xff]
          %v1688 = vld [vmem:[#allocation2 + $0x548] sm:$0xff]
          %v1689 = vld [vmem:[#allocation2 + $0x550] sm:$0xff]
          %v1690 = vld [vmem:[#allocation2 + $0x558] sm:$0xff]
          %v1691 = vld [vmem:[#allocation2 + $0x560] sm:$0xff]
          %v1692 = vld [vmem:[#allocation2 + $0x568] sm:$0xff]
          %v1693 = vld [vmem:[#allocation2 + $0x570] sm:$0xff]
          %vm1694 = vcmask 588800
          %v1696 = vsel %vm1694, %v1518, 0
          %1698 = vmatprep.subr.mxu0 %v1520
          %1699 = vmatpush1.msra.mxu0 %v1519
          %1700 = vmatprep.subr.mxu0 %v1527
          %1701 = vmatpush1.msra.mxu0 %v1526
          %1702 = vmatprep.subr.mxu0 %v1534
          %1703 = vmatpush1.msra.mxu0 %v1533
          %1704 = vmatprep.subr.mxu0 %v1541
          %1705 = vmatpush1.msra.mxu0 %v1540
          %1706 = vmatprep.subr.mxu0 %v1548
          %1707 = vmatpush1.msra.mxu0 %v1547
          %1708 = vmatprep.subr.mxu0 %v1555
          %1709 = vmatpush1.msra.mxu0 %v1554
          %1710 = vmatprep.subr.mxu0 %v1562
          %1711 = vmatpush1.msra.mxu0 %v1561
          %1712 = vmatprep.subr.mxu0 %v1569
          %1713 = vmatpush1.msra.mxu0 %v1568
          %1714 = vmatprep.subr.mxu0 %v1576
          %1715 = vmatpush1.msra.mxu0 %v1575
          %1716 = vmatprep.subr.mxu0 %v1583
          %1717 = vmatpush1.msra.mxu0 %v1582
          %1718 = vmatprep.subr.mxu0 %v1590
          %1719 = vmatpush1.msra.mxu0 %v1589
          %1720 = vmatprep.subr.mxu0 %v1597
          %1721 = vmatpush1.msra.mxu0 %v1596
          %1722 = vmatprep.subr.mxu0 %v1604
          %1723 = vmatpush1.msra.mxu0 %v1603
          %1724 = vmatprep.subr.mxu0 %v1611
          %1725 = vmatpush1.msra.mxu0 %v1610
          %1726 = vmatprep.subr.mxu0 %v1618
          %1727 = vmatpush1.msra.mxu0 %v1617
          %1728 = vmatprep.subr.mxu0 %v1625
          %1729 = vmatpush1.msra.mxu0 %v1624
          %1730 = vmatprep.subr.mxu0 %v1632
          %1731 = vmatpush1.msra.mxu0 %v1631
          %1732 = vmatprep.subr.mxu0 %v1639
          %1733 = vmatpush1.msra.mxu0 %v1638
          %1734 = vmatprep.subr.mxu0 %v1646
          %1735 = vmatpush1.msra.mxu0 %v1645
          %1736 = vmatprep.subr.mxu0 %v1653
          %1737 = vmatpush1.msra.mxu0 %v1652
          %1738 = vmatprep.subr.mxu0 %v1660
          %1739 = vmatpush1.msra.mxu0 %v1659
          %1740 = vmatprep.subr.mxu0 %v1667
          %1741 = vmatpush1.msra.mxu0 %v1666
          %1742 = vmatprep.subr.mxu0 %v1674
          %1743 = vmatpush1.msra.mxu0 %v1673
          %1744 = vmatprep.subr.mxu0 %v1681
          %1745 = vmatpush1.msra.mxu0 %v1680
          %1746 = vmatprep.subr.mxu0 %v1688
          %1747 = vmatpush1.msra.mxu0 %v1687
          %1748 = vmatprep.subr.mxu0 0.0
          %1749 = vmatpush1.msra.mxu0 0.0
          %1750 = vmatprep.subr.mxu0 0.0
          %1751 = vmatpush1.msra.mxu0 0.0
          %1752 = vmatprep.subr.mxu0 0.0
          %1753 = vmatpush1.msra.mxu0 0.0
          %1754 = vmatprep.subr.mxu0 0.0
          %1755 = vmatpush1.msra.mxu0 0.0
          %1756 = vmatprep.subr.mxu0 0.0
          %1757 = vmatpush1.msra.mxu0 0.0
          %1758 = vmatprep.subr.mxu0 0.0
          %1759 = vmatpush1.msra.mxu0 0.0
          %1760 = vmatprep.subr.mxu0 0.0
          %1761 = vmatpush1.msra.mxu0 0.0
          %1762 = vmatprep.mubr.f32.mxu0 %v1696
          %1763 = vmatmul.mubr.f32.gmra.mrb[0].mxu0 %v1517
          %v1764 = vpop.f32.mrb[0].mxu0
          %v1765 = vadd.f32 0.0, %v1764
          %v1766 = vpop.f32.mrb[0].mxu0
          %v1767 = vadd.f32 0.0, %v1766
          %1768 = vdwg.mxu0
          %1769 = vmatprep.subr.mxu0 %v1522
          %1770 = vmatpush1.msra.mxu0 %v1521
          %1771 = vmatprep.subr.mxu0 %v1529
          %1772 = vmatpush1.msra.mxu0 %v1528
          %1773 = vmatprep.subr.mxu0 %v1536
          %1774 = vmatpush1.msra.mxu0 %v1535
          %1775 = vmatprep.subr.mxu0 %v1543
          %1776 = vmatpush1.msra.mxu0 %v1542
          %1777 = vmatprep.subr.mxu0 %v1550
          %1778 = vmatpush1.msra.mxu0 %v1549
          %1779 = vmatprep.subr.mxu0 %v1557
          %1780 = vmatpush1.msra.mxu0 %v1556
          %1781 = vmatprep.subr.mxu0 %v1564
          %1782 = vmatpush1.msra.mxu0 %v1563
          %1783 = vmatprep.subr.mxu0 %v1571
          %1784 = vmatpush1.msra.mxu0 %v1570
          %1785 = vmatprep.subr.mxu0 %v1578
          %1786 = vmatpush1.msra.mxu0 %v1577
          %1787 = vmatprep.subr.mxu0 %v1585
          %1788 = vmatpush1.msra.mxu0 %v1584
          %1789 = vmatprep.subr.mxu0 %v1592
          %1790 = vmatpush1.msra.mxu0 %v1591
          %1791 = vmatprep.subr.mxu0 %v1599
          %1792 = vmatpush1.msra.mxu0 %v1598
          %1793 = vmatprep.subr.mxu0 %v1606
          %1794 = vmatpush1.msra.mxu0 %v1605
          %1795 = vmatprep.subr.mxu0 %v1613
          %1796 = vmatpush1.msra.mxu0 %v1612
          %1797 = vmatprep.subr.mxu0 %v1620
          %1798 = vmatpush1.msra.mxu0 %v1619
          %1799 = vmatprep.subr.mxu0 %v1627
          %1800 = vmatpush1.msra.mxu0 %v1626
          %1801 = vmatprep.subr.mxu0 %v1634
          %1802 = vmatpush1.msra.mxu0 %v1633
          %1803 = vmatprep.subr.mxu0 %v1641
          %1804 = vmatpush1.msra.mxu0 %v1640
          %1805 = vmatprep.subr.mxu0 %v1648
          %1806 = vmatpush1.msra.mxu0 %v1647
          %1807 = vmatprep.subr.mxu0 %v1655
          %1808 = vmatpush1.msra.mxu0 %v1654
          %1809 = vmatprep.subr.mxu0 %v1662
          %1810 = vmatpush1.msra.mxu0 %v1661
          %1811 = vmatprep.subr.mxu0 %v1669
          %1812 = vmatpush1.msra.mxu0 %v1668
          %1813 = vmatprep.subr.mxu0 %v1676
          %1814 = vmatpush1.msra.mxu0 %v1675
          %1815 = vmatprep.subr.mxu0 %v1683
          %1816 = vmatpush1.msra.mxu0 %v1682
          %1817 = vmatprep.subr.mxu0 %v1690
          %1818 = vmatpush1.msra.mxu0 %v1689
          %1819 = vmatprep.subr.mxu0 0.0
          %1820 = vmatpush1.msra.mxu0 0.0
          %1821 = vmatprep.subr.mxu0 0.0
          %1822 = vmatpush1.msra.mxu0 0.0
          %1823 = vmatprep.subr.mxu0 0.0
          %1824 = vmatpush1.msra.mxu0 0.0
          %1825 = vmatprep.subr.mxu0 0.0
          %1826 = vmatpush1.msra.mxu0 0.0
          %1827 = vmatprep.subr.mxu0 0.0
          %1828 = vmatpush1.msra.mxu0 0.0
          %1829 = vmatprep.subr.mxu0 0.0
          %1830 = vmatpush1.msra.mxu0 0.0
          %1831 = vmatprep.subr.mxu0 0.0
          %1832 = vmatpush1.msra.mxu0 0.0
          %1833 = vmatprep.mubr.f32.mxu0 %v1696
          %1834 = vmatmul.mubr.f32.gmra.mrb[0].mxu0 %v1517
          %v1835 = vpop.f32.mrb[0].mxu0
          %v1836 = vadd.f32 0.0, %v1835
          %v1837 = vpop.f32.mrb[0].mxu0
          %v1838 = vadd.f32 0.0, %v1837
          %1839 = vdwg.mxu0
          %1840 = vmatprep.subr.mxu0 %v1524
          %1841 = vmatpush1.msra.mxu0 %v1523
          %1842 = vmatprep.subr.mxu0 %v1531
          %1843 = vmatpush1.msra.mxu0 %v1530
          %1844 = vmatprep.subr.mxu0 %v1538
          %1845 = vmatpush1.msra.mxu0 %v1537
          %1846 = vmatprep.subr.mxu0 %v1545
          %1847 = vmatpush1.msra.mxu0 %v1544
          %1848 = vmatprep.subr.mxu0 %v1552
          %1849 = vmatpush1.msra.mxu0 %v1551
          %1850 = vmatprep.subr.mxu0 %v1559
          %1851 = vmatpush1.msra.mxu0 %v1558
          %1852 = vmatprep.subr.mxu0 %v1566
          %1853 = vmatpush1.msra.mxu0 %v1565
          %1854 = vmatprep.subr.mxu0 %v1573
          %1855 = vmatpush1.msra.mxu0 %v1572
          %1856 = vmatprep.subr.mxu0 %v1580
          %1857 = vmatpush1.msra.mxu0 %v1579
          %1858 = vmatprep.subr.mxu0 %v1587
          %1859 = vmatpush1.msra.mxu0 %v1586
          %1860 = vmatprep.subr.mxu0 %v1594
          %1861 = vmatpush1.msra.mxu0 %v1593
          %1862 = vmatprep.subr.mxu0 %v1601
          %1863 = vmatpush1.msra.mxu0 %v1600
          %1864 = vmatprep.subr.mxu0 %v1608
          %1865 = vmatpush1.msra.mxu0 %v1607
          %1866 = vmatprep.subr.mxu0 %v1615
          %1867 = vmatpush1.msra.mxu0 %v1614
          %1868 = vmatprep.subr.mxu0 %v1622
          %1869 = vmatpush1.msra.mxu0 %v1621
          %1870 = vmatprep.subr.mxu0 %v1629
          %1871 = vmatpush1.msra.mxu0 %v1628
          %1872 = vmatprep.subr.mxu0 %v1636
          %1873 = vmatpush1.msra.mxu0 %v1635
          %1874 = vmatprep.subr.mxu0 %v1643
          %1875 = vmatpush1.msra.mxu0 %v1642
          %1876 = vmatprep.subr.mxu0 %v1650
          %1877 = vmatpush1.msra.mxu0 %v1649
          %1878 = vmatprep.subr.mxu0 %v1657
          %1879 = vmatpush1.msra.mxu0 %v1656
          %1880 = vmatprep.subr.mxu0 %v1664
          %1881 = vmatpush1.msra.mxu0 %v1663
          %1882 = vmatprep.subr.mxu0 %v1671
          %1883 = vmatpush1.msra.mxu0 %v1670
          %1884 = vmatprep.subr.mxu0 %v1678
          %1885 = vmatpush1.msra.mxu0 %v1677
          %1886 = vmatprep.subr.mxu0 %v1685
          %1887 = vmatpush1.msra.mxu0 %v1684
          %1888 = vmatprep.subr.mxu0 %v1692
          %1889 = vmatpush1.msra.mxu0 %v1691
          %1890 = vmatprep.subr.mxu0 0.0
          %1891 = vmatpush1.msra.mxu0 0.0
          %1892 = vmatprep.subr.mxu0 0.0
          %1893 = vmatpush1.msra.mxu0 0.0
          %1894 = vmatprep.subr.mxu0 0.0
          %1895 = vmatpush1.msra.mxu0 0.0
          %1896 = vmatprep.subr.mxu0 0.0
          %1897 = vmatpush1.msra.mxu0 0.0
          %1898 = vmatprep.subr.mxu0 0.0
          %1899 = vmatpush1.msra.mxu0 0.0
          %1900 = vmatprep.subr.mxu0 0.0
          %1901 = vmatpush1.msra.mxu0 0.0
          %1902 = vmatprep.subr.mxu0 0.0
          %1903 = vmatpush1.msra.mxu0 0.0
          %1904 = vmatprep.mubr.f32.mxu0 %v1696
          %1905 = vmatmul.mubr.f32.gmra.mrb[0].mxu0 %v1517
          %v1906 = vpop.f32.mrb[0].mxu0
          %v1907 = vadd.f32 0.0, %v1906
          %v1908 = vpop.f32.mrb[0].mxu0
          %v1909 = vadd.f32 0.0, %v1908
          %1910 = vdwg.mxu0
          %1911 = vmatprep.subr.mxu0 0.0
          %1912 = vmatpush1.msra.mxu0 %v1525
          %1913 = vmatprep.subr.mxu0 0.0
          %1914 = vmatpush1.msra.mxu0 %v1532
          %1915 = vmatprep.subr.mxu0 0.0
          %1916 = vmatpush1.msra.mxu0 %v1539
          %1917 = vmatprep.subr.mxu0 0.0
          %1918 = vmatpush1.msra.mxu0 %v1546
          %1919 = vmatprep.subr.mxu0 0.0
          %1920 = vmatpush1.msra.mxu0 %v1553
          %1921 = vmatprep.subr.mxu0 0.0
          %1922 = vmatpush1.msra.mxu0 %v1560
          %1923 = vmatprep.subr.mxu0 0.0
          %1924 = vmatpush1.msra.mxu0 %v1567
          %1925 = vmatprep.subr.mxu0 0.0
          %1926 = vmatpush1.msra.mxu0 %v1574
          %1927 = vmatprep.subr.mxu0 0.0
          %1928 = vmatpush1.msra.mxu0 %v1581
          %1929 = vmatprep.subr.mxu0 0.0
          %1930 = vmatpush1.msra.mxu0 %v1588
          %1931 = vmatprep.subr.mxu0 0.0
          %1932 = vmatpush1.msra.mxu0 %v1595
          %1933 = vmatprep.subr.mxu0 0.0
          %1934 = vmatpush1.msra.mxu0 %v1602
          %1935 = vmatprep.subr.mxu0 0.0
          %1936 = vmatpush1.msra.mxu0 %v1609
          %1937 = vmatprep.subr.mxu0 0.0
          %1938 = vmatpush1.msra.mxu0 %v1616
          %1939 = vmatprep.subr.mxu0 0.0
          %1940 = vmatpush1.msra.mxu0 %v1623
          %1941 = vmatprep.subr.mxu0 0.0
          %1942 = vmatpush1.msra.mxu0 %v1630
          %1943 = vmatprep.subr.mxu0 0.0
          %1944 = vmatpush1.msra.mxu0 %v1637
          %1945 = vmatprep.subr.mxu0 0.0
          %1946 = vmatpush1.msra.mxu0 %v1644
          %1947 = vmatprep.subr.mxu0 0.0
          %1948 = vmatpush1.msra.mxu0 %v1651
          %1949 = vmatprep.subr.mxu0 0.0
          %1950 = vmatpush1.msra.mxu0 %v1658
          %1951 = vmatprep.subr.mxu0 0.0
          %1952 = vmatpush1.msra.mxu0 %v1665
          %1953 = vmatprep.subr.mxu0 0.0
          %1954 = vmatpush1.msra.mxu0 %v1672
          %1955 = vmatprep.subr.mxu0 0.0
          %1956 = vmatpush1.msra.mxu0 %v1679
          %1957 = vmatprep.subr.mxu0 0.0
          %1958 = vmatpush1.msra.mxu0 %v1686
          %1959 = vmatprep.subr.mxu0 0.0
          %1960 = vmatpush1.msra.mxu0 %v1693
          %1961 = vmatprep.subr.mxu0 0.0
          %1962 = vmatpush1.msra.mxu0 0.0
          %1963 = vmatprep.subr.mxu0 0.0
          %1964 = vmatpush1.msra.mxu0 0.0
          %1965 = vmatprep.subr.mxu0 0.0
          %1966 = vmatpush1.msra.mxu0 0.0
          %1967 = vmatprep.subr.mxu0 0.0
          %1968 = vmatpush1.msra.mxu0 0.0
          %1969 = vmatprep.subr.mxu0 0.0
          %1970 = vmatpush1.msra.mxu0 0.0
          %1971 = vmatprep.subr.mxu0 0.0
          %1972 = vmatpush1.msra.mxu0 0.0
          %1973 = vmatprep.subr.mxu0 0.0
          %1974 = vmatpush1.msra.mxu0 0.0
          %1975 = vmatprep.mubr.f32.mxu0 %v1696
          %1976 = vmatmul.mubr.f32.gmra.mrb[0].mxu0 %v1517
          %v1977 = vpop.f32.mrb[0].mxu0
          %v1978 = vadd.f32 0.0, %v1977
          %v1979 = vpop.f32.mrb[0].mxu0
          %1980 = vdwg.mxu0
          %1988 = vrot.lane.b32.xlu0 %v1765, 127
          %v1989 = vpop.permute.xlu0 %1988
          %1990 = vrot.lane.b32.xlu0 %v1767, 127
          %v1991 = vpop.permute.xlu0 %1990
          %1992 = vrot.lane.b32.xlu0 %v1836, 127
          %v1993 = vpop.permute.xlu0 %1992
          %1994 = vrot.lane.b32.xlu0 %v1838, 127
          %v1995 = vpop.permute.xlu0 %1994
          %1996 = vrot.lane.b32.xlu0 %v1907, 127
          %v1997 = vpop.permute.xlu0 %1996
          %1998 = vrot.lane.b32.xlu0 %v1909, 127
          %v1999 = vpop.permute.xlu0 %1998
          %2000 = vrot.lane.b32.xlu0 %v1978, 127
          %v2001 = vpop.permute.xlu0 %2000
          %v2002 = vsel %vm765, %v1989, %v1991
          %v2003 = vsel %vm765, %v1991, %v1993
          %v2004 = vsel %vm765, %v1993, %v1995
          %v2005 = vsel %vm765, %v1995, %v1997
          %v2006 = vsel %vm765, %v1997, %v1999
          %v2007 = vsel %vm765, %v1999, %v2001
          %v2015 = vmax.f32 %v1765, %v2002
          %v2016 = vmax.f32 %v1767, %v2003
          %v2017 = vmax.f32 %v1836, %v2004
          %v2018 = vmax.f32 %v1838, %v2005
          %v2019 = vmax.f32 %v1907, %v2006
          %v2020 = vmax.f32 %v1909, %v2007
          %v2021 = vmax.f32 %v1978, %v2001
          %2029 = vrot.lane.b32.xlu0 %v2015, 96
          %v2030 = vpop.permute.xlu0 %2029
          %2031 = vrot.lane.b32.xlu0 %v2016, 96
          %v2032 = vpop.permute.xlu0 %2031
          %2033 = vrot.lane.b32.xlu0 %v2017, 96
          %v2034 = vpop.permute.xlu0 %2033
          %2035 = vrot.lane.b32.xlu0 %v2018, 96
          %v2036 = vpop.permute.xlu0 %2035
          %2037 = vrot.lane.b32.xlu0 %v2019, 96
          %v2038 = vpop.permute.xlu0 %2037
          %2039 = vrot.lane.b32.xlu0 %v2020, 96
          %v2040 = vpop.permute.xlu0 %2039
          %2041 = vrot.lane.b32.xlu0 %v2021, 96
          %v2042 = vpop.permute.xlu0 %2041
          %v2043 = vsel %vm907, %v2030, %v2032
          %v2044 = vsel %vm907, %v2032, %v2034
          %v2045 = vsel %vm907, %v2034, %v2036
          %v2046 = vsel %vm907, %v2036, %v2038
          %v2047 = vsel %vm907, %v2038, %v2040
          %v2048 = vsel %vm907, %v2040, %v2042
          %v2056 = vmax.f32 %v2015, %v2043
          %v2057 = vmax.f32 %v2016, %v2044
          %v2058 = vmax.f32 %v2017, %v2045
          %v2059 = vmax.f32 %v2018, %v2046
          %v2060 = vmax.f32 %v2019, %v2047
          %v2061 = vmax.f32 %v2020, %v2048
          %v2062 = vmax.f32 %v2021, %v2042
          %v2063 = vld [vmem:[%s2] sm:$0x3f]
          %2065 = vset.pattern.permute.xlu0 0
          %2066 = vperm.xlu0 %2065, %v2063
          %v2067 = vpop.permute.xlu0 %2066
          %v2069 = vadd.f32 %v2056, %v2067
          %v2070 = vadd.f32 %v2057, %v2067
          %v2071 = vadd.f32 %v2058, %v2067
          %v2072 = vadd.f32 %v2059, %v2067
          %v2073 = vadd.f32 %v2060, %v2067
          %v2074 = vadd.f32 %v2061, %v2067
          %v2075 = vadd.f32 %v2062, %v2067
          %v2076 = vmax.f32 %v2069, 0.0
          %v2077 = vmax.f32 %v2070, 0.0
          %v2078 = vmax.f32 %v2071, 0.0
          %v2079 = vmax.f32 %v2072, 0.0
          %v2080 = vmax.f32 %v2073, 0.0
          %v2081 = vmax.f32 %v2074, 0.0
          %v2082 = vmax.f32 %v2075, 0.0
          %2083 = vst [vmem:[#allocation3] sm:$0x3f] %v2076
          %2084 = vst [vmem:[#allocation3 + $0x8] sm:$0x3f] %v2077
          %2085 = vst [vmem:[#allocation3 + $0x10] sm:$0x3f] %v2078
          %2086 = vst [vmem:[#allocation3 + $0x18] sm:$0x3f] %v2079
          %vm2087 = vcmask 676864
          %2088 = vst.msk [vmem:[#allocation3 + $0x20] sm:$0x3f] %vm2087, %v2080
          %2094 = vrot.lane.b32.xlu0 %v2076, 126
          %v2095 = vpop.permute.xlu0 %2094
          %2096 = vrot.lane.b32.xlu0 %v2077, 126
          %v2097 = vpop.permute.xlu0 %2096
          %2098 = vrot.lane.b32.xlu0 %v2078, 126
          %v2099 = vpop.permute.xlu0 %2098
          %2100 = vrot.lane.b32.xlu0 %v2079, 126
          %v2101 = vpop.permute.xlu0 %2100
          %2102 = vrot.lane.b32.xlu0 %v2080, 126
          %v2103 = vpop.permute.xlu0 %2102
          %v2104 = vsel %vm800, %v2095, %v2097
          %v2105 = vsel %vm800, %v2097, %v2099
          %v2106 = vsel %vm800, %v2099, %v2101
          %v2107 = vsel %vm800, %v2101, %v2103
          %2113 = vst [vmem:[#allocation3 + $0x28] sm:$0x3f] %v2104
          %2114 = vst [vmem:[#allocation3 + $0x30] sm:$0x3f] %v2105
          %2115 = vst [vmem:[#allocation3 + $0x38] sm:$0x3f] %v2106
          %2116 = vst [vmem:[#allocation3 + $0x40] sm:$0x3f] %v2107
          %2117 = vst.msk [vmem:[#allocation3 + $0x48] sm:$0x3f] %vm2087, %v2103
          %2118 = vrot.lane.b32.xlu0 %v2076, 124
          %v2119 = vpop.permute.xlu0 %2118
          %2120 = vrot.lane.b32.xlu0 %v2077, 124
          %v2121 = vpop.permute.xlu0 %2120
          %2122 = vrot.lane.b32.xlu0 %v2078, 124
          %v2123 = vpop.permute.xlu0 %2122
          %2124 = vrot.lane.b32.xlu0 %v2079, 124
          %v2125 = vpop.permute.xlu0 %2124
          %2126 = vrot.lane.b32.xlu0 %v2080, 124
          %v2127 = vpop.permute.xlu0 %2126
          %v2128 = vsel %vm424, %v2119, %v2121
          %v2129 = vsel %vm424, %v2121, %v2123
          %v2130 = vsel %vm424, %v2123, %v2125
          %v2131 = vsel %vm424, %v2125, %v2127
          %2137 = vst [vmem:[#allocation3 + $0x50] sm:$0x3f] %v2128
          %2138 = vst [vmem:[#allocation3 + $0x58] sm:$0x3f] %v2129
          %2139 = vst [vmem:[#allocation3 + $0x60] sm:$0x3f] %v2130
          %2140 = vst [vmem:[#allocation3 + $0x68] sm:$0x3f] %v2131
          %2141 = vst.msk [vmem:[#allocation3 + $0x70] sm:$0x3f] %vm2087, %v2127
          %2142 = vrot.lane.b32.xlu0 %v2076, 122
          %v2143 = vpop.permute.xlu0 %2142
          %2144 = vrot.lane.b32.xlu0 %v2077, 122
          %v2145 = vpop.permute.xlu0 %2144
          %2146 = vrot.lane.b32.xlu0 %v2078, 122
          %v2147 = vpop.permute.xlu0 %2146
          %2148 = vrot.lane.b32.xlu0 %v2079, 122
          %v2149 = vpop.permute.xlu0 %2148
          %2150 = vrot.lane.b32.xlu0 %v2080, 122
          %v2151 = vpop.permute.xlu0 %2150
          %vm2152 = vcmask 998400
          %v2153 = vsel %vm2152, %v2143, %v2145
          %v2154 = vsel %vm2152, %v2145, %v2147
          %v2155 = vsel %vm2152, %v2147, %v2149
          %v2156 = vsel %vm2152, %v2149, %v2151
          %2162 = vst [vmem:[#allocation3 + $0x78] sm:$0x3f] %v2153
          %2163 = vst [vmem:[#allocation3 + $0x80] sm:$0x3f] %v2154
          %2164 = vst [vmem:[#allocation3 + $0x88] sm:$0x3f] %v2155
          %2165 = vst [vmem:[#allocation3 + $0x90] sm:$0x3f] %v2156
          %2166 = vst.msk [vmem:[#allocation3 + $0x98] sm:$0x3f] %vm2087, %v2151
          %2167 = vrot.lane.b32.xlu0 %v2076, 120
          %v2168 = vpop.permute.xlu0 %2167
          %2169 = vrot.lane.b32.xlu0 %v2077, 120
          %v2170 = vpop.permute.xlu0 %2169
          %2171 = vrot.lane.b32.xlu0 %v2078, 120
          %v2172 = vpop.permute.xlu0 %2171
          %2173 = vrot.lane.b32.xlu0 %v2079, 120
          %v2174 = vpop.permute.xlu0 %2173
          %2175 = vrot.lane.b32.xlu0 %v2080, 120
          %v2176 = vpop.permute.xlu0 %2175
          %vm2177 = vcmask 982016
          %v2178 = vsel %vm2177, %v2168, %v2170
          %v2179 = vsel %vm2177, %v2170, %v2172
          %v2180 = vsel %vm2177, %v2172, %v2174
          %v2181 = vsel %vm2177, %v2174, %v2176
          %2187 = vst [vmem:[#allocation3 + $0xa0] sm:$0x3f] %v2178
          %2188 = vst [vmem:[#allocation3 + $0xa8] sm:$0x3f] %v2179
          %2189 = vst [vmem:[#allocation3 + $0xb0] sm:$0x3f] %v2180
          %2190 = vst [vmem:[#allocation3 + $0xb8] sm:$0x3f] %v2181
          %2191 = vst.msk [vmem:[#allocation3 + $0xc0] sm:$0x3f] %vm2087, %v2176
          %2193 = vrot.lane.b32.xlu0 %v2076, 64
          %v2194 = vpop.permute.xlu0 %2193
          %2195 = vrot.lane.b32.xlu0 %v2077, 64
          %v2196 = vpop.permute.xlu0 %2195
          %2197 = vrot.lane.b32.xlu0 %v2078, 64
          %v2198 = vpop.permute.xlu0 %2197
          %2199 = vrot.lane.b32.xlu0 %v2079, 64
          %v2200 = vpop.permute.xlu0 %2199
          %2201 = vrot.lane.b32.xlu0 %v2080, 64
          %v2202 = vpop.permute.xlu0 %2201
          %2203 = vrot.lane.b32.xlu0 %v2081, 64
          %v2204 = vpop.permute.xlu0 %2203
          %v2205 = vsel %vm1097, %v2194, %v2196
          %v2206 = vsel %vm1097, %v2196, %v2198
          %v2207 = vsel %vm1097, %v2198, %v2200
          %v2208 = vsel %vm1097, %v2200, %v2202
          %v2209 = vsel %vm1097, %v2202, %v2204
          %2215 = vst [vmem:[#allocation3 + $0xc8] sm:$0x3f] %v2205
          %2216 = vst [vmem:[#allocation3 + $0xd0] sm:$0x3f] %v2206
          %2217 = vst [vmem:[#allocation3 + $0xd8] sm:$0x3f] %v2207
          %2218 = vst [vmem:[#allocation3 + $0xe0] sm:$0x3f] %v2208
          %2219 = vst.msk [vmem:[#allocation3 + $0xe8] sm:$0x3f] %vm2087, %v2209
          %2220 = vrot.lane.b32.xlu0 %v2076, 62
          %v2221 = vpop.permute.xlu0 %2220
          %2222 = vrot.lane.b32.xlu0 %v2077, 62
          %v2223 = vpop.permute.xlu0 %2222
          %2224 = vrot.lane.b32.xlu0 %v2078, 62
          %v2225 = vpop.permute.xlu0 %2224
          %2226 = vrot.lane.b32.xlu0 %v2079, 62
          %v2227 = vpop.permute.xlu0 %2226
          %2228 = vrot.lane.b32.xlu0 %v2080, 62
          %v2229 = vpop.permute.xlu0 %2228
          %2230 = vrot.lane.b32.xlu0 %v2081, 62
          %v2231 = vpop.permute.xlu0 %2230
          %v2232 = vsel %vm1173, %v2221, %v2223
          %v2233 = vsel %vm1173, %v2223, %v2225
          %v2234 = vsel %vm1173, %v2225, %v2227
          %v2235 = vsel %vm1173, %v2227, %v2229
          %v2236 = vsel %vm1173, %v2229, %v2231
          %2242 = vst [vmem:[#allocation3 + $0xf0] sm:$0x3f] %v2232
          %2243 = vst [vmem:[#allocation3 + $0xf8] sm:$0x3f] %v2233
          %2244 = vst [vmem:[#allocation3 + $0x100] sm:$0x3f] %v2234
          %2245 = vst [vmem:[#allocation3 + $0x108] sm:$0x3f] %v2235
          %2246 = vst.msk [vmem:[#allocation3 + $0x110] sm:$0x3f] %vm2087, %v2236
          %2247 = vrot.lane.b32.xlu0 %v2076, 60
          %v2248 = vpop.permute.xlu0 %2247
          %2249 = vrot.lane.b32.xlu0 %v2077, 60
          %v2250 = vpop.permute.xlu0 %2249
          %2251 = vrot.lane.b32.xlu0 %v2078, 60
          %v2252 = vpop.permute.xlu0 %2251
          %2253 = vrot.lane.b32.xlu0 %v2079, 60
          %v2254 = vpop.permute.xlu0 %2253
          %2255 = vrot.lane.b32.xlu0 %v2080, 60
          %v2256 = vpop.permute.xlu0 %2255
          %2257 = vrot.lane.b32.xlu0 %v2081, 60
          %v2258 = vpop.permute.xlu0 %2257
          %v2259 = vsel %vm1249, %v2248, %v2250
          %v2260 = vsel %vm1249, %v2250, %v2252
          %v2261 = vsel %vm1249, %v2252, %v2254
          %v2262 = vsel %vm1249, %v2254, %v2256
          %v2263 = vsel %vm1249, %v2256, %v2258
          %2269 = vst [vmem:[#allocation3 + $0x118] sm:$0x3f] %v2259
          %2270 = vst [vmem:[#allocation3 + $0x120] sm:$0x3f] %v2260
          %2271 = vst [vmem:[#allocation3 + $0x128] sm:$0x3f] %v2261
          %2272 = vst [vmem:[#allocation3 + $0x130] sm:$0x3f] %v2262
          %2273 = vst.msk [vmem:[#allocation3 + $0x138] sm:$0x3f] %vm2087, %v2263
          %2274 = vrot.lane.b32.xlu0 %v2076, 58
          %v2275 = vpop.permute.xlu0 %2274
          %2276 = vrot.lane.b32.xlu0 %v2077, 58
          %v2277 = vpop.permute.xlu0 %2276
          %2278 = vrot.lane.b32.xlu0 %v2078, 58
          %v2279 = vpop.permute.xlu0 %2278
          %2280 = vrot.lane.b32.xlu0 %v2079, 58
          %v2281 = vpop.permute.xlu0 %2280
          %2282 = vrot.lane.b32.xlu0 %v2080, 58
          %v2283 = vpop.permute.xlu0 %2282
          %2284 = vrot.lane.b32.xlu0 %v2081, 58
          %v2285 = vpop.permute.xlu0 %2284
          %vm2286 = vcmask 474112
          %v2287 = vsel %vm2286, %v2275, %v2277
          %v2288 = vsel %vm2286, %v2277, %v2279
          %v2289 = vsel %vm2286, %v2279, %v2281
          %v2290 = vsel %vm2286, %v2281, %v2283
          %v2291 = vsel %vm2286, %v2283, %v2285
          %2297 = vst [vmem:[#allocation3 + $0x140] sm:$0x3f] %v2287
          %2298 = vst [vmem:[#allocation3 + $0x148] sm:$0x3f] %v2288
          %2299 = vst [vmem:[#allocation3 + $0x150] sm:$0x3f] %v2289
          %2300 = vst [vmem:[#allocation3 + $0x158] sm:$0x3f] %v2290
          %2301 = vst.msk [vmem:[#allocation3 + $0x160] sm:$0x3f] %vm2087, %v2291
          %2302 = vrot.lane.b32.xlu0 %v2076, 56
          %v2303 = vpop.permute.xlu0 %2302
          %2304 = vrot.lane.b32.xlu0 %v2077, 56
          %v2305 = vpop.permute.xlu0 %2304
          %2306 = vrot.lane.b32.xlu0 %v2078, 56
          %v2307 = vpop.permute.xlu0 %2306
          %2308 = vrot.lane.b32.xlu0 %v2079, 56
          %v2309 = vpop.permute.xlu0 %2308
          %2310 = vrot.lane.b32.xlu0 %v2080, 56
          %v2311 = vpop.permute.xlu0 %2310
          %2312 = vrot.lane.b32.xlu0 %v2081, 56
          %v2313 = vpop.permute.xlu0 %2312
          %vm2314 = vcmask 457728
          %v2315 = vsel %vm2314, %v2303, %v2305
          %v2316 = vsel %vm2314, %v2305, %v2307
          %v2317 = vsel %vm2314, %v2307, %v2309
          %v2318 = vsel %vm2314, %v2309, %v2311
          %v2319 = vsel %vm2314, %v2311, %v2313
          %2325 = vst [vmem:[#allocation3 + $0x168] sm:$0x3f] %v2315
          %2326 = vst [vmem:[#allocation3 + $0x170] sm:$0x3f] %v2316
          %2327 = vst [vmem:[#allocation3 + $0x178] sm:$0x3f] %v2317
          %2328 = vst [vmem:[#allocation3 + $0x180] sm:$0x3f] %v2318
          %2329 = vst.msk [vmem:[#allocation3 + $0x188] sm:$0x3f] %vm2087, %v2319
          %2330 = vst [vmem:[#allocation3 + $0x190] sm:$0x3f] %v2077
          %2331 = vst [vmem:[#allocation3 + $0x198] sm:$0x3f] %v2078
          %2332 = vst [vmem:[#allocation3 + $0x1a0] sm:$0x3f] %v2079
          %2333 = vst [vmem:[#allocation3 + $0x1a8] sm:$0x3f] %v2080
          %2334 = vst.msk [vmem:[#allocation3 + $0x1b0] sm:$0x3f] %vm2087, %v2081
          %2335 = vrot.lane.b32.xlu0 %v2081, 126
          %v2336 = vpop.permute.xlu0 %2335
          %v2337 = vsel %vm800, %v2103, %v2336
          %2340 = vst [vmem:[#allocation3 + $0x1b8] sm:$0x3f] %v2105
          %2341 = vst [vmem:[#allocation3 + $0x1c0] sm:$0x3f] %v2106
          %2342 = vst [vmem:[#allocation3 + $0x1c8] sm:$0x3f] %v2107
          %2343 = vst [vmem:[#allocation3 + $0x1d0] sm:$0x3f] %v2337
          %2344 = vst.msk [vmem:[#allocation3 + $0x1d8] sm:$0x3f] %vm2087, %v2336
          %2345 = vrot.lane.b32.xlu0 %v2081, 124
          %v2346 = vpop.permute.xlu0 %2345
          %v2347 = vsel %vm424, %v2127, %v2346
          %2350 = vst [vmem:[#allocation3 + $0x1e0] sm:$0x3f] %v2129
          %2351 = vst [vmem:[#allocation3 + $0x1e8] sm:$0x3f] %v2130
          %2352 = vst [vmem:[#allocation3 + $0x1f0] sm:$0x3f] %v2131
          %2353 = vst [vmem:[#allocation3 + $0x1f8] sm:$0x3f] %v2347
          %2354 = vst.msk [vmem:[#allocation3 + $0x200] sm:$0x3f] %vm2087, %v2346
          %2355 = vrot.lane.b32.xlu0 %v2081, 122
          %v2356 = vpop.permute.xlu0 %2355
          %v2357 = vsel %vm2152, %v2151, %v2356
          %2360 = vst [vmem:[#allocation3 + $0x208] sm:$0x3f] %v2154
          %2361 = vst [vmem:[#allocation3 + $0x210] sm:$0x3f] %v2155
          %2362 = vst [vmem:[#allocation3 + $0x218] sm:$0x3f] %v2156
          %2363 = vst [vmem:[#allocation3 + $0x220] sm:$0x3f] %v2357
          %2364 = vst.msk [vmem:[#allocation3 + $0x228] sm:$0x3f] %vm2087, %v2356
          %2365 = vrot.lane.b32.xlu0 %v2081, 120
          %v2366 = vpop.permute.xlu0 %2365
          %v2367 = vsel %vm2177, %v2176, %v2366
          %2370 = vst [vmem:[#allocation3 + $0x230] sm:$0x3f] %v2179
          %2371 = vst [vmem:[#allocation3 + $0x238] sm:$0x3f] %v2180
          %2372 = vst [vmem:[#allocation3 + $0x240] sm:$0x3f] %v2181
          %2373 = vst [vmem:[#allocation3 + $0x248] sm:$0x3f] %v2367
          %2374 = vst.msk [vmem:[#allocation3 + $0x250] sm:$0x3f] %vm2087, %v2366
          %2376 = vrot.lane.b32.xlu0 %v2082, 64
          %v2377 = vpop.permute.xlu0 %2376
          %v2378 = vsel %vm1097, %v2204, %v2377
          %2380 = vst [vmem:[#allocation3 + $0x258] sm:$0x3f] %v2206
          %2381 = vst [vmem:[#allocation3 + $0x260] sm:$0x3f] %v2207
          %2382 = vst [vmem:[#allocation3 + $0x268] sm:$0x3f] %v2208
          %2383 = vst [vmem:[#allocation3 + $0x270] sm:$0x3f] %v2209
          %2384 = vst.msk [vmem:[#allocation3 + $0x278] sm:$0x3f] %vm2087, %v2378
          %2385 = vrot.lane.b32.xlu0 %v2082, 62
          %v2386 = vpop.permute.xlu0 %2385
          %v2387 = vsel %vm1173, %v2231, %v2386
          %2389 = vst [vmem:[#allocation3 + $0x280] sm:$0x3f] %v2233
          %2390 = vst [vmem:[#allocation3 + $0x288] sm:$0x3f] %v2234
          %2391 = vst [vmem:[#allocation3 + $0x290] sm:$0x3f] %v2235
          %2392 = vst [vmem:[#allocation3 + $0x298] sm:$0x3f] %v2236
          %2393 = vst.msk [vmem:[#allocation3 + $0x2a0] sm:$0x3f] %vm2087, %v2387
          %2394 = vrot.lane.b32.xlu0 %v2082, 60
          %v2395 = vpop.permute.xlu0 %2394
          %v2396 = vsel %vm1249, %v2258, %v2395
          %2398 = vst [vmem:[#allocation3 + $0x2a8] sm:$0x3f] %v2260
          %2399 = vst [vmem:[#allocation3 + $0x2b0] sm:$0x3f] %v2261
          %2400 = vst [vmem:[#allocation3 + $0x2b8] sm:$0x3f] %v2262
          %2401 = vst [vmem:[#allocation3 + $0x2c0] sm:$0x3f] %v2263
          %2402 = vst.msk [vmem:[#allocation3 + $0x2c8] sm:$0x3f] %vm2087, %v2396
          %2403 = vrot.lane.b32.xlu0 %v2082, 58
          %v2404 = vpop.permute.xlu0 %2403
          %v2405 = vsel %vm2286, %v2285, %v2404
          %2407 = vst [vmem:[#allocation3 + $0x2d0] sm:$0x3f] %v2288
          %2408 = vst [vmem:[#allocation3 + $0x2d8] sm:$0x3f] %v2289
          %2409 = vst [vmem:[#allocation3 + $0x2e0] sm:$0x3f] %v2290
          %2410 = vst [vmem:[#allocation3 + $0x2e8] sm:$0x3f] %v2291
          %2411 = vst.msk [vmem:[#allocation3 + $0x2f0] sm:$0x3f] %vm2087, %v2405
          %2412 = vrot.lane.b32.xlu0 %v2082, 56
          %v2413 = vpop.permute.xlu0 %2412
          %v2414 = vsel %vm2314, %v2313, %v2413
          %2416 = vst [vmem:[#allocation3 + $0x2f8] sm:$0x3f] %v2316
          %2417 = vst [vmem:[#allocation3 + $0x300] sm:$0x3f] %v2317
          %2418 = vst [vmem:[#allocation3 + $0x308] sm:$0x3f] %v2318
          %2419 = vst [vmem:[#allocation3 + $0x310] sm:$0x3f] %v2319
          %2420 = vst.msk [vmem:[#allocation3 + $0x318] sm:$0x3f] %vm2087, %v2414
          %2421 = vst [vmem:[#allocation3 + $0x320] sm:$0x3f] %v2078
          %2422 = vst [vmem:[#allocation3 + $0x328] sm:$0x3f] %v2079
          %2423 = vst [vmem:[#allocation3 + $0x330] sm:$0x3f] %v2080
          %2424 = vst [vmem:[#allocation3 + $0x338] sm:$0x3f] %v2081
          %2425 = vst.msk [vmem:[#allocation3 + $0x340] sm:$0x3f] %vm2087, %v2082
          %2426 = vrot.lane.b32.xlu0 %v2082, 126
          %v2427 = vpop.permute.xlu0 %2426
          %v2428 = vsel %vm800, %v2336, %v2427
          %2431 = vst [vmem:[#allocation3 + $0x348] sm:$0x3f] %v2106
          %2432 = vst [vmem:[#allocation3 + $0x350] sm:$0x3f] %v2107
          %2433 = vst [vmem:[#allocation3 + $0x358] sm:$0x3f] %v2337
          %2434 = vst [vmem:[#allocation3 + $0x360] sm:$0x3f] %v2428
          %2435 = vst.msk [vmem:[#allocation3 + $0x368] sm:$0x3f] %vm2087, %v2427
          %2436 = vrot.lane.b32.xlu0 %v2082, 124
          %v2437 = vpop.permute.xlu0 %2436
          %v2438 = vsel %vm424, %v2346, %v2437
          %2441 = vst [vmem:[#allocation3 + $0x370] sm:$0x3f] %v2130
          %2442 = vst [vmem:[#allocation3 + $0x378] sm:$0x3f] %v2131
          %2443 = vst [vmem:[#allocation3 + $0x380] sm:$0x3f] %v2347
          %2444 = vst [vmem:[#allocation3 + $0x388] sm:$0x3f] %v2438
          %2445 = vst.msk [vmem:[#allocation3 + $0x390] sm:$0x3f] %vm2087, %v2437
          %2446 = vrot.lane.b32.xlu0 %v2082, 122
          %v2447 = vpop.permute.xlu0 %2446
          %v2448 = vsel %vm2152, %v2356, %v2447
          %2451 = vst [vmem:[#allocation3 + $0x398] sm:$0x3f] %v2155
          %2452 = vst [vmem:[#allocation3 + $0x3a0] sm:$0x3f] %v2156
          %2453 = vst [vmem:[#allocation3 + $0x3a8] sm:$0x3f] %v2357
          %2454 = vst [vmem:[#allocation3 + $0x3b0] sm:$0x3f] %v2448
          %2455 = vst.msk [vmem:[#allocation3 + $0x3b8] sm:$0x3f] %vm2087, %v2447
          %2456 = vrot.lane.b32.xlu0 %v2082, 120
          %v2457 = vpop.permute.xlu0 %2456
          %v2458 = vsel %vm2177, %v2366, %v2457
          %2461 = vst [vmem:[#allocation3 + $0x3c0] sm:$0x3f] %v2180
          %2462 = vst [vmem:[#allocation3 + $0x3c8] sm:$0x3f] %v2181
          %2463 = vst [vmem:[#allocation3 + $0x3d0] sm:$0x3f] %v2367
          %2464 = vst [vmem:[#allocation3 + $0x3d8] sm:$0x3f] %v2458
          %2465 = vst.msk [vmem:[#allocation3 + $0x3e0] sm:$0x3f] %vm2087, %v2457
          %v2466 = vld [vmem:[%s3] sm:$0xff]
          %v2467 = vld [vmem:[%s3 + $0x8] sm:$0xff]
          %v2468 = vld [vmem:[%s3 + $0x10] sm:$0xff]
          %v2469 = vld [vmem:[%s3 + $0x18] sm:$0xff]
          %v2470 = vld [vmem:[#allocation3] sm:$0xff]
          %v2471 = vld [vmem:[#allocation3 + $0x8] sm:$0xff]
          %v2472 = vld [vmem:[#allocation3 + $0x10] sm:$0xff]
          %v2473 = vld [vmem:[#allocation3 + $0x18] sm:$0xff]
          %v2474 = vld [vmem:[#allocation3 + $0x20] sm:$0xff]
          %v2475 = vld [vmem:[#allocation3 + $0x28] sm:$0xff]
          %v2476 = vld [vmem:[#allocation3 + $0x30] sm:$0xff]
          %v2477 = vld [vmem:[#allocation3 + $0x38] sm:$0xff]
          %v2478 = vld [vmem:[#allocation3 + $0x40] sm:$0xff]
          %v2479 = vld [vmem:[#allocation3 + $0x48] sm:$0xff]
          %v2480 = vld [vmem:[#allocation3 + $0x50] sm:$0xff]
          %v2481 = vld [vmem:[#allocation3 + $0x58] sm:$0xff]
          %v2482 = vld [vmem:[#allocation3 + $0x60] sm:$0xff]
          %v2483 = vld [vmem:[#allocation3 + $0x68] sm:$0xff]
          %v2484 = vld [vmem:[#allocation3 + $0x70] sm:$0xff]
          %v2485 = vld [vmem:[#allocation3 + $0x78] sm:$0xff]
          %v2486 = vld [vmem:[#allocation3 + $0x80] sm:$0xff]
          %v2487 = vld [vmem:[#allocation3 + $0x88] sm:$0xff]
          %v2488 = vld [vmem:[#allocation3 + $0x90] sm:$0xff]
          %v2489 = vld [vmem:[#allocation3 + $0x98] sm:$0xff]
          %v2490 = vld [vmem:[#allocation3 + $0xa0] sm:$0xff]
          %v2491 = vld [vmem:[#allocation3 + $0xa8] sm:$0xff]
          %v2492 = vld [vmem:[#allocation3 + $0xb0] sm:$0xff]
          %v2493 = vld [vmem:[#allocation3 + $0xb8] sm:$0xff]
          %v2494 = vld [vmem:[#allocation3 + $0xc0] sm:$0xff]
          %v2495 = vld [vmem:[#allocation3 + $0xc8] sm:$0xff]
          %v2496 = vld [vmem:[#allocation3 + $0xd0] sm:$0xff]
          %v2497 = vld [vmem:[#allocation3 + $0xd8] sm:$0xff]
          %v2498 = vld [vmem:[#allocation3 + $0xe0] sm:$0xff]
          %v2499 = vld [vmem:[#allocation3 + $0xe8] sm:$0xff]
          %v2500 = vld [vmem:[#allocation3 + $0xf0] sm:$0xff]
          %v2501 = vld [vmem:[#allocation3 + $0xf8] sm:$0xff]
          %v2502 = vld [vmem:[#allocation3 + $0x100] sm:$0xff]
          %v2503 = vld [vmem:[#allocation3 + $0x108] sm:$0xff]
          %v2504 = vld [vmem:[#allocation3 + $0x110] sm:$0xff]
          %v2505 = vld [vmem:[#allocation3 + $0x118] sm:$0xff]
          %v2506 = vld [vmem:[#allocation3 + $0x120] sm:$0xff]
          %v2507 = vld [vmem:[#allocation3 + $0x128] sm:$0xff]
          %v2508 = vld [vmem:[#allocation3 + $0x130] sm:$0xff]
          %v2509 = vld [vmem:[#allocation3 + $0x138] sm:$0xff]
          %v2510 = vld [vmem:[#allocation3 + $0x140] sm:$0xff]
          %v2511 = vld [vmem:[#allocation3 + $0x148] sm:$0xff]
          %v2512 = vld [vmem:[#allocation3 + $0x150] sm:$0xff]
          %v2513 = vld [vmem:[#allocation3 + $0x158] sm:$0xff]
          %v2514 = vld [vmem:[#allocation3 + $0x160] sm:$0xff]
          %v2515 = vld [vmem:[#allocation3 + $0x168] sm:$0xff]
          %v2516 = vld [vmem:[#allocation3 + $0x170] sm:$0xff]
          %v2517 = vld [vmem:[#allocation3 + $0x178] sm:$0xff]
          %v2518 = vld [vmem:[#allocation3 + $0x180] sm:$0xff]
          %v2519 = vld [vmem:[#allocation3 + $0x188] sm:$0xff]
          %v2520 = vld [vmem:[#allocation3 + $0x190] sm:$0xff]
          %v2521 = vld [vmem:[#allocation3 + $0x198] sm:$0xff]
          %v2522 = vld [vmem:[#allocation3 + $0x1a0] sm:$0xff]
          %v2523 = vld [vmem:[#allocation3 + $0x1a8] sm:$0xff]
          %v2524 = vld [vmem:[#allocation3 + $0x1b0] sm:$0xff]
          %v2525 = vld [vmem:[#allocation3 + $0x1b8] sm:$0xff]
          %v2526 = vld [vmem:[#allocation3 + $0x1c0] sm:$0xff]
          %v2527 = vld [vmem:[#allocation3 + $0x1c8] sm:$0xff]
          %v2528 = vld [vmem:[#allocation3 + $0x1d0] sm:$0xff]
          %v2529 = vld [vmem:[#allocation3 + $0x1d8] sm:$0xff]
          %v2530 = vld [vmem:[#allocation3 + $0x1e0] sm:$0xff]
          %v2531 = vld [vmem:[#allocation3 + $0x1e8] sm:$0xff]
          %v2532 = vld [vmem:[#allocation3 + $0x1f0] sm:$0xff]
          %v2533 = vld [vmem:[#allocation3 + $0x1f8] sm:$0xff]
          %v2534 = vld [vmem:[#allocation3 + $0x200] sm:$0xff]
          %v2535 = vld [vmem:[#allocation3 + $0x208] sm:$0xff]
          %v2536 = vld [vmem:[#allocation3 + $0x210] sm:$0xff]
          %v2537 = vld [vmem:[#allocation3 + $0x218] sm:$0xff]
          %v2538 = vld [vmem:[#allocation3 + $0x220] sm:$0xff]
          %v2539 = vld [vmem:[#allocation3 + $0x228] sm:$0xff]
          %v2540 = vld [vmem:[#allocation3 + $0x230] sm:$0xff]
          %v2541 = vld [vmem:[#allocation3 + $0x238] sm:$0xff]
          %v2542 = vld [vmem:[#allocation3 + $0x240] sm:$0xff]
          %v2543 = vld [vmem:[#allocation3 + $0x248] sm:$0xff]
          %v2544 = vld [vmem:[#allocation3 + $0x250] sm:$0xff]
          %v2545 = vld [vmem:[#allocation3 + $0x258] sm:$0xff]
          %v2546 = vld [vmem:[#allocation3 + $0x260] sm:$0xff]
          %v2547 = vld [vmem:[#allocation3 + $0x268] sm:$0xff]
          %v2548 = vld [vmem:[#allocation3 + $0x270] sm:$0xff]
          %v2549 = vld [vmem:[#allocation3 + $0x278] sm:$0xff]
          %v2550 = vld [vmem:[#allocation3 + $0x280] sm:$0xff]
          %v2551 = vld [vmem:[#allocation3 + $0x288] sm:$0xff]
          %v2552 = vld [vmem:[#allocation3 + $0x290] sm:$0xff]
          %v2553 = vld [vmem:[#allocation3 + $0x298] sm:$0xff]
          %v2554 = vld [vmem:[#allocation3 + $0x2a0] sm:$0xff]
          %v2555 = vld [vmem:[#allocation3 + $0x2a8] sm:$0xff]
          %v2556 = vld [vmem:[#allocation3 + $0x2b0] sm:$0xff]
          %v2557 = vld [vmem:[#allocation3 + $0x2b8] sm:$0xff]
          %v2558 = vld [vmem:[#allocation3 + $0x2c0] sm:$0xff]
          %v2559 = vld [vmem:[#allocation3 + $0x2c8] sm:$0xff]
          %v2560 = vld [vmem:[#allocation3 + $0x2d0] sm:$0xff]
          %v2561 = vld [vmem:[#allocation3 + $0x2d8] sm:$0xff]
          %v2562 = vld [vmem:[#allocation3 + $0x2e0] sm:$0xff]
          %v2563 = vld [vmem:[#allocation3 + $0x2e8] sm:$0xff]
          %v2564 = vld [vmem:[#allocation3 + $0x2f0] sm:$0xff]
          %v2565 = vld [vmem:[#allocation3 + $0x2f8] sm:$0xff]
          %v2566 = vld [vmem:[#allocation3 + $0x300] sm:$0xff]
          %v2567 = vld [vmem:[#allocation3 + $0x308] sm:$0xff]
          %v2568 = vld [vmem:[#allocation3 + $0x310] sm:$0xff]
          %v2569 = vld [vmem:[#allocation3 + $0x318] sm:$0xff]
          %v2570 = vld [vmem:[#allocation3 + $0x320] sm:$0xff]
          %v2571 = vld [vmem:[#allocation3 + $0x328] sm:$0xff]
          %v2572 = vld [vmem:[#allocation3 + $0x330] sm:$0xff]
          %v2573 = vld [vmem:[#allocation3 + $0x338] sm:$0xff]
          %v2574 = vld [vmem:[#allocation3 + $0x340] sm:$0xff]
          %v2575 = vld [vmem:[#allocation3 + $0x348] sm:$0xff]
          %v2576 = vld [vmem:[#allocation3 + $0x350] sm:$0xff]
          %v2577 = vld [vmem:[#allocation3 + $0x358] sm:$0xff]
          %v2578 = vld [vmem:[#allocation3 + $0x360] sm:$0xff]
          %v2579 = vld [vmem:[#allocation3 + $0x368] sm:$0xff]
          %v2580 = vld [vmem:[#allocation3 + $0x370] sm:$0xff]
          %v2581 = vld [vmem:[#allocation3 + $0x378] sm:$0xff]
          %v2582 = vld [vmem:[#allocation3 + $0x380] sm:$0xff]
          %v2583 = vld [vmem:[#allocation3 + $0x388] sm:$0xff]
          %v2584 = vld [vmem:[#allocation3 + $0x390] sm:$0xff]
          %v2585 = vld [vmem:[#allocation3 + $0x398] sm:$0xff]
          %v2586 = vld [vmem:[#allocation3 + $0x3a0] sm:$0xff]
          %v2587 = vld [vmem:[#allocation3 + $0x3a8] sm:$0xff]
          %v2588 = vld [vmem:[#allocation3 + $0x3b0] sm:$0xff]
          %v2589 = vld [vmem:[#allocation3 + $0x3b8] sm:$0xff]
          %v2590 = vld [vmem:[#allocation3 + $0x3c0] sm:$0xff]
          %v2591 = vld [vmem:[#allocation3 + $0x3c8] sm:$0xff]
          %v2592 = vld [vmem:[#allocation3 + $0x3d0] sm:$0xff]
          %v2593 = vld [vmem:[#allocation3 + $0x3d8] sm:$0xff]
          %v2594 = vld [vmem:[#allocation3 + $0x3e0] sm:$0xff]
          %v2596 = vsel %vm1694, %v2467, 0
          %v2599 = vsel %vm1694, %v2469, 0
          %2601 = vmatprep.subr.mxu0 %v2471
          %2602 = vmatpush1.msra.mxu0 %v2470
          %2603 = vmatprep.subr.mxu0 %v2476
          %2604 = vmatpush1.msra.mxu0 %v2475
          %2605 = vmatprep.subr.mxu0 %v2481
          %2606 = vmatpush1.msra.mxu0 %v2480
          %2607 = vmatprep.subr.mxu0 %v2486
          %2608 = vmatpush1.msra.mxu0 %v2485
          %2609 = vmatprep.subr.mxu0 %v2491
          %2610 = vmatpush1.msra.mxu0 %v2490
          %2611 = vmatprep.subr.mxu0 %v2496
          %2612 = vmatpush1.msra.mxu0 %v2495
          %2613 = vmatprep.subr.mxu0 %v2501
          %2614 = vmatpush1.msra.mxu0 %v2500
          %2615 = vmatprep.subr.mxu0 %v2506
          %2616 = vmatpush1.msra.mxu0 %v2505
          %2617 = vmatprep.subr.mxu0 %v2511
          %2618 = vmatpush1.msra.mxu0 %v2510
          %2619 = vmatprep.subr.mxu0 %v2516
          %2620 = vmatpush1.msra.mxu0 %v2515
          %2621 = vmatprep.subr.mxu0 %v2521
          %2622 = vmatpush1.msra.mxu0 %v2520
          %2623 = vmatprep.subr.mxu0 %v2526
          %2624 = vmatpush1.msra.mxu0 %v2525
          %2625 = vmatprep.subr.mxu0 %v2531
          %2626 = vmatpush1.msra.mxu0 %v2530
          %2627 = vmatprep.subr.mxu0 %v2536
          %2628 = vmatpush1.msra.mxu0 %v2535
          %2629 = vmatprep.subr.mxu0 %v2541
          %2630 = vmatpush1.msra.mxu0 %v2540
          %2631 = vmatprep.subr.mxu0 %v2546
          %2632 = vmatpush1.msra.mxu0 %v2545
          %2633 = vmatprep.subr.mxu0 %v2551
          %2634 = vmatpush1.msra.mxu0 %v2550
          %2635 = vmatprep.subr.mxu0 %v2556
          %2636 = vmatpush1.msra.mxu0 %v2555
          %2637 = vmatprep.subr.mxu0 %v2561
          %2638 = vmatpush1.msra.mxu0 %v2560
          %2639 = vmatprep.subr.mxu0 %v2566
          %2640 = vmatpush1.msra.mxu0 %v2565
          %2641 = vmatprep.subr.mxu0 %v2571
          %2642 = vmatpush1.msra.mxu0 %v2570
          %2643 = vmatprep.subr.mxu0 %v2576
          %2644 = vmatpush1.msra.mxu0 %v2575
          %2645 = vmatprep.subr.mxu0 %v2581
          %2646 = vmatpush1.msra.mxu0 %v2580
          %2647 = vmatprep.subr.mxu0 %v2586
          %2648 = vmatpush1.msra.mxu0 %v2585
          %2649 = vmatprep.subr.mxu0 %v2591
          %2650 = vmatpush1.msra.mxu0 %v2590
          %2651 = vmatprep.subr.mxu0 0.0
          %2652 = vmatpush1.msra.mxu0 0.0
          %2653 = vmatprep.subr.mxu0 0.0
          %2654 = vmatpush1.msra.mxu0 0.0
          %2655 = vmatprep.subr.mxu0 0.0
          %2656 = vmatpush1.msra.mxu0 0.0
          %2657 = vmatprep.subr.mxu0 0.0
          %2658 = vmatpush1.msra.mxu0 0.0
          %2659 = vmatprep.subr.mxu0 0.0
          %2660 = vmatpush1.msra.mxu0 0.0
          %2661 = vmatprep.subr.mxu0 0.0
          %2662 = vmatpush1.msra.mxu0 0.0
          %2663 = vmatprep.subr.mxu0 0.0
          %2664 = vmatpush1.msra.mxu0 0.0
          %2665 = vmatprep.mubr.f32.mxu0 %v2596
          %2666 = vmatmul.mubr.f32.gmra.mrb[0].mxu0 %v2466
          %v2667 = vpop.f32.mrb[0].mxu0
          %v2668 = vadd.f32 0.0, %v2667
          %v2669 = vpop.f32.mrb[0].mxu0
          %v2670 = vadd.f32 0.0, %v2669
          %2671 = vmatprep.mubr.f32.mxu0 %v2599
          %2672 = vmatmul.mubr.f32.gmra.mrb[0].mxu0 %v2468
          %v2673 = vpop.f32.mrb[0].mxu0
          %v2674 = vadd.f32 0.0, %v2673
          %v2675 = vpop.f32.mrb[0].mxu0
          %v2676 = vadd.f32 0.0, %v2675
          %2677 = vdwg.mxu0
          %2678 = vmatprep.subr.mxu0 %v2473
          %2679 = vmatpush1.msra.mxu0 %v2472
          %2680 = vmatprep.subr.mxu0 %v2478
          %2681 = vmatpush1.msra.mxu0 %v2477
          %2682 = vmatprep.subr.mxu0 %v2483
          %2683 = vmatpush1.msra.mxu0 %v2482
          %2684 = vmatprep.subr.mxu0 %v2488
          %2685 = vmatpush1.msra.mxu0 %v2487
          %2686 = vmatprep.subr.mxu0 %v2493
          %2687 = vmatpush1.msra.mxu0 %v2492
          %2688 = vmatprep.subr.mxu0 %v2498
          %2689 = vmatpush1.msra.mxu0 %v2497
          %2690 = vmatprep.subr.mxu0 %v2503
          %2691 = vmatpush1.msra.mxu0 %v2502
          %2692 = vmatprep.subr.mxu0 %v2508
          %2693 = vmatpush1.msra.mxu0 %v2507
          %2694 = vmatprep.subr.mxu0 %v2513
          %2695 = vmatpush1.msra.mxu0 %v2512
          %2696 = vmatprep.subr.mxu0 %v2518
          %2697 = vmatpush1.msra.mxu0 %v2517
          %2698 = vmatprep.subr.mxu0 %v2523
          %2699 = vmatpush1.msra.mxu0 %v2522
          %2700 = vmatprep.subr.mxu0 %v2528
          %2701 = vmatpush1.msra.mxu0 %v2527
          %2702 = vmatprep.subr.mxu0 %v2533
          %2703 = vmatpush1.msra.mxu0 %v2532
          %2704 = vmatprep.subr.mxu0 %v2538
          %2705 = vmatpush1.msra.mxu0 %v2537
          %2706 = vmatprep.subr.mxu0 %v2543
          %2707 = vmatpush1.msra.mxu0 %v2542
          %2708 = vmatprep.subr.mxu0 %v2548
          %2709 = vmatpush1.msra.mxu0 %v2547
          %2710 = vmatprep.subr.mxu0 %v2553
          %2711 = vmatpush1.msra.mxu0 %v2552
          %2712 = vmatprep.subr.mxu0 %v2558
          %2713 = vmatpush1.msra.mxu0 %v2557
          %2714 = vmatprep.subr.mxu0 %v2563
          %2715 = vmatpush1.msra.mxu0 %v2562
          %2716 = vmatprep.subr.mxu0 %v2568
          %2717 = vmatpush1.msra.mxu0 %v2567
          %2718 = vmatprep.subr.mxu0 %v2573
          %2719 = vmatpush1.msra.mxu0 %v2572
          %2720 = vmatprep.subr.mxu0 %v2578
          %2721 = vmatpush1.msra.mxu0 %v2577
          %2722 = vmatprep.subr.mxu0 %v2583
          %2723 = vmatpush1.msra.mxu0 %v2582
          %2724 = vmatprep.subr.mxu0 %v2588
          %2725 = vmatpush1.msra.mxu0 %v2587
          %2726 = vmatprep.subr.mxu0 %v2593
          %2727 = vmatpush1.msra.mxu0 %v2592
          %2728 = vmatprep.subr.mxu0 0.0
          %2729 = vmatpush1.msra.mxu0 0.0
          %2730 = vmatprep.subr.mxu0 0.0
          %2731 = vmatpush1.msra.mxu0 0.0
          %2732 = vmatprep.subr.mxu0 0.0
          %2733 = vmatpush1.msra.mxu0 0.0
          %2734 = vmatprep.subr.mxu0 0.0
          %2735 = vmatpush1.msra.mxu0 0.0
          %2736 = vmatprep.subr.mxu0 0.0
          %2737 = vmatpush1.msra.mxu0 0.0
          %2738 = vmatprep.subr.mxu0 0.0
          %2739 = vmatpush1.msra.mxu0 0.0
          %2740 = vmatprep.subr.mxu0 0.0
          %2741 = vmatpush1.msra.mxu0 0.0
          %2742 = vmatprep.mubr.f32.mxu0 %v2596
          %2743 = vmatmul.mubr.f32.gmra.mrb[0].mxu0 %v2466
          %v2744 = vpop.f32.mrb[0].mxu0
          %v2745 = vadd.f32 0.0, %v2744
          %v2746 = vpop.f32.mrb[0].mxu0
          %v2747 = vadd.f32 0.0, %v2746
          %2748 = vmatprep.mubr.f32.mxu0 %v2599
          %2749 = vmatmul.mubr.f32.gmra.mrb[0].mxu0 %v2468
          %v2750 = vpop.f32.mrb[0].mxu0
          %v2751 = vadd.f32 0.0, %v2750
          %v2752 = vpop.f32.mrb[0].mxu0
          %v2753 = vadd.f32 0.0, %v2752
          %2754 = vdwg.mxu0
          %2755 = vmatprep.subr.mxu0 0.0
          %2756 = vmatpush1.msra.mxu0 %v2474
          %2757 = vmatprep.subr.mxu0 0.0
          %2758 = vmatpush1.msra.mxu0 %v2479
          %2759 = vmatprep.subr.mxu0 0.0
          %2760 = vmatpush1.msra.mxu0 %v2484
          %2761 = vmatprep.subr.mxu0 0.0
          %2762 = vmatpush1.msra.mxu0 %v2489
          %2763 = vmatprep.subr.mxu0 0.0
          %2764 = vmatpush1.msra.mxu0 %v2494
          %2765 = vmatprep.subr.mxu0 0.0
          %2766 = vmatpush1.msra.mxu0 %v2499
          %2767 = vmatprep.subr.mxu0 0.0
          %2768 = vmatpush1.msra.mxu0 %v2504
          %2769 = vmatprep.subr.mxu0 0.0
          %2770 = vmatpush1.msra.mxu0 %v2509
          %2771 = vmatprep.subr.mxu0 0.0
          %2772 = vmatpush1.msra.mxu0 %v2514
          %2773 = vmatprep.subr.mxu0 0.0
          %2774 = vmatpush1.msra.mxu0 %v2519
          %2775 = vmatprep.subr.mxu0 0.0
          %2776 = vmatpush1.msra.mxu0 %v2524
          %2777 = vmatprep.subr.mxu0 0.0
          %2778 = vmatpush1.msra.mxu0 %v2529
          %2779 = vmatprep.subr.mxu0 0.0
          %2780 = vmatpush1.msra.mxu0 %v2534
          %2781 = vmatprep.subr.mxu0 0.0
          %2782 = vmatpush1.msra.mxu0 %v2539
          %2783 = vmatprep.subr.mxu0 0.0
          %2784 = vmatpush1.msra.mxu0 %v2544
          %2785 = vmatprep.subr.mxu0 0.0
          %2786 = vmatpush1.msra.mxu0 %v2549
          %2787 = vmatprep.subr.mxu0 0.0
          %2788 = vmatpush1.msra.mxu0 %v2554
          %2789 = vmatprep.subr.mxu0 0.0
          %2790 = vmatpush1.msra.mxu0 %v2559
          %2791 = vmatprep.subr.mxu0 0.0
          %2792 = vmatpush1.msra.mxu0 %v2564
          %2793 = vmatprep.subr.mxu0 0.0
          %2794 = vmatpush1.msra.mxu0 %v2569
          %2795 = vmatprep.subr.mxu0 0.0
          %2796 = vmatpush1.msra.mxu0 %v2574
          %2797 = vmatprep.subr.mxu0 0.0
          %2798 = vmatpush1.msra.mxu0 %v2579
          %2799 = vmatprep.subr.mxu0 0.0
          %2800 = vmatpush1.msra.mxu0 %v2584
          %2801 = vmatprep.subr.mxu0 0.0
          %2802 = vmatpush1.msra.mxu0 %v2589
          %2803 = vmatprep.subr.mxu0 0.0
          %2804 = vmatpush1.msra.mxu0 %v2594
          %2805 = vmatprep.subr.mxu0 0.0
          %2806 = vmatpush1.msra.mxu0 0.0
          %2807 = vmatprep.subr.mxu0 0.0
          %2808 = vmatpush1.msra.mxu0 0.0
          %2809 = vmatprep.subr.mxu0 0.0
          %2810 = vmatpush1.msra.mxu0 0.0
          %2811 = vmatprep.subr.mxu0 0.0
          %2812 = vmatpush1.msra.mxu0 0.0
          %2813 = vmatprep.subr.mxu0 0.0
          %2814 = vmatpush1.msra.mxu0 0.0
          %2815 = vmatprep.subr.mxu0 0.0
          %2816 = vmatpush1.msra.mxu0 0.0
          %2817 = vmatprep.subr.mxu0 0.0
          %2818 = vmatpush1.msra.mxu0 0.0
          %2819 = vmatprep.mubr.f32.mxu0 %v2596
          %2820 = vmatmul.mubr.f32.gmra.mrb[0].mxu0 %v2466
          %v2821 = vpop.f32.mrb[0].mxu0
          %v2822 = vadd.f32 0.0, %v2821
          %v2823 = vpop.f32.mrb[0].mxu0
          %2824 = vmatprep.mubr.f32.mxu0 %v2599
          %2825 = vmatmul.mubr.f32.gmra.mrb[0].mxu0 %v2468
          %v2826 = vpop.f32.mrb[0].mxu0
          %v2827 = vadd.f32 0.0, %v2826
          %v2828 = vpop.f32.mrb[0].mxu0
          %2829 = vdwg.mxu0
          %2840 = vrot.lane.b32.xlu0 %v2668, 126
          %v2841 = vpop.permute.xlu0 %2840
          %2842 = vrot.lane.b32.xlu0 %v2670, 126
          %v2843 = vpop.permute.xlu0 %2842
          %2844 = vrot.lane.b32.xlu0 %v2745, 126
          %v2845 = vpop.permute.xlu0 %2844
          %2846 = vrot.lane.b32.xlu0 %v2747, 126
          %v2847 = vpop.permute.xlu0 %2846
          %2848 = vrot.lane.b32.xlu0 %v2822, 126
          %v2849 = vpop.permute.xlu0 %2848
          %2850 = vrot.lane.b32.xlu0 %v2674, 126
          %v2851 = vpop.permute.xlu0 %2850
          %2852 = vrot.lane.b32.xlu0 %v2676, 126
          %v2853 = vpop.permute.xlu0 %2852
          %2854 = vrot.lane.b32.xlu0 %v2751, 126
          %v2855 = vpop.permute.xlu0 %2854
          %2856 = vrot.lane.b32.xlu0 %v2753, 126
          %v2857 = vpop.permute.xlu0 %2856
          %2858 = vrot.lane.b32.xlu0 %v2827, 126
          %v2859 = vpop.permute.xlu0 %2858
          %v2860 = vsel %vm800, %v2841, %v2843
          %v2861 = vsel %vm800, %v2843, %v2845
          %v2862 = vsel %vm800, %v2845, %v2847
          %v2863 = vsel %vm800, %v2847, %v2849
          %v2864 = vsel %vm800, %v2851, %v2853
          %v2865 = vsel %vm800, %v2853, %v2855
          %v2866 = vsel %vm800, %v2855, %v2857
          %v2867 = vsel %vm800, %v2857, %v2859
          %v2878 = vmax.f32 %v2668, %v2860
          %v2879 = vmax.f32 %v2670, %v2861
          %v2880 = vmax.f32 %v2745, %v2862
          %v2881 = vmax.f32 %v2747, %v2863
          %v2882 = vmax.f32 %v2822, %v2849
          %v2883 = vmax.f32 %v2674, %v2864
          %v2884 = vmax.f32 %v2676, %v2865
          %v2885 = vmax.f32 %v2751, %v2866
          %v2886 = vmax.f32 %v2753, %v2867
          %v2887 = vmax.f32 %v2827, %v2859
          %2898 = vrot.lane.b32.xlu0 %v2878, 64
          %v2899 = vpop.permute.xlu0 %2898
          %2900 = vrot.lane.b32.xlu0 %v2879, 64
          %v2901 = vpop.permute.xlu0 %2900
          %2902 = vrot.lane.b32.xlu0 %v2880, 64
          %v2903 = vpop.permute.xlu0 %2902
          %2904 = vrot.lane.b32.xlu0 %v2881, 64
          %v2905 = vpop.permute.xlu0 %2904
          %2906 = vrot.lane.b32.xlu0 %v2882, 64
          %v2907 = vpop.permute.xlu0 %2906
          %2908 = vrot.lane.b32.xlu0 %v2883, 64
          %v2909 = vpop.permute.xlu0 %2908
          %2910 = vrot.lane.b32.xlu0 %v2884, 64
          %v2911 = vpop.permute.xlu0 %2910
          %2912 = vrot.lane.b32.xlu0 %v2885, 64
          %v2913 = vpop.permute.xlu0 %2912
          %2914 = vrot.lane.b32.xlu0 %v2886, 64
          %v2915 = vpop.permute.xlu0 %2914
          %2916 = vrot.lane.b32.xlu0 %v2887, 64
          %v2917 = vpop.permute.xlu0 %2916
          %v2918 = vsel %vm1097, %v2899, %v2901
          %v2919 = vsel %vm1097, %v2901, %v2903
          %v2920 = vsel %vm1097, %v2903, %v2905
          %v2921 = vsel %vm1097, %v2905, %v2907
          %v2922 = vsel %vm1097, %v2909, %v2911
          %v2923 = vsel %vm1097, %v2911, %v2913
          %v2924 = vsel %vm1097, %v2913, %v2915
          %v2925 = vsel %vm1097, %v2915, %v2917
          %v2936 = vmax.f32 %v2878, %v2918
          %v2937 = vmax.f32 %v2879, %v2919
          %v2938 = vmax.f32 %v2880, %v2920
          %v2939 = vmax.f32 %v2881, %v2921
          %v2940 = vmax.f32 %v2882, %v2907
          %v2941 = vmax.f32 %v2883, %v2922
          %v2942 = vmax.f32 %v2884, %v2923
          %v2943 = vmax.f32 %v2885, %v2924
          %v2944 = vmax.f32 %v2886, %v2925
          %v2945 = vmax.f32 %v2887, %v2917
          %v2946 = vld [vmem:[%s4] sm:$0xff]
          %v2947 = vld [vmem:[%s4 + $0x8] sm:$0xff]
          %2949 = vset.pattern.permute.xlu0 0
          %2950 = vperm.xlu0 %2949, %v2946
          %v2951 = vpop.permute.xlu0 %2950
          %2954 = vset.pattern.permute.xlu0 0
          %2955 = vperm.xlu0 %2954, %v2947
          %v2956 = vpop.permute.xlu0 %2955
          %v2958 = vadd.f32 %v2936, %v2951
          %v2959 = vadd.f32 %v2937, %v2951
          %v2960 = vadd.f32 %v2938, %v2951
          %v2961 = vadd.f32 %v2939, %v2951
          %v2962 = vadd.f32 %v2940, %v2951
          %v2963 = vadd.f32 %v2941, %v2956
          %v2964 = vadd.f32 %v2942, %v2956
          %v2965 = vadd.f32 %v2943, %v2956
          %v2966 = vadd.f32 %v2944, %v2956
          %v2967 = vadd.f32 %v2945, %v2956
          %v2968 = vmax.f32 %v2958, 0.0
          %v2969 = vmax.f32 %v2959, 0.0
          %v2970 = vmax.f32 %v2960, 0.0
          %v2971 = vmax.f32 %v2961, 0.0
          %v2972 = vmax.f32 %v2962, 0.0
          %v2973 = vmax.f32 %v2963, 0.0
          %v2974 = vmax.f32 %v2964, 0.0
          %v2975 = vmax.f32 %v2965, 0.0
          %v2976 = vmax.f32 %v2966, 0.0
          %v2977 = vmax.f32 %v2967, 0.0
          %v2978 = vld [vmem:[%s5] sm:$0xff]
          %v2979 = vld [vmem:[%s5 + $0x8] sm:$0xff]
          %v2980 = vld [vmem:[%s5 + $0x10] sm:$0xff]
          %v2981 = vld [vmem:[%s5 + $0x18] sm:$0xff]
          %v2982 = vld [vmem:[%s5 + $0x20] sm:$0xff]
          %v2983 = vld [vmem:[%s5 + $0x28] sm:$0xff]
          %v2984 = vld [vmem:[%s5 + $0x30] sm:$0xff]
          %v2985 = vld [vmem:[%s5 + $0x38] sm:$0xff]
          %v2986 = vld [vmem:[%s5 + $0x40] sm:$0xff]
          %v2987 = vld [vmem:[%s5 + $0x48] sm:$0xff]
          %v2988 = vld [vmem:[%s5 + $0x50] sm:$0xff]
          %v2989 = vld [vmem:[%s5 + $0x58] sm:$0xff]
          %v2990 = vld [vmem:[%s5 + $0x60] sm:$0xff]
          %v2991 = vld [vmem:[%s5 + $0x68] sm:$0xff]
          %v2992 = vld [vmem:[%s5 + $0x70] sm:$0xff]
          %v2993 = vld [vmem:[%s5 + $0x78] sm:$0xff]
          %v2994 = vld [vmem:[%s5 + $0x80] sm:$0xff]
          %v2995 = vld [vmem:[%s5 + $0x88] sm:$0xff]
          %v2996 = vld [vmem:[%s5 + $0x90] sm:$0xff]
          %v2997 = vld [vmem:[%s5 + $0x98] sm:$0xff]
          %v2998 = vld [vmem:[%s5 + $0xa0] sm:$0xff]
          %v2999 = vld [vmem:[%s5 + $0xa8] sm:$0xff]
          %v3000 = vld [vmem:[%s5 + $0xb0] sm:$0xff]
          %v3001 = vld [vmem:[%s5 + $0xb8] sm:$0xff]
          %v3002 = vld [vmem:[%s5 + $0xc0] sm:$0xff]
          %v3003 = vld [vmem:[%s5 + $0xc8] sm:$0xff]
          %v3004 = vld [vmem:[%s5 + $0xd0] sm:$0xff]
          %v3005 = vld [vmem:[%s5 + $0xd8] sm:$0xff]
          %v3006 = vld [vmem:[%s5 + $0xe0] sm:$0xff]
          %v3007 = vld [vmem:[%s5 + $0xe8] sm:$0xff]
          %v3008 = vld [vmem:[%s5 + $0xf0] sm:$0xff]
          %v3009 = vld [vmem:[%s5 + $0xf8] sm:$0xff]
          %v3010 = vld [vmem:[%s5 + $0x100] sm:$0xff]
          %v3011 = vld [vmem:[%s5 + $0x108] sm:$0xff]
          %v3012 = vld [vmem:[%s5 + $0x110] sm:$0xff]
          %v3013 = vld [vmem:[%s5 + $0x118] sm:$0xff]
          %v3014 = vld [vmem:[%s5 + $0x120] sm:$0xff]
          %v3015 = vld [vmem:[%s5 + $0x128] sm:$0xff]
          %v3016 = vld [vmem:[%s5 + $0x130] sm:$0xff]
          %v3017 = vld [vmem:[%s5 + $0x138] sm:$0xff]
          %v3018 = vld [vmem:[%s5 + $0x140] sm:$0xff]
          %v3019 = vld [vmem:[%s5 + $0x148] sm:$0xff]
          %v3020 = vld [vmem:[%s5 + $0x150] sm:$0xff]
          %v3021 = vld [vmem:[%s5 + $0x158] sm:$0xff]
          %v3022 = vld [vmem:[%s5 + $0x160] sm:$0xff]
          %v3023 = vld [vmem:[%s5 + $0x168] sm:$0xff]
          %v3024 = vld [vmem:[%s5 + $0x170] sm:$0xff]
          %v3025 = vld [vmem:[%s5 + $0x178] sm:$0xff]
          %v3026 = vld [vmem:[%s5 + $0x180] sm:$0xff]
          %v3027 = vld [vmem:[%s5 + $0x188] sm:$0xff]
          %v3028 = vld [vmem:[%s5 + $0x190] sm:$0xff]
          %v3029 = vld [vmem:[%s5 + $0x198] sm:$0xff]
          %v3030 = vld [vmem:[%s5 + $0x1a0] sm:$0xff]
          %v3031 = vld [vmem:[%s5 + $0x1a8] sm:$0xff]
          %v3032 = vld [vmem:[%s5 + $0x1b0] sm:$0xff]
          %v3033 = vld [vmem:[%s5 + $0x1b8] sm:$0xff]
          %v3034 = vld [vmem:[%s5 + $0x1c0] sm:$0xff]
          %v3035 = vld [vmem:[%s5 + $0x1c8] sm:$0xff]
          %v3036 = vld [vmem:[%s5 + $0x1d0] sm:$0xff]
          %v3037 = vld [vmem:[%s5 + $0x1d8] sm:$0xff]
          %v3038 = vld [vmem:[%s5 + $0x1e0] sm:$0xff]
          %v3039 = vld [vmem:[%s5 + $0x1e8] sm:$0xff]
          %v3040 = vld [vmem:[%s5 + $0x1f0] sm:$0xff]
          %v3041 = vld [vmem:[%s5 + $0x1f8] sm:$0xff]
          %v3042 = vld [vmem:[%s5 + $0x200] sm:$0xff]
          %v3043 = vld [vmem:[%s5 + $0x208] sm:$0xff]
          %v3044 = vld [vmem:[%s5 + $0x210] sm:$0x1]
          %vm3045 = vcmask 138240
          %v3047 = vsel %vm3045, %v2972, 0
          %v3050 = vsel %vm3045, %v2977, 0
          %vm3052 = vcmask 1040384
          %v3054 = vsel %vm3052, %v3044, 0
          %3056 = vmatprep.subr.mxu0 0.0
          %3057 = vmatpush1.msra.mxu0 %v2978
          %3058 = vmatprep.subr.mxu0 0.0
          %3059 = vmatpush1.msra.mxu0 %v2979
          %3060 = vmatprep.subr.mxu0 0.0
          %3061 = vmatpush1.msra.mxu0 %v2980
          %3062 = vmatprep.subr.mxu0 0.0
          %3063 = vmatpush1.msra.mxu0 %v2981
          %3064 = vmatprep.subr.mxu0 0.0
          %3065 = vmatpush1.msra.mxu0 %v2982
          %3066 = vmatprep.subr.mxu0 0.0
          %3067 = vmatpush1.msra.mxu0 %v2983
          %3068 = vmatprep.subr.mxu0 0.0
          %3069 = vmatpush1.msra.mxu0 %v2984
          %3070 = vmatprep.subr.mxu0 0.0
          %3071 = vmatpush1.msra.mxu0 %v2985
          %3072 = vmatprep.subr.mxu0 0.0
          %3073 = vmatpush1.msra.mxu0 %v2986
          %3074 = vmatprep.subr.mxu0 0.0
          %3075 = vmatpush1.msra.mxu0 %v2987
          %3076 = vmatprep.subr.mxu0 0.0
          %3077 = vmatpush1.msra.mxu0 %v2988
          %3078 = vmatprep.subr.mxu0 0.0
          %3079 = vmatpush1.msra.mxu0 %v2989
          %3080 = vmatprep.subr.mxu0 0.0
          %3081 = vmatpush1.msra.mxu0 %v2990
          %3082 = vmatprep.subr.mxu0 0.0
          %3083 = vmatpush1.msra.mxu0 %v2991
          %3084 = vmatprep.subr.mxu0 0.0
          %3085 = vmatpush1.msra.mxu0 %v2992
          %3086 = vmatprep.subr.mxu0 0.0
          %3087 = vmatpush1.msra.mxu0 %v2993
          %3088 = vmatprep.subr.mxu0 0.0
          %3089 = vmatpush1.msra.mxu0 %v2994
          %3090 = vmatprep.subr.mxu0 0.0
          %3091 = vmatpush1.msra.mxu0 %v2995
          %3092 = vmatprep.subr.mxu0 0.0
          %3093 = vmatpush1.msra.mxu0 %v2996
          %3094 = vmatprep.subr.mxu0 0.0
          %3095 = vmatpush1.msra.mxu0 %v2997
          %3096 = vmatprep.subr.mxu0 0.0
          %3097 = vmatpush1.msra.mxu0 %v2998
          %3098 = vmatprep.subr.mxu0 0.0
          %3099 = vmatpush1.msra.mxu0 %v2999
          %3100 = vmatprep.subr.mxu0 0.0
          %3101 = vmatpush1.msra.mxu0 %v3000
          %3102 = vmatprep.subr.mxu0 0.0
          %3103 = vmatpush1.msra.mxu0 %v3001
          %3104 = vmatprep.subr.mxu0 0.0
          %3105 = vmatpush1.msra.mxu0 %v3002
          %3106 = vmatprep.subr.mxu0 0.0
          %3107 = vmatpush1.msra.mxu0 %v3003
          %3108 = vmatprep.subr.mxu0 0.0
          %3109 = vmatpush1.msra.mxu0 %v3004
          %3110 = vmatprep.subr.mxu0 0.0
          %3111 = vmatpush1.msra.mxu0 %v3005
          %3112 = vmatprep.subr.mxu0 0.0
          %3113 = vmatpush1.msra.mxu0 %v3006
          %3114 = vmatprep.subr.mxu0 0.0
          %3115 = vmatpush1.msra.mxu0 %v3007
          %3116 = vmatprep.subr.mxu0 0.0
          %3117 = vmatpush1.msra.mxu0 %v3008
          %3118 = vmatprep.subr.mxu0 0.0
          %3119 = vmatpush1.msra.mxu0 %v3009
          %3120 = vmatprep.mubr.f32.mxu0 %v2969
          %3121 = vmatmul.mubr.f32.gmra.mrb[0].mxu0 %v2968
          %v3122 = vpop.f32.mrb[0].mxu0
          %v3123 = vadd.f32 0.0, %v3122
          %v3124 = vpop.f32.mrb[0].mxu0
          %3125 = vmatprep.mubr.f32.mxu0 %v2974
          %3126 = vmatmul.mubr.f32.gmra.mrb[0].mxu0 %v2973
          %v3127 = vpop.f32.mrb[0].mxu0
          %v3128 = vadd.f32 0.0, %v3127
          %v3129 = vpop.f32.mrb[0].mxu0
          %3130 = vdwg.mxu0
          %3131 = vmatprep.subr.mxu0 0.0
          %3132 = vmatpush1.msra.mxu0 %v3010
          %3133 = vmatprep.subr.mxu0 0.0
          %3134 = vmatpush1.msra.mxu0 %v3011
          %3135 = vmatprep.subr.mxu0 0.0
          %3136 = vmatpush1.msra.mxu0 %v3012
          %3137 = vmatprep.subr.mxu0 0.0
          %3138 = vmatpush1.msra.mxu0 %v3013
          %3139 = vmatprep.subr.mxu0 0.0
          %3140 = vmatpush1.msra.mxu0 %v3014
          %3141 = vmatprep.subr.mxu0 0.0
          %3142 = vmatpush1.msra.mxu0 %v3015
          %3143 = vmatprep.subr.mxu0 0.0
          %3144 = vmatpush1.msra.mxu0 %v3016
          %3145 = vmatprep.subr.mxu0 0.0
          %3146 = vmatpush1.msra.mxu0 %v3017
          %3147 = vmatprep.subr.mxu0 0.0
          %3148 = vmatpush1.msra.mxu0 %v3018
          %3149 = vmatprep.subr.mxu0 0.0
          %3150 = vmatpush1.msra.mxu0 %v3019
          %3151 = vmatprep.subr.mxu0 0.0
          %3152 = vmatpush1.msra.mxu0 %v3020
          %3153 = vmatprep.subr.mxu0 0.0
          %3154 = vmatpush1.msra.mxu0 %v3021
          %3155 = vmatprep.subr.mxu0 0.0
          %3156 = vmatpush1.msra.mxu0 %v3022
          %3157 = vmatprep.subr.mxu0 0.0
          %3158 = vmatpush1.msra.mxu0 %v3023
          %3159 = vmatprep.subr.mxu0 0.0
          %3160 = vmatpush1.msra.mxu0 %v3024
          %3161 = vmatprep.subr.mxu0 0.0
          %3162 = vmatpush1.msra.mxu0 %v3025
          %3163 = vmatprep.subr.mxu0 0.0
          %3164 = vmatpush1.msra.mxu0 %v3026
          %3165 = vmatprep.subr.mxu0 0.0
          %3166 = vmatpush1.msra.mxu0 %v3027
          %3167 = vmatprep.subr.mxu0 0.0
          %3168 = vmatpush1.msra.mxu0 %v3028
          %3169 = vmatprep.subr.mxu0 0.0
          %3170 = vmatpush1.msra.mxu0 %v3029
          %3171 = vmatprep.subr.mxu0 0.0
          %3172 = vmatpush1.msra.mxu0 %v3030
          %3173 = vmatprep.subr.mxu0 0.0
          %3174 = vmatpush1.msra.mxu0 %v3031
          %3175 = vmatprep.subr.mxu0 0.0
          %3176 = vmatpush1.msra.mxu0 %v3032
          %3177 = vmatprep.subr.mxu0 0.0
          %3178 = vmatpush1.msra.mxu0 %v3033
          %3179 = vmatprep.subr.mxu0 0.0
          %3180 = vmatpush1.msra.mxu0 %v3034
          %3181 = vmatprep.subr.mxu0 0.0
          %3182 = vmatpush1.msra.mxu0 %v3035
          %3183 = vmatprep.subr.mxu0 0.0
          %3184 = vmatpush1.msra.mxu0 %v3036
          %3185 = vmatprep.subr.mxu0 0.0
          %3186 = vmatpush1.msra.mxu0 %v3037
          %3187 = vmatprep.subr.mxu0 0.0
          %3188 = vmatpush1.msra.mxu0 %v3038
          %3189 = vmatprep.subr.mxu0 0.0
          %3190 = vmatpush1.msra.mxu0 %v3039
          %3191 = vmatprep.subr.mxu0 0.0
          %3192 = vmatpush1.msra.mxu0 %v3040
          %3193 = vmatprep.subr.mxu0 0.0
          %3194 = vmatpush1.msra.mxu0 %v3041
          %3195 = vmatprep.mubr.f32.mxu0 %v2971
          %3196 = vmatmul.mubr.f32.gmra.mrb[0].mxu0 %v2970
          %v3197 = vpop.f32.mrb[0].mxu0
          %v3198 = vadd.f32 %v3123, %v3197
          %v3199 = vpop.f32.mrb[0].mxu0
          %3200 = vmatprep.mubr.f32.mxu0 %v2976
          %3201 = vmatmul.mubr.f32.gmra.mrb[0].mxu0 %v2975
          %v3202 = vpop.f32.mrb[0].mxu0
          %v3203 = vadd.f32 %v3128, %v3202
          %v3204 = vpop.f32.mrb[0].mxu0
          %3205 = vdwg.mxu0
          %3206 = vmatprep.subr.mxu0 0.0
          %3207 = vmatpush1.msra.mxu0 %v3042
          %3208 = vmatprep.subr.mxu0 0.0
          %3209 = vmatpush1.msra.mxu0 %v3043
          %3210 = vmatprep.subr.mxu0 0.0
          %3211 = vmatpush1.msra.mxu0 %v3054
          %3212 = vmatprep.subr.mxu0 0.0
          %3213 = vmatpush1.msra.mxu0 0.0
          %3214 = vmatprep.subr.mxu0 0.0
          %3215 = vmatpush1.msra.mxu0 0.0
          %3216 = vmatprep.subr.mxu0 0.0
          %3217 = vmatpush1.msra.mxu0 0.0
          %3218 = vmatprep.subr.mxu0 0.0
          %3219 = vmatpush1.msra.mxu0 0.0
          %3220 = vmatprep.subr.mxu0 0.0
          %3221 = vmatpush1.msra.mxu0 0.0
          %3222 = vmatprep.subr.mxu0 0.0
          %3223 = vmatpush1.msra.mxu0 0.0
          %3224 = vmatprep.subr.mxu0 0.0
          %3225 = vmatpush1.msra.mxu0 0.0
          %3226 = vmatprep.subr.mxu0 0.0
          %3227 = vmatpush1.msra.mxu0 0.0
          %3228 = vmatprep.subr.mxu0 0.0
          %3229 = vmatpush1.msra.mxu0 0.0
          %3230 = vmatprep.subr.mxu0 0.0
          %3231 = vmatpush1.msra.mxu0 0.0
          %3232 = vmatprep.subr.mxu0 0.0
          %3233 = vmatpush1.msra.mxu0 0.0
          %3234 = vmatprep.subr.mxu0 0.0
          %3235 = vmatpush1.msra.mxu0 0.0
          %3236 = vmatprep.subr.mxu0 0.0
          %3237 = vmatpush1.msra.mxu0 0.0
          %3238 = vmatprep.subr.mxu0 0.0
          %3239 = vmatpush1.msra.mxu0 0.0
          %3240 = vmatprep.subr.mxu0 0.0
          %3241 = vmatpush1.msra.mxu0 0.0
          %3242 = vmatprep.subr.mxu0 0.0
          %3243 = vmatpush1.msra.mxu0 0.0
          %3244 = vmatprep.subr.mxu0 0.0
          %3245 = vmatpush1.msra.mxu0 0.0
          %3246 = vmatprep.subr.mxu0 0.0
          %3247 = vmatpush1.msra.mxu0 0.0
          %3248 = vmatprep.subr.mxu0 0.0
          %3249 = vmatpush1.msra.mxu0 0.0
          %3250 = vmatprep.subr.mxu0 0.0
          %3251 = vmatpush1.msra.mxu0 0.0
          %3252 = vmatprep.subr.mxu0 0.0
          %3253 = vmatpush1.msra.mxu0 0.0
          %3254 = vmatprep.subr.mxu0 0.0
          %3255 = vmatpush1.msra.mxu0 0.0
          %3256 = vmatprep.subr.mxu0 0.0
          %3257 = vmatpush1.msra.mxu0 0.0
          %3258 = vmatprep.subr.mxu0 0.0
          %3259 = vmatpush1.msra.mxu0 0.0
          %3260 = vmatprep.subr.mxu0 0.0
          %3261 = vmatpush1.msra.mxu0 0.0
          %3262 = vmatprep.subr.mxu0 0.0
          %3263 = vmatpush1.msra.mxu0 0.0
          %3264 = vmatprep.subr.mxu0 0.0
          %3265 = vmatpush1.msra.mxu0 0.0
          %3266 = vmatprep.subr.mxu0 0.0
          %3267 = vmatpush1.msra.mxu0 0.0
          %3268 = vmatprep.subr.mxu0 0.0
          %3269 = vmatpush1.msra.mxu0 0.0
          %3270 = vmatprep.mubr.f32.mxu0 0.0
          %3271 = vmatmul.mubr.f32.gmra.mrb[0].mxu0 %v3047
          %v3272 = vpop.f32.mrb[0].mxu0
          %v3273 = vadd.f32 %v3198, %v3272
          %v3274 = vpop.f32.mrb[0].mxu0
          %3275 = vmatprep.mubr.f32.mxu0 0.0
          %3276 = vmatmul.mubr.f32.gmra.mrb[0].mxu0 %v3050
          %v3277 = vpop.f32.mrb[0].mxu0
          %v3278 = vadd.f32 %v3203, %v3277
          %v3279 = vpop.f32.mrb[0].mxu0
          %3280 = vdwg.mxu0
          %v3282 = vrot.slane %v3273, 1
          %3283 = vrot.lane.b32.xlu0 %v3282, 32
          %v3284 = vpop.permute.xlu0 %3283
          %v3286 = vrot.slane %v3273, 2
          %3287 = vrot.lane.b32.xlu0 %v3286, 64
          %v3288 = vpop.permute.xlu0 %3287
          %v3290 = vrot.slane %v3273, 3
          %3291 = vrot.lane.b32.xlu0 %v3290, 96
          %v3292 = vpop.permute.xlu0 %3291
          %v3294 = vrot.slane %v3273, 4
          %v3296 = vrot.slane %v3273, 5
          %3297 = vrot.lane.b32.xlu0 %v3296, 32
          %v3298 = vpop.permute.xlu0 %3297
          %v3300 = vrot.slane %v3273, 6
          %3301 = vrot.lane.b32.xlu0 %v3300, 64
          %v3302 = vpop.permute.xlu0 %3301
          %v3304 = vrot.slane %v3273, 7
          %3305 = vrot.lane.b32.xlu0 %v3304, 96
          %v3306 = vpop.permute.xlu0 %3305
          %v3309 = vrot.slane %v3278, 1
          %3310 = vrot.lane.b32.xlu0 %v3309, 32
          %v3311 = vpop.permute.xlu0 %3310
          %v3313 = vrot.slane %v3278, 2
          %3314 = vrot.lane.b32.xlu0 %v3313, 64
          %v3315 = vpop.permute.xlu0 %3314
          %v3317 = vrot.slane %v3278, 3
          %3318 = vrot.lane.b32.xlu0 %v3317, 96
          %v3319 = vpop.permute.xlu0 %3318
          %v3321 = vrot.slane %v3278, 4
          %v3323 = vrot.slane %v3278, 5
          %3324 = vrot.lane.b32.xlu0 %v3323, 32
          %v3325 = vpop.permute.xlu0 %3324
          %v3327 = vrot.slane %v3278, 6
          %3328 = vrot.lane.b32.xlu0 %v3327, 64
          %v3329 = vpop.permute.xlu0 %3328
          %v3331 = vrot.slane %v3278, 7
          %3332 = vrot.lane.b32.xlu0 %v3331, 96
          %v3333 = vpop.permute.xlu0 %3332
          %v3335 = vsel %vm1287, %v3273, %v3284
          %v3336 = vsel %vm1097, %v3335, %v3288
          %v3337 = vsel %vm907, %v3336, %v3292
          %v3338 = vsel %vm1287, %v3294, %v3298
          %v3339 = vsel %vm1097, %v3338, %v3302
          %v3340 = vsel %vm907, %v3339, %v3306
          %v3341 = vsel %vm1287, %v3278, %v3311
          %v3342 = vsel %vm1097, %v3341, %v3315
          %v3343 = vsel %vm907, %v3342, %v3319
          %v3344 = vsel %vm1287, %v3321, %v3325
          %v3345 = vsel %vm1097, %v3344, %v3329
          %v3346 = vsel %vm907, %v3345, %v3333
          %v3351 = vcombine.low %v3337, %v3340
          %v3352 = vcombine.low %v3343, %v3346
          %v3354 = vunpack.c.l.s4 1966171168
          %v3355 = vunpack.c.0.s8 %v3354
          %v3356 = vlaneseq
          %v3357 = vshrl.u32 %v3356, 7
          %v3358 = vsub.s32 %v3355, %v3357
          %v3359 = vrot.slane %v3351, %v3358
          %v3361 = vunpack.c.l.s4 1966171168
          %v3362 = vunpack.c.0.s8 %v3361
          %v3363 = vlaneseq
          %v3364 = vshrl.u32 %v3363, 7
          %v3365 = vsub.s32 %v3362, %v3364
          %v3366 = vrot.slane %v3352, %v3365
          %v3367 = vcombine.low %v3359, %v3366
          %v3369 = vunpack.c.l.s4 1966171168
          %v3370 = vunpack.c.0.s8 %v3369
          %v3371 = vlaneseq
          %v3372 = vshrl.u32 %v3371, 7
          %v3373 = vsub.s32 %v3370, %v3372
          %v3374 = vrot.slane %v3367, %v3373
          %s3376 = smul.u32 %s721, 4
          %s3377 = scalar_lea.vmem [#allocation4], %s3376
          %v3378 = vlaneseq
          %vm3379 = vcmp.ge.s32.totalorder %v3378, 0
          %vm3380 = vcmp.lt.s32.totalorder %v3378, 512
          %vm3381 = vmand %vm3379, %vm3380
          %3382 = vst.msk [vmem:[%s3377] sm:$0xf] %vm3381, %v3374
        $region73: #{net_forward.1} parent=67 // loop_footer
          %s725 = sadd.s32 1, %s721
        $region74: #{net_forward.1} parent=67 // loop_footer_branch
          %720 = sbr.rel target = $region70
        $region75: #{net_forward.1} parent=67 // loop_exit
          _
        %v3383 = vld [vmem:[#allocation4] sm:$0xf]
        %s3384 = scalar_lea.vmem [#allocation4], 4
        %v3385 = vld [vmem:[%s3384] sm:$0xf]
        %s3386 = scalar_lea.vmem [#allocation4], 8
        %v3387 = vld [vmem:[%s3386] sm:$0xf]
        %s3388 = scalar_lea.vmem [#allocation4], 12
        %v3389 = vld [vmem:[%s3388] sm:$0xf]
        %s3390 = scalar_lea.vmem [#allocation4], 16
        %v3391 = vld [vmem:[%s3390] sm:$0xf]
        %s3392 = scalar_lea.vmem [#allocation4], 20
        %v3393 = vld [vmem:[%s3392] sm:$0xf]
        %s3394 = scalar_lea.vmem [#allocation4], 24
        %v3395 = vld [vmem:[%s3394] sm:$0xf]
        %s3396 = scalar_lea.vmem [#allocation4], 28
        %v3397 = vld [vmem:[%s3396] sm:$0xf]
        %v3399 = vlaneseq
        %v3400 = vshrl.u32 %v3399, 7
        %v3401 = vsub.s32 0, %v3400
        %v3402 = vrot.slane %v3383, %v3401
        %v3403 = vlaneseq
        %v3404 = vshrl.u32 %v3403, 7
        %v3405 = vsub.s32 1, %v3404
        %v3406 = vrot.slane %v3383, %v3405
        %v3407 = vlaneseq
        %v3408 = vshrl.u32 %v3407, 7
        %v3409 = vsub.s32 2, %v3408
        %v3410 = vrot.slane %v3383, %v3409
        %v3411 = vlaneseq
        %v3412 = vshrl.u32 %v3411, 7
        %v3413 = vsub.s32 3, %v3412
        %v3414 = vrot.slane %v3383, %v3413
        %v3420 = vlaneseq
        %v3421 = vshrl.u32 %v3420, 7
        %v3422 = vsub.s32 0, %v3421
        %v3423 = vrot.slane %v3385, %v3422
        %v3424 = vlaneseq
        %v3425 = vshrl.u32 %v3424, 7
        %v3426 = vsub.s32 1, %v3425
        %v3427 = vrot.slane %v3385, %v3426
        %v3428 = vlaneseq
        %v3429 = vshrl.u32 %v3428, 7
        %v3430 = vsub.s32 2, %v3429
        %v3431 = vrot.slane %v3385, %v3430
        %v3432 = vlaneseq
        %v3433 = vshrl.u32 %v3432, 7
        %v3434 = vsub.s32 3, %v3433
        %v3435 = vrot.slane %v3385, %v3434
        %v3441 = vlaneseq
        %v3442 = vshrl.u32 %v3441, 7
        %v3443 = vsub.s32 0, %v3442
        %v3444 = vrot.slane %v3387, %v3443
        %v3445 = vlaneseq
        %v3446 = vshrl.u32 %v3445, 7
        %v3447 = vsub.s32 1, %v3446
        %v3448 = vrot.slane %v3387, %v3447
        %v3449 = vlaneseq
        %v3450 = vshrl.u32 %v3449, 7
        %v3451 = vsub.s32 2, %v3450
        %v3452 = vrot.slane %v3387, %v3451
        %v3453 = vlaneseq
        %v3454 = vshrl.u32 %v3453, 7
        %v3455 = vsub.s32 3, %v3454
        %v3456 = vrot.slane %v3387, %v3455
        %v3462 = vlaneseq
        %v3463 = vshrl.u32 %v3462, 7
        %v3464 = vsub.s32 0, %v3463
        %v3465 = vrot.slane %v3389, %v3464
        %v3466 = vlaneseq
        %v3467 = vshrl.u32 %v3466, 7
        %v3468 = vsub.s32 1, %v3467
        %v3469 = vrot.slane %v3389, %v3468
        %v3470 = vlaneseq
        %v3471 = vshrl.u32 %v3470, 7
        %v3472 = vsub.s32 2, %v3471
        %v3473 = vrot.slane %v3389, %v3472
        %v3474 = vlaneseq
        %v3475 = vshrl.u32 %v3474, 7
        %v3476 = vsub.s32 3, %v3475
        %v3477 = vrot.slane %v3389, %v3476
        %v3483 = vlaneseq
        %v3484 = vshrl.u32 %v3483, 7
        %v3485 = vsub.s32 0, %v3484
        %v3486 = vrot.slane %v3391, %v3485
        %v3487 = vlaneseq
        %v3488 = vshrl.u32 %v3487, 7
        %v3489 = vsub.s32 1, %v3488
        %v3490 = vrot.slane %v3391, %v3489
        %v3491 = vlaneseq
        %v3492 = vshrl.u32 %v3491, 7
        %v3493 = vsub.s32 2, %v3492
        %v3494 = vrot.slane %v3391, %v3493
        %v3495 = vlaneseq
        %v3496 = vshrl.u32 %v3495, 7
        %v3497 = vsub.s32 3, %v3496
        %v3498 = vrot.slane %v3391, %v3497
        %v3504 = vlaneseq
        %v3505 = vshrl.u32 %v3504, 7
        %v3506 = vsub.s32 0, %v3505
        %v3507 = vrot.slane %v3393, %v3506
        %v3508 = vlaneseq
        %v3509 = vshrl.u32 %v3508, 7
        %v3510 = vsub.s32 1, %v3509
        %v3511 = vrot.slane %v3393, %v3510
        %v3512 = vlaneseq
        %v3513 = vshrl.u32 %v3512, 7
        %v3514 = vsub.s32 2, %v3513
        %v3515 = vrot.slane %v3393, %v3514
        %v3516 = vlaneseq
        %v3517 = vshrl.u32 %v3516, 7
        %v3518 = vsub.s32 3, %v3517
        %v3519 = vrot.slane %v3393, %v3518
        %v3525 = vlaneseq
        %v3526 = vshrl.u32 %v3525, 7
        %v3527 = vsub.s32 0, %v3526
        %v3528 = vrot.slane %v3395, %v3527
        %v3529 = vlaneseq
        %v3530 = vshrl.u32 %v3529, 7
        %v3531 = vsub.s32 1, %v3530
        %v3532 = vrot.slane %v3395, %v3531
        %v3533 = vlaneseq
        %v3534 = vshrl.u32 %v3533, 7
        %v3535 = vsub.s32 2, %v3534
        %v3536 = vrot.slane %v3395, %v3535
        %v3537 = vlaneseq
        %v3538 = vshrl.u32 %v3537, 7
        %v3539 = vsub.s32 3, %v3538
        %v3540 = vrot.slane %v3395, %v3539
        %v3546 = vlaneseq
        %v3547 = vshrl.u32 %v3546, 7
        %v3548 = vsub.s32 0, %v3547
        %v3549 = vrot.slane %v3397, %v3548
        %v3550 = vlaneseq
        %v3551 = vshrl.u32 %v3550, 7
        %v3552 = vsub.s32 1, %v3551
        %v3553 = vrot.slane %v3397, %v3552
        %v3554 = vlaneseq
        %v3555 = vshrl.u32 %v3554, 7
        %v3556 = vsub.s32 2, %v3555
        %v3557 = vrot.slane %v3397, %v3556
        %v3558 = vlaneseq
        %v3559 = vshrl.u32 %v3558, 7
        %v3560 = vsub.s32 3, %v3559
        %v3561 = vrot.slane %v3397, %v3560
        %vm3566 = vcmask 1040384
        %v3567 = vsel %vm3566, %v3402, %v3423
        %v3568 = vsel %vm3566, %v3406, %v3427
        %v3569 = vsel %vm3566, %v3410, %v3431
        %v3570 = vsel %vm3566, %v3414, %v3435
        %vm3571 = vcmask 1041408
        %v3572 = vsel %vm3571, %v3567, %v3444
        %v3573 = vsel %vm3571, %v3568, %v3448
        %v3574 = vsel %vm3571, %v3569, %v3452
        %v3575 = vsel %vm3571, %v3570, %v3456
        %vm3576 = vcmask 1042432
        %v3577 = vsel %vm3576, %v3572, %v3465
        %v3578 = vsel %vm3576, %v3573, %v3469
        %v3579 = vsel %vm3576, %v3574, %v3473
        %v3580 = vsel %vm3576, %v3575, %v3477
        %vm3581 = vcmask 1043456
        %v3582 = vsel %vm3581, %v3577, %v3486
        %v3583 = vsel %vm3581, %v3578, %v3490
        %v3584 = vsel %vm3581, %v3579, %v3494
        %v3585 = vsel %vm3581, %v3580, %v3498
        %vm3586 = vcmask 1044480
        %v3587 = vsel %vm3586, %v3582, %v3507
        %v3588 = vsel %vm3586, %v3583, %v3511
        %v3589 = vsel %vm3586, %v3584, %v3515
        %v3590 = vsel %vm3586, %v3585, %v3519
        %vm3591 = vcmask 1045504
        %v3592 = vsel %vm3591, %v3587, %v3528
        %v3593 = vsel %vm3591, %v3588, %v3532
        %v3594 = vsel %vm3591, %v3589, %v3536
        %v3595 = vsel %vm3591, %v3590, %v3540
        %vm3596 = vcmask 1046528
        %v3597 = vsel %vm3596, %v3592, %v3549
        %v3598 = vsel %vm3596, %v3593, %v3553
        %v3599 = vsel %vm3596, %v3594, %v3557
        %v3600 = vsel %vm3596, %v3595, %v3561
        %v3601 = vpack.c.bf16 %v3597, %v3597
        %v3602 = vpack.c.bf16 %v3598, %v3598
        %v3603 = vpack.c.bf16 %v3599, %v3599
        %v3604 = vpack.c.bf16 %v3600, %v3600
        %v3605 = vld [vmem:[%s6] sm:$0xf]
        %v3606 = vld [vmem:[%s6 + $0x4] sm:$0xf]
        %v3607 = vld [vmem:[%s6 + $0x8] sm:$0xf]
        %v3608 = vld [vmem:[%s6 + $0xc] sm:$0xf]
        %v3609 = vld [vmem:[%s6 + $0x10] sm:$0xf]
        %v3610 = vld [vmem:[%s6 + $0x14] sm:$0xf]
        %v3611 = vld [vmem:[%s6 + $0x18] sm:$0xf]
        %v3612 = vld [vmem:[%s6 + $0x1c] sm:$0xf]
        %v3613 = vld [vmem:[%s6 + $0x20] sm:$0xf]
        %v3614 = vld [vmem:[%s6 + $0x24] sm:$0xf]
        %v3615 = vld [vmem:[%s6 + $0x28] sm:$0xf]
        %v3616 = vld [vmem:[%s6 + $0x2c] sm:$0xf]
        %v3617 = vld [vmem:[%s6 + $0x30] sm:$0xf]
        %v3618 = vld [vmem:[%s6 + $0x34] sm:$0xf]
        %v3619 = vld [vmem:[%s6 + $0x38] sm:$0xf]
        %v3620 = vld [vmem:[%s6 + $0x3c] sm:$0xf]
        %v3621 = vld [vmem:[%s6 + $0x40] sm:$0xf]
        %v3622 = vld [vmem:[%s6 + $0x44] sm:$0xf]
        %v3623 = vld [vmem:[%s6 + $0x48] sm:$0xf]
        %v3624 = vld [vmem:[%s6 + $0x4c] sm:$0xf]
        %v3625 = vld [vmem:[%s6 + $0x50] sm:$0xf]
        %v3626 = vld [vmem:[%s6 + $0x54] sm:$0xf]
        %v3627 = vld [vmem:[%s6 + $0x58] sm:$0xf]
        %v3628 = vld [vmem:[%s6 + $0x5c] sm:$0xf]
        %v3629 = vld [vmem:[%s6 + $0x60] sm:$0xf]
        %v3630 = vld [vmem:[%s6 + $0x64] sm:$0xf]
        %v3631 = vld [vmem:[%s6 + $0x68] sm:$0xf]
        %v3632 = vld [vmem:[%s6 + $0x6c] sm:$0xf]
        %v3633 = vld [vmem:[%s6 + $0x70] sm:$0xf]
        %v3634 = vld [vmem:[%s6 + $0x74] sm:$0xf]
        %v3635 = vld [vmem:[%s6 + $0x78] sm:$0xf]
        %v3636 = vld [vmem:[%s6 + $0x7c] sm:$0xf]
        %v3637 = vld [vmem:[%s6 + $0x80] sm:$0xf]
        %v3638 = vld [vmem:[%s6 + $0x84] sm:$0xf]
        %v3639 = vld [vmem:[%s6 + $0x88] sm:$0xf]
        %v3640 = vld [vmem:[%s6 + $0x8c] sm:$0xf]
        %v3641 = vld [vmem:[%s6 + $0x90] sm:$0xf]
        %v3642 = vld [vmem:[%s6 + $0x94] sm:$0xf]
        %v3643 = vld [vmem:[%s6 + $0x98] sm:$0xf]
        %v3644 = vld [vmem:[%s6 + $0x9c] sm:$0xf]
        %v3645 = vld [vmem:[%s6 + $0xa0] sm:$0xf]
        %v3646 = vld [vmem:[%s6 + $0xa4] sm:$0xf]
        %v3647 = vld [vmem:[%s6 + $0xa8] sm:$0xf]
        %v3648 = vld [vmem:[%s6 + $0xac] sm:$0xf]
        %v3649 = vld [vmem:[%s6 + $0xb0] sm:$0xf]
        %v3650 = vld [vmem:[%s6 + $0xb4] sm:$0xf]
        %v3651 = vld [vmem:[%s6 + $0xb8] sm:$0xf]
        %v3652 = vld [vmem:[%s6 + $0xbc] sm:$0xf]
        %v3653 = vld [vmem:[%s6 + $0xc0] sm:$0xf]
        %v3654 = vld [vmem:[%s6 + $0xc4] sm:$0xf]
        %v3655 = vld [vmem:[%s6 + $0xc8] sm:$0xf]
        %v3656 = vld [vmem:[%s6 + $0xcc] sm:$0xf]
        %v3657 = vld [vmem:[%s6 + $0xd0] sm:$0xf]
        %v3658 = vld [vmem:[%s6 + $0xd4] sm:$0xf]
        %v3659 = vld [vmem:[%s6 + $0xd8] sm:$0xf]
        %v3660 = vld [vmem:[%s6 + $0xdc] sm:$0xf]
        %v3661 = vld [vmem:[%s6 + $0xe0] sm:$0xf]
        %v3662 = vld [vmem:[%s6 + $0xe4] sm:$0xf]
        %v3663 = vld [vmem:[%s6 + $0xe8] sm:$0xf]
        %v3664 = vld [vmem:[%s6 + $0xec] sm:$0xf]
        %v3665 = vld [vmem:[%s6 + $0xf0] sm:$0xf]
        %v3666 = vld [vmem:[%s6 + $0xf4] sm:$0xf]
        %v3667 = vld [vmem:[%s6 + $0xf8] sm:$0xf]
        %v3668 = vld [vmem:[%s6 + $0xfc] sm:$0xf]
        %v3669 = vld [vmem:[%s7] sm:$0x1]
        %v3671 = vlaneseq
        %v3672 = vshrl.u32 %v3671, 7
        %v3673 = vsub.s32 0, %v3672
        %v3674 = vrot.slane %v3669, %v3673
        %v3740 = vunpack.c.l.b16 %v3605
        %v3741 = vunpack.c.l.b16 %v3606
        %v3742 = vunpack.c.l.b16 %v3607
        %v3743 = vunpack.c.l.b16 %v3608
        %v3744 = vunpack.c.l.b16 %v3609
        %v3745 = vunpack.c.l.b16 %v3610
        %v3746 = vunpack.c.l.b16 %v3611
        %v3747 = vunpack.c.l.b16 %v3612
        %v3748 = vunpack.c.l.b16 %v3613
        %v3749 = vunpack.c.l.b16 %v3614
        %v3750 = vunpack.c.l.b16 %v3615
        %v3751 = vunpack.c.l.b16 %v3616
        %v3752 = vunpack.c.l.b16 %v3617
        %v3753 = vunpack.c.l.b16 %v3618
        %v3754 = vunpack.c.l.b16 %v3619
        %v3755 = vunpack.c.l.b16 %v3620
        %v3756 = vunpack.c.l.b16 %v3621
        %v3757 = vunpack.c.l.b16 %v3622
        %v3758 = vunpack.c.l.b16 %v3623
        %v3759 = vunpack.c.l.b16 %v3624
        %v3760 = vunpack.c.l.b16 %v3625
        %v3761 = vunpack.c.l.b16 %v3626
        %v3762 = vunpack.c.l.b16 %v3627
        %v3763 = vunpack.c.l.b16 %v3628
        %v3764 = vunpack.c.l.b16 %v3629
        %v3765 = vunpack.c.l.b16 %v3630
        %v3766 = vunpack.c.l.b16 %v3631
        %v3767 = vunpack.c.l.b16 %v3632
        %v3768 = vunpack.c.l.b16 %v3633
        %v3769 = vunpack.c.l.b16 %v3634
        %v3770 = vunpack.c.l.b16 %v3635
        %v3771 = vunpack.c.l.b16 %v3636
        %v3772 = vunpack.c.l.b16 %v3637
        %v3773 = vunpack.c.l.b16 %v3638
        %v3774 = vunpack.c.l.b16 %v3639
        %v3775 = vunpack.c.l.b16 %v3640
        %v3776 = vunpack.c.l.b16 %v3641
        %v3777 = vunpack.c.l.b16 %v3642
        %v3778 = vunpack.c.l.b16 %v3643
        %v3779 = vunpack.c.l.b16 %v3644
        %v3780 = vunpack.c.l.b16 %v3645
        %v3781 = vunpack.c.l.b16 %v3646
        %v3782 = vunpack.c.l.b16 %v3647
        %v3783 = vunpack.c.l.b16 %v3648
        %v3784 = vunpack.c.l.b16 %v3649
        %v3785 = vunpack.c.l.b16 %v3650
        %v3786 = vunpack.c.l.b16 %v3651
        %v3787 = vunpack.c.l.b16 %v3652
        %v3788 = vunpack.c.l.b16 %v3653
        %v3789 = vunpack.c.l.b16 %v3654
        %v3790 = vunpack.c.l.b16 %v3655
        %v3791 = vunpack.c.l.b16 %v3656
        %v3792 = vunpack.c.l.b16 %v3657
        %v3793 = vunpack.c.l.b16 %v3658
        %v3794 = vunpack.c.l.b16 %v3659
        %v3795 = vunpack.c.l.b16 %v3660
        %v3796 = vunpack.c.l.b16 %v3661
        %v3797 = vunpack.c.l.b16 %v3662
        %v3798 = vunpack.c.l.b16 %v3663
        %v3799 = vunpack.c.l.b16 %v3664
        %v3800 = vunpack.c.l.b16 %v3665
        %v3801 = vunpack.c.l.b16 %v3666
        %v3802 = vunpack.c.l.b16 %v3667
        %v3803 = vunpack.c.l.b16 %v3668
        %v3804 = vpack.c.b16 %v3741, %v3740
        %v3805 = vpack.c.b16 %v3743, %v3742
        %v3806 = vpack.c.b16 %v3745, %v3744
        %v3807 = vpack.c.b16 %v3747, %v3746
        %v3808 = vpack.c.b16 %v3749, %v3748
        %v3809 = vpack.c.b16 %v3751, %v3750
        %v3810 = vpack.c.b16 %v3753, %v3752
        %v3811 = vpack.c.b16 %v3755, %v3754
        %v3812 = vpack.c.b16 %v3757, %v3756
        %v3813 = vpack.c.b16 %v3759, %v3758
        %v3814 = vpack.c.b16 %v3761, %v3760
        %v3815 = vpack.c.b16 %v3763, %v3762
        %v3816 = vpack.c.b16 %v3765, %v3764
        %v3817 = vpack.c.b16 %v3767, %v3766
        %v3818 = vpack.c.b16 %v3769, %v3768
        %v3819 = vpack.c.b16 %v3771, %v3770
        %v3820 = vpack.c.b16 %v3773, %v3772
        %v3821 = vpack.c.b16 %v3775, %v3774
        %v3822 = vpack.c.b16 %v3777, %v3776
        %v3823 = vpack.c.b16 %v3779, %v3778
        %v3824 = vpack.c.b16 %v3781, %v3780
        %v3825 = vpack.c.b16 %v3783, %v3782
        %v3826 = vpack.c.b16 %v3785, %v3784
        %v3827 = vpack.c.b16 %v3787, %v3786
        %v3828 = vpack.c.b16 %v3789, %v3788
        %v3829 = vpack.c.b16 %v3791, %v3790
        %v3830 = vpack.c.b16 %v3793, %v3792
        %v3831 = vpack.c.b16 %v3795, %v3794
        %v3832 = vpack.c.b16 %v3797, %v3796
        %v3833 = vpack.c.b16 %v3799, %v3798
        %v3834 = vpack.c.b16 %v3801, %v3800
        %v3835 = vpack.c.b16 %v3803, %v3802
        %3868 = vmatprep.subr.bf16.mxu0 0
        %3869 = vmatpush1.bf16.msra.mxu0 %v3804
        %3870 = vmatprep.subr.bf16.mxu0 0
        %3871 = vmatpush1.bf16.msra.mxu0 %v3805
        %3872 = vmatprep.subr.bf16.mxu0 0
        %3873 = vmatpush1.bf16.msra.mxu0 %v3806
        %3874 = vmatprep.subr.bf16.mxu0 0
        %3875 = vmatpush1.bf16.msra.mxu0 %v3807
        %3876 = vmatprep.subr.bf16.mxu0 0
        %3877 = vmatpush1.bf16.msra.mxu0 %v3808
        %3878 = vmatprep.subr.bf16.mxu0 0
        %3879 = vmatpush1.bf16.msra.mxu0 %v3809
        %3880 = vmatprep.subr.bf16.mxu0 0
        %3881 = vmatpush1.bf16.msra.mxu0 %v3810
        %3882 = vmatprep.subr.bf16.mxu0 0
        %3883 = vmatpush1.bf16.msra.mxu0 %v3811
        %3884 = vmatprep.subr.bf16.mxu0 0
        %3885 = vmatpush1.bf16.msra.mxu0 %v3812
        %3886 = vmatprep.subr.bf16.mxu0 0
        %3887 = vmatpush1.bf16.msra.mxu0 %v3813
        %3888 = vmatprep.subr.bf16.mxu0 0
        %3889 = vmatpush1.bf16.msra.mxu0 %v3814
        %3890 = vmatprep.subr.bf16.mxu0 0
        %3891 = vmatpush1.bf16.msra.mxu0 %v3815
        %3892 = vmatprep.subr.bf16.mxu0 0
        %3893 = vmatpush1.bf16.msra.mxu0 %v3816
        %3894 = vmatprep.subr.bf16.mxu0 0
        %3895 = vmatpush1.bf16.msra.mxu0 %v3817
        %3896 = vmatprep.subr.bf16.mxu0 0
        %3897 = vmatpush1.bf16.msra.mxu0 %v3818
        %3898 = vmatprep.subr.bf16.mxu0 0
        %3899 = vmatpush1.bf16.msra.mxu0 %v3819
        %3900 = vmatprep.mubr.bf16.mxu0 %v3602
        %3901 = vmatmul.mubr.bf16.gmra.mrb[0].mxu0 %v3601
        %v3902 = vpop.f32.mrb[0].mxu0
        %v3903 = vadd.f32 %v3674, %v3902
        %v3904 = vpop.f32.mrb[0].mxu0
        %v3905 = vpop.f32.mrb[0].mxu0
        %v3906 = vpop.f32.mrb[0].mxu0
        %3907 = vdwg.mxu0
        %3908 = vmatprep.subr.bf16.mxu0 0
        %3909 = vmatpush1.bf16.msra.mxu0 %v3820
        %3910 = vmatprep.subr.bf16.mxu0 0
        %3911 = vmatpush1.bf16.msra.mxu0 %v3821
        %3912 = vmatprep.subr.bf16.mxu0 0
        %3913 = vmatpush1.bf16.msra.mxu0 %v3822
        %3914 = vmatprep.subr.bf16.mxu0 0
        %3915 = vmatpush1.bf16.msra.mxu0 %v3823
        %3916 = vmatprep.subr.bf16.mxu0 0
        %3917 = vmatpush1.bf16.msra.mxu0 %v3824
        %3918 = vmatprep.subr.bf16.mxu0 0
        %3919 = vmatpush1.bf16.msra.mxu0 %v3825
        %3920 = vmatprep.subr.bf16.mxu0 0
        %3921 = vmatpush1.bf16.msra.mxu0 %v3826
        %3922 = vmatprep.subr.bf16.mxu0 0
        %3923 = vmatpush1.bf16.msra.mxu0 %v3827
        %3924 = vmatprep.subr.bf16.mxu0 0
        %3925 = vmatpush1.bf16.msra.mxu0 %v3828
        %3926 = vmatprep.subr.bf16.mxu0 0
        %3927 = vmatpush1.bf16.msra.mxu0 %v3829
        %3928 = vmatprep.subr.bf16.mxu0 0
        %3929 = vmatpush1.bf16.msra.mxu0 %v3830
        %3930 = vmatprep.subr.bf16.mxu0 0
        %3931 = vmatpush1.bf16.msra.mxu0 %v3831
        %3932 = vmatprep.subr.bf16.mxu0 0
        %3933 = vmatpush1.bf16.msra.mxu0 %v3832
        %3934 = vmatprep.subr.bf16.mxu0 0
        %3935 = vmatpush1.bf16.msra.mxu0 %v3833
        %3936 = vmatprep.subr.bf16.mxu0 0
        %3937 = vmatpush1.bf16.msra.mxu0 %v3834
        %3938 = vmatprep.subr.bf16.mxu0 0
        %3939 = vmatpush1.bf16.msra.mxu0 %v3835
        %3940 = vmatprep.mubr.bf16.mxu0 %v3604
        %3941 = vmatmul.mubr.bf16.gmra.mrb[0].mxu0 %v3603
        %v3942 = vpop.f32.mrb[0].mxu0
        %v3943 = vadd.f32 %v3903, %v3942
        %v3944 = vpop.f32.mrb[0].mxu0
        %v3945 = vpop.f32.mrb[0].mxu0
        %v3946 = vpop.f32.mrb[0].mxu0
        %3947 = vdwg.mxu0
        %v3948 = vmax.f32 %v3943, 0.0
        %v3949 = vpack.c.bf16 %v3948, %v3948
        %v3950 = vld [vmem:[%s8] sm:$0xf]
        %v3951 = vld [vmem:[%s8 + $0x4] sm:$0xf]
        %v3952 = vld [vmem:[%s8 + $0x8] sm:$0xf]
        %v3953 = vld [vmem:[%s8 + $0xc] sm:$0xf]
        %v3954 = vld [vmem:[%s8 + $0x10] sm:$0xf]
        %v3955 = vld [vmem:[%s8 + $0x14] sm:$0xf]
        %v3956 = vld [vmem:[%s8 + $0x18] sm:$0xf]
        %v3957 = vld [vmem:[%s8 + $0x1c] sm:$0xf]
        %v3958 = vld [vmem:[%s8 + $0x20] sm:$0xf]
        %v3959 = vld [vmem:[%s8 + $0x24] sm:$0xf]
        %v3960 = vld [vmem:[%s8 + $0x28] sm:$0xf]
        %v3961 = vld [vmem:[%s8 + $0x2c] sm:$0xf]
        %v3962 = vld [vmem:[%s8 + $0x30] sm:$0xf]
        %v3963 = vld [vmem:[%s8 + $0x34] sm:$0xf]
        %v3964 = vld [vmem:[%s8 + $0x38] sm:$0xf]
        %v3965 = vld [vmem:[%s9] sm:$0x1]
        %v3967 = vlaneseq
        %v3968 = vshrl.u32 %v3967, 7
        %v3969 = vsub.s32 0, %v3968
        %v3970 = vrot.slane %v3965, %v3969
        %v3987 = vunpack.c.l.b16 %v3950
        %v3988 = vunpack.c.l.b16 %v3951
        %v3989 = vunpack.c.l.b16 %v3952
        %v3990 = vunpack.c.l.b16 %v3953
        %v3991 = vunpack.c.l.b16 %v3954
        %v3992 = vunpack.c.l.b16 %v3955
        %v3993 = vunpack.c.l.b16 %v3956
        %v3994 = vunpack.c.l.b16 %v3957
        %v3995 = vunpack.c.l.b16 %v3958
        %v3996 = vunpack.c.l.b16 %v3959
        %v3997 = vunpack.c.l.b16 %v3960
        %v3998 = vunpack.c.l.b16 %v3961
        %v3999 = vunpack.c.l.b16 %v3962
        %v4000 = vunpack.c.l.b16 %v3963
        %v4001 = vunpack.c.l.b16 %v3964
        %v4002 = vpack.c.b16 %v3988, %v3987
        %v4003 = vpack.c.b16 %v3990, %v3989
        %v4004 = vpack.c.b16 %v3992, %v3991
        %v4005 = vpack.c.b16 %v3994, %v3993
        %v4006 = vpack.c.b16 %v3996, %v3995
        %v4007 = vpack.c.b16 %v3998, %v3997
        %v4008 = vpack.c.b16 %v4000, %v3999
        %v4009 = vpack.c.b16 %v4001, %v4001
        %vm4017 = vcmask 982016
        %v4019 = vsel %vm4017, %v3949, 0
        %v4022 = vsel %vm3581, %v4009, 0
        %4024 = vmatprep.subr.bf16.mxu0 0
        %4025 = vmatpush1.bf16.msra.mxu0 %v4002
        %4026 = vmatprep.subr.bf16.mxu0 0
        %4027 = vmatpush1.bf16.msra.mxu0 %v4003
        %4028 = vmatprep.subr.bf16.mxu0 0
        %4029 = vmatpush1.bf16.msra.mxu0 %v4004
        %4030 = vmatprep.subr.bf16.mxu0 0
        %4031 = vmatpush1.bf16.msra.mxu0 %v4005
        %4032 = vmatprep.subr.bf16.mxu0 0
        %4033 = vmatpush1.bf16.msra.mxu0 %v4006
        %4034 = vmatprep.subr.bf16.mxu0 0
        %4035 = vmatpush1.bf16.msra.mxu0 %v4007
        %4036 = vmatprep.subr.bf16.mxu0 0
        %4037 = vmatpush1.bf16.msra.mxu0 %v4008
        %4038 = vmatprep.subr.bf16.mxu0 0
        %4039 = vmatpush1.bf16.msra.mxu0 %v4022
        %4040 = vmatprep.subr.bf16.mxu0 0
        %4041 = vmatpush1.bf16.msra.mxu0 0
        %4042 = vmatprep.subr.bf16.mxu0 0
        %4043 = vmatpush1.bf16.msra.mxu0 0
        %4044 = vmatprep.subr.bf16.mxu0 0
        %4045 = vmatpush1.bf16.msra.mxu0 0
        %4046 = vmatprep.subr.bf16.mxu0 0
        %4047 = vmatpush1.bf16.msra.mxu0 0
        %4048 = vmatprep.subr.bf16.mxu0 0
        %4049 = vmatpush1.bf16.msra.mxu0 0
        %4050 = vmatprep.subr.bf16.mxu0 0
        %4051 = vmatpush1.bf16.msra.mxu0 0
        %4052 = vmatprep.subr.bf16.mxu0 0
        %4053 = vmatpush1.bf16.msra.mxu0 0
        %4054 = vmatprep.subr.bf16.mxu0 0
        %4055 = vmatpush1.bf16.msra.mxu0 0
        %4056 = vmatprep.mubr.bf16.mxu0 0
        %4057 = vmatmul.mubr.bf16.gmra.mrb[0].mxu0 %v4019
        %v4058 = vpop.f32.mrb[0].mxu0
        %v4059 = vadd.f32 %v3970, %v4058
        %v4060 = vpop.f32.mrb[0].mxu0
        %v4061 = vpop.f32.mrb[0].mxu0
        %v4062 = vpop.f32.mrb[0].mxu0
        %4063 = vdwg.mxu0
        %v4064 = vmax.f32 %v4059, 0.0
        %v4065 = vpack.c.bf16 %v4064, %v4064
        %v4066 = vld [vmem:[%s10] sm:$0xf]
        %v4067 = vld [vmem:[%s10 + $0x4] sm:$0xf]
        %v4068 = vld [vmem:[%s10 + $0x8] sm:$0xf]
        %v4069 = vld [vmem:[%s10 + $0xc] sm:$0xf]
        %v4070 = vld [vmem:[%s10 + $0x10] sm:$0xf]
        %v4071 = vld [vmem:[%s10 + $0x14] sm:$0xf]
        %v4072 = vld [vmem:[%s10 + $0x18] sm:$0xf]
        %v4073 = vld [vmem:[%s10 + $0x1c] sm:$0xf]
        %v4074 = vld [vmem:[%s10 + $0x20] sm:$0xf]
        %v4075 = vld [vmem:[%s10 + $0x24] sm:$0xf]
        %v4076 = vld [vmem:[%s10 + $0x28] sm:$0x3]
        %v4077 = vld [vmem:[%s11] sm:$0x1]
        %v4079 = vlaneseq
        %v4080 = vshrl.u32 %v4079, 7
        %v4081 = vsub.s32 0, %v4080
        %v4082 = vrot.slane %v4077, %v4081
        %v4095 = vunpack.c.l.b16 %v4066
        %v4096 = vunpack.c.l.b16 %v4067
        %v4097 = vunpack.c.l.b16 %v4068
        %v4098 = vunpack.c.l.b16 %v4069
        %v4099 = vunpack.c.l.b16 %v4070
        %v4100 = vunpack.c.l.b16 %v4071
        %v4101 = vunpack.c.l.b16 %v4072
        %v4102 = vunpack.c.l.b16 %v4073
        %v4103 = vunpack.c.l.b16 %v4074
        %v4104 = vunpack.c.l.b16 %v4075
        %v4105 = vunpack.c.l.b16 %v4076
        %v4106 = vpack.c.b16 %v4096, %v4095
        %v4107 = vpack.c.b16 %v4098, %v4097
        %v4108 = vpack.c.b16 %v4100, %v4099
        %v4109 = vpack.c.b16 %v4102, %v4101
        %v4110 = vpack.c.b16 %v4104, %v4103
        %v4111 = vpack.c.b16 %v4105, %v4105
        %vm4117 = vcmask 687104
        %v4119 = vsel %vm4117, %v4065, 0
        %v4122 = vsel %vm3571, %v4111, 0
        %4124 = vmatprep.subr.bf16.mxu0 0
        %4125 = vmatpush1.bf16.msra.mxu0 %v4106
        %4126 = vmatprep.subr.bf16.mxu0 0
        %4127 = vmatpush1.bf16.msra.mxu0 %v4107
        %4128 = vmatprep.subr.bf16.mxu0 0
        %4129 = vmatpush1.bf16.msra.mxu0 %v4108
        %4130 = vmatprep.subr.bf16.mxu0 0
        %4131 = vmatpush1.bf16.msra.mxu0 %v4109
        %4132 = vmatprep.subr.bf16.mxu0 0
        %4133 = vmatpush1.bf16.msra.mxu0 %v4110
        %4134 = vmatprep.subr.bf16.mxu0 0
        %4135 = vmatpush1.bf16.msra.mxu0 %v4122
        %4136 = vmatprep.subr.bf16.mxu0 0
        %4137 = vmatpush1.bf16.msra.mxu0 0
        %4138 = vmatprep.subr.bf16.mxu0 0
        %4139 = vmatpush1.bf16.msra.mxu0 0
        %4140 = vmatprep.subr.bf16.mxu0 0
        %4141 = vmatpush1.bf16.msra.mxu0 0
        %4142 = vmatprep.subr.bf16.mxu0 0
        %4143 = vmatpush1.bf16.msra.mxu0 0
        %4144 = vmatprep.subr.bf16.mxu0 0
        %4145 = vmatpush1.bf16.msra.mxu0 0
        %4146 = vmatprep.subr.bf16.mxu0 0
        %4147 = vmatpush1.bf16.msra.mxu0 0
        %4148 = vmatprep.subr.bf16.mxu0 0
        %4149 = vmatpush1.bf16.msra.mxu0 0
        %4150 = vmatprep.subr.bf16.mxu0 0
        %4151 = vmatpush1.bf16.msra.mxu0 0
        %4152 = vmatprep.subr.bf16.mxu0 0
        %4153 = vmatpush1.bf16.msra.mxu0 0
        %4154 = vmatprep.subr.bf16.mxu0 0
        %4155 = vmatpush1.bf16.msra.mxu0 0
        %4156 = vmatprep.mubr.bf16.mxu0 0
        %4157 = vmatmul.mubr.bf16.gmra.mrb[0].mxu0 %v4119
        %v4158 = vpop.f32.mrb[0].mxu0
        %v4159 = vadd.f32 %v4082, %v4158
        %v4160 = vpop.f32.mrb[0].mxu0
        %v4161 = vpop.f32.mrb[0].mxu0
        %v4162 = vpop.f32.mrb[0].mxu0
        %4163 = vdwg.mxu0
        %vm4164 = vcmask 80896
        %4165 = vst.msk [vmem:[%s409] sm:$0xff] %vm4164, %v4159
        %s4166 = sand.u32 %s291, 1
        %s4167 = scalar_lea.sflag [#allocation6], %s4166
        %s4168 = sand.u32 %s291, 1
        %s4169 = smul.addr %s4168, 8
        %s4170 = scalar_lea.vmem [#allocation5], %s4169
        // Predicated region
        $region76: #{net_forward.1} parent=67 // pred_check
          %p4171 = pneg %p301
        $region77: #{net_forward.1} parent=67 // pred_check_branch
          %4173 = sbr.rel (%p4171) target = $region79
        $region78: #{net_forward.1} parent=67 // pred_region
          %s4175 = ssub.s32 128, 128
          %4176 = vsyncadd %s4167, %s4175
          %s4177 = smul.addr %s26, 128
          %s4178 = scalar_lea.hbm %s12, %s4177
          %s4180 = sshll.u32 %s4170, 4
          %s4181 = int_to_ptr.vmem [resolvable:$true] %s4180
          %4183 = dma.vmem_to_hbm [thread:$0]  %s4181, 128, %s4178, %s4167
        $region79: #{net_forward.1} parent=67 // pred_fallthru
          _
      $region68: #{net_forward.1} parent=5 // pred_fallthru
        _
      %p4184 = scmp.le.s32.totalorder 2, %s21
      // Predicated region
      $region80: #{net_forward.1} parent=5 // pred_check
        %p4185 = pneg %p4184
      $region81: #{net_forward.1} parent=5 // pred_check_branch
        %4187 = sbr.rel (%p4185) target = $region83
      $region82: #{net_forward.1} parent=5 // pred_region
        %s4188 = ssub.s32 %s21, 2
        // Predicated region
        $region84: #{net_forward.1} parent=82 // pred_check
          %p4189 = pneg %p307
        $region85: #{net_forward.1} parent=82 // pred_check_branch
          %4191 = sbr.rel (%p4189) target = $region87
        $region86: #{net_forward.1} parent=82 // pred_region
          %s4192 = sand.u32 %s292, 1
          %s4193 = scalar_lea.sflag [#allocation6], %s4192
          %s4194 = sand.u32 %s292, 1
          %s4195 = smul.addr %s4194, 8
          %s4196 = scalar_lea.vmem [#allocation5], %s4195
          %4197 = dma.done %s4193, 128
        $region87: #{net_forward.1} parent=82 // pred_fallthru
          _
      $region83: #{net_forward.1} parent=5 // pred_fallthru
        _
    $region6: #{net_forward.1} parent=1 // loop_footer
      %s25 = sadd.s32 1, %s21
    $region7: #{net_forward.1} parent=1 // loop_footer_branch
      %20 = sbr.rel target = $region3
    $region8: #{net_forward.1} parent=1 // loop_exit
      _
    %4198 = vsyncpa [#allocation6], 1
    %s4199 = scalar_lea.sflag [#allocation6], 1
    %4200 = vsyncpa %s4199, 1

</llo_original>
